<compile_context>
chip_gen: v6e
topology: v6e:2x2x1
jax: 0.10.0
libtpu: 0.0.40
codegen_flags: <defaults>
</compile_context>

<pallas_src>
import functools

import jax
import jax.numpy as jnp
from jax.experimental import pallas as pl
from jax.experimental.pallas import tpu as pltpu

LANE = 128


def _round_up(n: int, m: int) -> int:
    return ((n + m - 1) // m) * m


def _net_kernel(x_ref,
                w1_ref, b1_ref, w2_ref, b2_ref, w3_ref, b3_ref,
                w4_ref, b4_ref, w5_ref, b5_ref, w6_ref, b6_ref,
                y_ref):
    """Fused 6-layer MLP autoencoder forward on one (tile, in_dim) batch block.

    MXU compute dtype == weight dtype (f32 or bf16); accumulation is always f32.
    Bias add / ReLU / sigmoid run in f32; inter-layer activations are carried in the
    weight dtype (the cast is fused with the ReLU), matching the pure-JAX reference.
    """
    wd = w1_ref.dtype

    def dense(h, w_ref, b_ref):
        return jnp.dot(h.astype(wd), w_ref[...],
                       preferred_element_type=jnp.float32) + b_ref[...]

    def relu_cast(a):
        return jnp.maximum(a, 0.0).astype(wd)

    x = x_ref[...]

    # ---- encoder ----
    h = relu_cast(dense(x, w1_ref, b1_ref))
    h = relu_cast(dense(h, w2_ref, b2_ref))
    z = dense(h, w3_ref, b3_ref)                       # latent, f32

    # ---- decoder ----
    h = relu_cast(z)
    h = relu_cast(dense(h, w4_ref, b4_ref))
    h = relu_cast(dense(h, w5_ref, b5_ref))
    logits = dense(h, w6_ref, b6_ref)                  # f32

    y_ref[...] = jax.nn.sigmoid(logits).astype(y_ref.dtype)


def init_params(key, latent_size, num_control_point, dtype=jnp.float32):
    """Deterministic (seeded) init. Weights stored as (in, out), biases as (1, out)."""
    in_dim = num_control_point * 3
    dims = [(in_dim, 512), (512, 256), (256, latent_size),
            (latent_size, 256), (256, 512), (512, in_dim)]
    params = []
    for i, (din, dout) in enumerate(dims):
        kw, kb = jax.random.split(jax.random.fold_in(key, i))
        scale = 1.0 / float(din) ** 0.5              # ~ PyTorch Linear init range
        w = jax.random.uniform(kw, (din, dout), dtype, -scale, scale)
        b = jax.random.uniform(kb, (1, dout), jnp.float32, -scale, scale)
        params.append((w, b))
    return params


def prepare_params(params):
    """One-time (outside the jitted forward) padding / dtype prep of the 6 (w, b) pairs.

    * biases -> f32, shape (1, out)
    * latent dim zero-padded to a multiple of 8 (exact: padded units are relu(0+0)=0 and
      meet zero rows of fc1's weight)
    * final output columns zero-padded to a multiple of 128 so the kernel's store is a
      full, unmasked vreg write (padded columns are sliced off by the caller)
    """
    (w1, b1), (w2, b2), (w3, b3), (w4, b4), (w5, b5), (w6, b6) = params
    latent = w3.shape[1]
    out_dim = w6.shape[1]
    lat_p = _round_up(latent, 8)
    out_p = _round_up(out_dim, LANE)
    f32 = jnp.float32

    def bias(b):
        return jnp.asarray(b, f32).reshape(1, -1)

    w3_p = jnp.pad(w3, ((0, 0), (0, lat_p - latent)))
    b3_p = jnp.pad(bias(b3), ((0, 0), (0, lat_p - latent)))
    w4_p = jnp.pad(w4, ((0, lat_p - latent), (0, 0)))
    w6_p = jnp.pad(w6, ((0, 0), (0, out_p - out_dim)))
    b6_p = jnp.pad(bias(b6), ((0, 0), (0, out_p - out_dim)))

    return (w1, bias(b1), w2, bias(b2), w3_p, b3_p,
            w4_p, bias(b4), w5, bias(b5), w6_p, b6_p)


@functools.partial(jax.jit, static_argnames=("batch_tile", "num_cores"))
def net_forward(x, flat_params, *, batch_tile=512, num_cores=1):
    """x: (B, num_control_point*3) -> (B, num_control_point*3), dtype of x.

    flat_params: output of prepare_params(). Weight dtype (f32 or bf16) selects the MXU
    compute dtype; accumulation is always f32.
    """
    B, in_dim = x.shape
    (w1, b1, w2, b2, w3, b3, w4, b4, w5, b5, w6, b6) = flat_params
    lat_p = w3.shape[1]
    out_p = w6.shape[1]

    # Batch tiling: balance tiles across TensorCores and avoid padded-row MXU work,
    # capping the tile at `batch_tile` rows for the large-batch regime.
    n_steps = max(num_cores, -(-B // batch_tile))
    tile = _round_up(-(-B // n_steps), 8)
    B_pad = tile * n_steps

    # Only the batch dim is padded; the native (e.g. 48-wide) feature dim is kept as-is
    # (full-extent last block dim is legal), saving a pad pass and shrinking the x DMA.
    x_p = jnp.pad(x, ((0, B_pad - B), (0, 0)))

    x_spec = pl.BlockSpec((tile, in_dim), lambda i: (i, 0))
    y_spec = pl.BlockSpec((tile, out_p), lambda i: (i, 0))
    # Grid-invariant index maps -> weights/biases stay resident in VMEM across batch tiles.
    # (Left at default buffering: total working set is a few MB, far under VMEM limits.)
    param_specs = [pl.BlockSpec(p.shape, lambda i: (0, 0)) for p in flat_params]

    flops = 2 * B_pad * (in_dim * 512 + 512 * 256 + 256 * lat_p
                         + lat_p * 256 + 256 * 512 + 512 * out_p)
    bytes_accessed = (B_pad * in_dim * x.dtype.itemsize
                      + B_pad * out_p * x.dtype.itemsize
                      + sum(int(p.size) * p.dtype.itemsize for p in flat_params))
    cost = pl.CostEstimate(flops=int(flops),
                           transcendentals=int(B_pad * out_p),   # final sigmoid
                           bytes_accessed=int(bytes_accessed))

    y_p = pl.pallas_call(
        _net_kernel,
        out_shape=jax.ShapeDtypeStruct((B_pad, out_p), x.dtype),
        grid_spec=pltpu.PrefetchScalarGridSpec(
            num_scalar_prefetch=0,
            grid=(n_steps,),
            in_specs=[x_spec] + param_specs,
            out_specs=y_spec,
        ),
        compiler_params=pltpu.CompilerParams(
            dimension_semantics=("parallel",),   # batch tiles shard across megacore TCs
        ),
        cost_estimate=cost,
    )(x_p, *flat_params)

    return y_p[:B, :in_dim]


def net_forward_ref(x, params):
    """Pure-JAX reference with the same precision policy as the kernel."""
    def dense(h, w, b):
        return jnp.dot(h.astype(w.dtype), w,
                       preferred_element_type=jnp.float32) + b.astype(jnp.float32)

    (w1, b1), (w2, b2), (w3, b3), (w4, b4), (w5, b5), (w6, b6) = params
    h = jnp.maximum(dense(x, w1, b1), 0.0)
    h = jnp.maximum(dense(h, w2, b2), 0.0)
    z = dense(h, w3, b3)
    h = jnp.maximum(z, 0.0)
    h = jnp.maximum(dense(h, w4, b4), 0.0)
    h = jnp.maximum(dense(h, w5, b5), 0.0)
    return jax.nn.sigmoid(dense(h, w6, b6))


def _num_tensorcores() -> int:
    """Best-effort TensorCores-per-device count (megacore chips -> 2, else 1)."""
    try:
        kind = jax.devices()[0].device_kind.lower()
        if ("v7" in kind) or ("v5p" in kind) or ("v4" in kind):
            return 2
    except Exception:
        pass
    return 1


if __name__ == "__main__":
    latent_size = 32
    num_control_point = 16          # -> input/output feature dim = 48
    batch = 300                     # deliberately NOT a multiple of the tile / 8

    key = jax.random.PRNGKey(0)
    k_params, k_x = jax.random.split(key)

    params_f32 = init_params(k_params, latent_size, num_control_point)
    x = jax.random.normal(k_x, (batch, num_control_point * 3), jnp.float32)

    n_cores = _num_tensorcores()

    # --- exact f32 path: same semantics as the PyTorch module ---
    flat_f32 = prepare_params(params_f32)
    y = jax.block_until_ready(net_forward(x, flat_f32, num_cores=n_cores))
    y_ref = net_forward_ref(x, params_f32)
    assert y.shape == (batch, num_control_point * 3)
    assert jnp.allclose(y, y_ref, atol=1e-5, rtol=1e-5), "f32 mismatch vs JAX reference"

    # --- bf16-weight perf path: bf16 MXU + bf16 activations, f32 accumulation ---
    params_bf16 = [(w.astype(jnp.bfloat16), b) for (w, b) in params_f32]
    flat_bf16 = prepare_params(params_bf16)
    y16 = jax.block_until_ready(net_forward(x, flat_bf16, num_cores=n_cores))
    y16_ref = net_forward_ref(x, params_bf16)
    assert jnp.allclose(y16, y16_ref, atol=2e-2, rtol=2e-2), "bf16 mismatch vs reference"
    assert jnp.allclose(y16, y, atol=5e-2, rtol=5e-2), "bf16 drifted too far from f32"

    print("KERNEL_OK")
</pallas_src>

<mosaic_0001>
module attributes {stable_mosaic.version = 11 : i64} {
  func.func @_net_kernel(%arg0: i32, %arg1: memref<304x48xf32, #tpu.memory_space<vmem>>, %arg2: memref<48x512xf32, #tpu.memory_space<vmem>>, %arg3: memref<1x512xf32, #tpu.memory_space<vmem>>, %arg4: memref<512x256xf32, #tpu.memory_space<vmem>>, %arg5: memref<1x256xf32, #tpu.memory_space<vmem>>, %arg6: memref<256x32xf32, #tpu.memory_space<vmem>>, %arg7: memref<1x32xf32, #tpu.memory_space<vmem>>, %arg8: memref<32x256xf32, #tpu.memory_space<vmem>>, %arg9: memref<1x256xf32, #tpu.memory_space<vmem>>, %arg10: memref<256x512xf32, #tpu.memory_space<vmem>>, %arg11: memref<1x512xf32, #tpu.memory_space<vmem>>, %arg12: memref<512x128xf32, #tpu.memory_space<vmem>>, %arg13: memref<1x128xf32, #tpu.memory_space<vmem>>, %arg14: memref<304x128xf32, #tpu.memory_space<vmem>>) attributes {dimension_semantics = [#tpu.dimension_semantics<parallel>], iteration_bounds = array<i64: 1>, scalar_prefetch = 0 : i64, scratch_operands = 0 : i64, tpu.core_type = #tpu.core_type<tc>, window_params = [{transform_indices = @transform_0, window_bounds = array<i64: 304, 48>}, {pipeline_mode = #tpu.pipeline_mode<synchronous>, transform_indices = @transform_1, window_bounds = array<i64: 48, 512>}, {pipeline_mode = #tpu.pipeline_mode<synchronous>, transform_indices = @transform_2, window_bounds = array<i64: 1, 512>}, {pipeline_mode = #tpu.pipeline_mode<synchronous>, transform_indices = @transform_3, window_bounds = array<i64: 512, 256>}, {pipeline_mode = #tpu.pipeline_mode<synchronous>, transform_indices = @transform_4, window_bounds = array<i64: 1, 256>}, {pipeline_mode = #tpu.pipeline_mode<synchronous>, transform_indices = @transform_5, window_bounds = array<i64: 256, 32>}, {pipeline_mode = #tpu.pipeline_mode<synchronous>, transform_indices = @transform_6, window_bounds = array<i64: 1, 32>}, {pipeline_mode = #tpu.pipeline_mode<synchronous>, transform_indices = @transform_7, window_bounds = array<i64: 32, 256>}, {pipeline_mode = #tpu.pipeline_mode<synchronous>, transform_indices = @transform_8, window_bounds = array<i64: 1, 256>}, {pipeline_mode = #tpu.pipeline_mode<synchronous>, transform_indices = @transform_9, window_bounds = array<i64: 256, 512>}, {pipeline_mode = #tpu.pipeline_mode<synchronous>, transform_indices = @transform_10, window_bounds = array<i64: 1, 512>}, {pipeline_mode = #tpu.pipeline_mode<synchronous>, transform_indices = @transform_11, window_bounds = array<i64: 512, 128>}, {pipeline_mode = #tpu.pipeline_mode<synchronous>, transform_indices = @transform_12, window_bounds = array<i64: 1, 128>}, {transform_indices = @transform_13, window_bounds = array<i64: 304, 128>}]} {
    %c0 = arith.constant 0 : index
    %c0_0 = arith.constant 0 : index
    %0 = vector.load %arg1[%c0, %c0_0] : memref<304x48xf32, #tpu.memory_space<vmem>>, vector<304x48xf32>
    %c0_1 = arith.constant 0 : index
    %c0_2 = arith.constant 0 : index
    %1 = vector.load %arg2[%c0_1, %c0_2] : memref<48x512xf32, #tpu.memory_space<vmem>>, vector<48x512xf32>
    %cst = arith.constant dense<0.000000e+00> : vector<304x512xf32>
    %2 = tpu.matmul %0, %1, %cst {dimension_numbers = #tpu.dot_dimension_numbers<[1], [0], [0], [1], [0, 0, 1, 1], [], []>} : vector<304x48xf32>, vector<48x512xf32>, vector<304x512xf32> -> vector<304x512xf32>
    %c0_3 = arith.constant 0 : index
    %c0_4 = arith.constant 0 : index
    %3 = vector.load %arg3[%c0_3, %c0_4] : memref<1x512xf32, #tpu.memory_space<vmem>>, vector<1x512xf32>
    %4 = vector.broadcast %3 : vector<1x512xf32> to vector<304x512xf32>
    %5 = arith.addf %2, %4 : vector<304x512xf32>
    %cst_5 = arith.constant 0.000000e+00 : f32
    %6 = vector.broadcast %cst_5 : f32 to vector<304x512xf32>
    %7 = arith.maximumf %5, %6 : vector<304x512xf32>
    %c0_6 = arith.constant 0 : index
    %c0_7 = arith.constant 0 : index
    %8 = vector.load %arg4[%c0_6, %c0_7] : memref<512x256xf32, #tpu.memory_space<vmem>>, vector<512x256xf32>
    %cst_8 = arith.constant dense<0.000000e+00> : vector<304x256xf32>
    %9 = tpu.matmul %7, %8, %cst_8 {dimension_numbers = #tpu.dot_dimension_numbers<[1], [0], [0], [1], [0, 0, 1, 1], [], []>} : vector<304x512xf32>, vector<512x256xf32>, vector<304x256xf32> -> vector<304x256xf32>
    %c0_9 = arith.constant 0 : index
    %c0_10 = arith.constant 0 : index
    %10 = vector.load %arg5[%c0_9, %c0_10] : memref<1x256xf32, #tpu.memory_space<vmem>>, vector<1x256xf32>
    %11 = vector.broadcast %10 : vector<1x256xf32> to vector<304x256xf32>
    %12 = arith.addf %9, %11 : vector<304x256xf32>
    %cst_11 = arith.constant 0.000000e+00 : f32
    %13 = vector.broadcast %cst_11 : f32 to vector<304x256xf32>
    %14 = arith.maximumf %12, %13 : vector<304x256xf32>
    %c0_12 = arith.constant 0 : index
    %c0_13 = arith.constant 0 : index
    %15 = vector.load %arg6[%c0_12, %c0_13] : memref<256x32xf32, #tpu.memory_space<vmem>>, vector<256x32xf32>
    %cst_14 = arith.constant dense<0.000000e+00> : vector<304x32xf32>
    %16 = tpu.matmul %14, %15, %cst_14 {dimension_numbers = #tpu.dot_dimension_numbers<[1], [0], [0], [1], [0, 0, 1, 1], [], []>} : vector<304x256xf32>, vector<256x32xf32>, vector<304x32xf32> -> vector<304x32xf32>
    %c0_15 = arith.constant 0 : index
    %c0_16 = arith.constant 0 : index
    %17 = vector.load %arg7[%c0_15, %c0_16] : memref<1x32xf32, #tpu.memory_space<vmem>>, vector<1x32xf32>
    %18 = vector.broadcast %17 : vector<1x32xf32> to vector<304x32xf32>
    %19 = arith.addf %16, %18 : vector<304x32xf32>
    %cst_17 = arith.constant 0.000000e+00 : f32
    %20 = vector.broadcast %cst_17 : f32 to vector<304x32xf32>
    %21 = arith.maximumf %19, %20 : vector<304x32xf32>
    %c0_18 = arith.constant 0 : index
    %c0_19 = arith.constant 0 : index
    %22 = vector.load %arg8[%c0_18, %c0_19] : memref<32x256xf32, #tpu.memory_space<vmem>>, vector<32x256xf32>
    %cst_20 = arith.constant dense<0.000000e+00> : vector<304x256xf32>
    %23 = tpu.matmul %21, %22, %cst_20 {dimension_numbers = #tpu.dot_dimension_numbers<[1], [0], [0], [1], [0, 0, 1, 1], [], []>} : vector<304x32xf32>, vector<32x256xf32>, vector<304x256xf32> -> vector<304x256xf32>
    %c0_21 = arith.constant 0 : index
    %c0_22 = arith.constant 0 : index
    %24 = vector.load %arg9[%c0_21, %c0_22] : memref<1x256xf32, #tpu.memory_space<vmem>>, vector<1x256xf32>
    %25 = vector.broadcast %24 : vector<1x256xf32> to vector<304x256xf32>
    %26 = arith.addf %23, %25 : vector<304x256xf32>
    %cst_23 = arith.constant 0.000000e+00 : f32
    %27 = vector.broadcast %cst_23 : f32 to vector<304x256xf32>
    %28 = arith.maximumf %26, %27 : vector<304x256xf32>
    %c0_24 = arith.constant 0 : index
    %c0_25 = arith.constant 0 : index
    %29 = vector.load %arg10[%c0_24, %c0_25] : memref<256x512xf32, #tpu.memory_space<vmem>>, vector<256x512xf32>
    %cst_26 = arith.constant dense<0.000000e+00> : vector<304x512xf32>
    %30 = tpu.matmul %28, %29, %cst_26 {dimension_numbers = #tpu.dot_dimension_numbers<[1], [0], [0], [1], [0, 0, 1, 1], [], []>} : vector<304x256xf32>, vector<256x512xf32>, vector<304x512xf32> -> vector<304x512xf32>
    %c0_27 = arith.constant 0 : index
    %c0_28 = arith.constant 0 : index
    %31 = vector.load %arg11[%c0_27, %c0_28] : memref<1x512xf32, #tpu.memory_space<vmem>>, vector<1x512xf32>
    %32 = vector.broadcast %31 : vector<1x512xf32> to vector<304x512xf32>
    %33 = arith.addf %30, %32 : vector<304x512xf32>
    %cst_29 = arith.constant 0.000000e+00 : f32
    %34 = vector.broadcast %cst_29 : f32 to vector<304x512xf32>
    %35 = arith.maximumf %33, %34 : vector<304x512xf32>
    %c0_30 = arith.constant 0 : index
    %c0_31 = arith.constant 0 : index
    %36 = vector.load %arg12[%c0_30, %c0_31] : memref<512x128xf32, #tpu.memory_space<vmem>>, vector<512x128xf32>
    %cst_32 = arith.constant dense<0.000000e+00> : vector<304x128xf32>
    %37 = tpu.matmul %35, %36, %cst_32 {dimension_numbers = #tpu.dot_dimension_numbers<[1], [0], [0], [1], [0, 0, 1, 1], [], []>} : vector<304x512xf32>, vector<512x128xf32>, vector<304x128xf32> -> vector<304x128xf32>
    %c0_33 = arith.constant 0 : index
    %c0_34 = arith.constant 0 : index
    %38 = vector.load %arg13[%c0_33, %c0_34] : memref<1x128xf32, #tpu.memory_space<vmem>>, vector<1x128xf32>
    %39 = vector.broadcast %38 : vector<1x128xf32> to vector<304x128xf32>
    %40 = arith.addf %37, %39 : vector<304x128xf32>
    %41 = arith.negf %40 : vector<304x128xf32>
    %42 = math.exp %41 : vector<304x128xf32>
    %cst_35 = arith.constant 1.000000e+00 : f32
    %43 = vector.broadcast %cst_35 : f32 to vector<304x128xf32>
    %44 = arith.addf %43, %42 : vector<304x128xf32>
    %45 = arith.divf %43, %44 : vector<304x128xf32>
    %c0_36 = arith.constant 0 : index
    %c0_37 = arith.constant 0 : index
    %46 = vector.load %arg14[%c0_36, %c0_37] : memref<304x128xf32, #tpu.memory_space<vmem>>, vector<304x128xf32>
    tpu.vector_store %arg14[%c0_36, %c0_37], %45 {strides = array<i32>} : memref<304x128xf32, #tpu.memory_space<vmem>>, vector<304x128xf32>,
    return
  }
  func.func @transform_0(%arg0: i32) -> (i32, i32) {
    %c0_i32 = arith.constant 0 : i32
    %c0_i32_0 = arith.constant 0 : i32
    return %arg0, %c0_i32 : i32, i32
  }
  func.func @transform_1(%arg0: i32) -> (i32, i32) {
    %c0_i32 = arith.constant 0 : i32
    %c0_i32_0 = arith.constant 0 : i32
    %c0_i32_1 = arith.constant 0 : i32
    return %c0_i32, %c0_i32_0 : i32, i32
  }
  func.func @transform_2(%arg0: i32) -> (i32, i32) {
    %c0_i32 = arith.constant 0 : i32
    %c0_i32_0 = arith.constant 0 : i32
    %c0_i32_1 = arith.constant 0 : i32
    return %c0_i32, %c0_i32_0 : i32, i32
  }
  func.func @transform_3(%arg0: i32) -> (i32, i32) {
    %c0_i32 = arith.constant 0 : i32
    %c0_i32_0 = arith.constant 0 : i32
    %c0_i32_1 = arith.constant 0 : i32
    return %c0_i32, %c0_i32_0 : i32, i32
  }
  func.func @transform_4(%arg0: i32) -> (i32, i32) {
    %c0_i32 = arith.constant 0 : i32
    %c0_i32_0 = arith.constant 0 : i32
    %c0_i32_1 = arith.constant 0 : i32
    return %c0_i32, %c0_i32_0 : i32, i32
  }
  func.func @transform_5(%arg0: i32) -> (i32, i32) {
    %c0_i32 = arith.constant 0 : i32
    %c0_i32_0 = arith.constant 0 : i32
    %c0_i32_1 = arith.constant 0 : i32
    return %c0_i32, %c0_i32_0 : i32, i32
  }
  func.func @transform_6(%arg0: i32) -> (i32, i32) {
    %c0_i32 = arith.constant 0 : i32
    %c0_i32_0 = arith.constant 0 : i32
    %c0_i32_1 = arith.constant 0 : i32
    return %c0_i32, %c0_i32_0 : i32, i32
  }
  func.func @transform_7(%arg0: i32) -> (i32, i32) {
    %c0_i32 = arith.constant 0 : i32
    %c0_i32_0 = arith.constant 0 : i32
    %c0_i32_1 = arith.constant 0 : i32
    return %c0_i32, %c0_i32_0 : i32, i32
  }
  func.func @transform_8(%arg0: i32) -> (i32, i32) {
    %c0_i32 = arith.constant 0 : i32
    %c0_i32_0 = arith.constant 0 : i32
    %c0_i32_1 = arith.constant 0 : i32
    return %c0_i32, %c0_i32_0 : i32, i32
  }
  func.func @transform_9(%arg0: i32) -> (i32, i32) {
    %c0_i32 = arith.constant 0 : i32
    %c0_i32_0 = arith.constant 0 : i32
    %c0_i32_1 = arith.constant 0 : i32
    return %c0_i32, %c0_i32_0 : i32, i32
  }
  func.func @transform_10(%arg0: i32) -> (i32, i32) {
    %c0_i32 = arith.constant 0 : i32
    %c0_i32_0 = arith.constant 0 : i32
    %c0_i32_1 = arith.constant 0 : i32
    return %c0_i32, %c0_i32_0 : i32, i32
  }
  func.func @transform_11(%arg0: i32) -> (i32, i32) {
    %c0_i32 = arith.constant 0 : i32
    %c0_i32_0 = arith.constant 0 : i32
    %c0_i32_1 = arith.constant 0 : i32
    return %c0_i32, %c0_i32_0 : i32, i32
  }
  func.func @transform_12(%arg0: i32) -> (i32, i32) {
    %c0_i32 = arith.constant 0 : i32
    %c0_i32_0 = arith.constant 0 : i32
    %c0_i32_1 = arith.constant 0 : i32
    return %c0_i32, %c0_i32_0 : i32, i32
  }
  func.func @transform_13(%arg0: i32) -> (i32, i32) {
    %c0_i32 = arith.constant 0 : i32
    %c0_i32_0 = arith.constant 0 : i32
    return %arg0, %c0_i32 : i32, i32
  }
}

</mosaic_0001>

<llo_original>
// kernel: net_forward.1
$region0: #{net_forward.1}
  #allocation0 [shape = 'u32[]', space=smem, size = 0x4, offset = 0x4, fixed_abs, tag = 'smem constant byte address 0x4 - core index']
  #allocation1 [shape = 'u32[144,128]{1,0:T(1,128)}', space=vmem, size = 0x12000, scoped, tag = 'internal scratch']
  %s0 = inlined_call_operand.vmem [shape: f32[304,48], index: 0, kind: input, shape index: {}]
  %s1 = inlined_call_operand.vmem [shape: f32[48,512], index: 1, kind: input, shape index: {}]
  %s2 = inlined_call_operand.vmem [shape: f32[1,512], index: 2, kind: input, shape index: {}]
  %s3 = inlined_call_operand.vmem [shape: f32[512,256], index: 3, kind: input, shape index: {}]
  %s4 = inlined_call_operand.vmem [shape: f32[1,256], index: 4, kind: input, shape index: {}]
  %s5 = inlined_call_operand.vmem [shape: f32[256,32], index: 5, kind: input, shape index: {}]
  %s6 = inlined_call_operand.vmem [shape: f32[1,32], index: 6, kind: input, shape index: {}]
  %s7 = inlined_call_operand.vmem [shape: f32[32,256], index: 7, kind: input, shape index: {}]
  %s8 = inlined_call_operand.vmem [shape: f32[1,256], index: 8, kind: input, shape index: {}]
  %s9 = inlined_call_operand.hbm [shape: f32[256,512], index: 9, kind: input, shape index: {}]
  %s10 = inlined_call_operand.vmem [shape: f32[1,512], index: 10, kind: input, shape index: {}]
  %s11 = inlined_call_operand.hbm [shape: f32[512,128], index: 11, kind: input, shape index: {}]
  %s12 = inlined_call_operand.vmem [shape: f32[1,128], index: 12, kind: input, shape index: {}]
  %s13 = inlined_call_operand.vmem [shape: f32[304,128], index: 13, kind: output, shape index: {}]
  %s14 = sld [smem:[#allocation0]]
  $region70: #{net_forward.1} parent=0
    _
  %s16 = ssub.s32 1, %s14
  %s17 = scalar_select 0, %s16, %s14
  $region1: #{net_forward.1} parent=0
    #allocation2 [shape = 'u8[524288]{0}', space=vmem, size = 0x80000, scoped, tag = 'input window, operand 9, single buffered']
    #allocation3 [shape = 's32[1]{0}', space=sflag, size = 0x4, scoped, tag = 'scoped memory for net_forward.1']
    #allocation4 [shape = 'u8[262144]{0}', space=vmem, size = 0x40000, scoped, tag = 'input window, operand 11, single buffered']
    #allocation5 [shape = 's32[1]{0}', space=sflag, size = 0x4, scoped, tag = 'scoped memory for net_forward.1']
    %18 = vsyncpa [#allocation3], 0
    %19 = vsyncpa [#allocation5], 0
    // Predicated region
    $region2: #{net_forward.1} parent=1 // pred_check
      _
    $region3: #{net_forward.1} parent=1 // pred_check_branch
      %21 = sbr.rel (0) target = $region5
    $region4: #{net_forward.1} parent=1 // pred_region
      _
    $region5: #{net_forward.1} parent=1 // pred_fallthru
      _
    // Predicated region
    $region6: #{net_forward.1} parent=1 // pred_check
      _
    $region7: #{net_forward.1} parent=1 // pred_check_branch
      %23 = sbr.rel (0) target = $region9
    $region8: #{net_forward.1} parent=1 // pred_region
      _
    $region9: #{net_forward.1} parent=1 // pred_fallthru
      _
    // Predicated region
    $region10: #{net_forward.1} parent=1 // pred_check
      _
    $region11: #{net_forward.1} parent=1 // pred_check_branch
      %25 = sbr.rel (0) target = $region13
    $region12: #{net_forward.1} parent=1 // pred_region
      _
    $region13: #{net_forward.1} parent=1 // pred_fallthru
      _
    // Predicated region
    $region14: #{net_forward.1} parent=1 // pred_check
      _
    $region15: #{net_forward.1} parent=1 // pred_check_branch
      %27 = sbr.rel (0) target = $region17
    $region16: #{net_forward.1} parent=1 // pred_region
      _
    $region17: #{net_forward.1} parent=1 // pred_fallthru
      _
    // Predicated region
    $region18: #{net_forward.1} parent=1 // pred_check
      _
    $region19: #{net_forward.1} parent=1 // pred_check_branch
      %29 = sbr.rel (0) target = $region21
    $region20: #{net_forward.1} parent=1 // pred_region
      _
    $region21: #{net_forward.1} parent=1 // pred_fallthru
      _
    // Predicated region
    $region22: #{net_forward.1} parent=1 // pred_check
      _
    $region23: #{net_forward.1} parent=1 // pred_check_branch
      %31 = sbr.rel (0) target = $region25
    $region24: #{net_forward.1} parent=1 // pred_region
      _
    $region25: #{net_forward.1} parent=1 // pred_fallthru
      _
    // Predicated region
    $region26: #{net_forward.1} parent=1 // pred_check
      _
    $region27: #{net_forward.1} parent=1 // pred_check_branch
      %33 = sbr.rel (0) target = $region29
    $region28: #{net_forward.1} parent=1 // pred_region
      _
    $region29: #{net_forward.1} parent=1 // pred_fallthru
      _
    // Predicated region
    $region30: #{net_forward.1} parent=1 // pred_check
      _
    $region31: #{net_forward.1} parent=1 // pred_check_branch
      %35 = sbr.rel (0) target = $region33
    $region32: #{net_forward.1} parent=1 // pred_region
      _
    $region33: #{net_forward.1} parent=1 // pred_fallthru
      _
    // Predicated region
    $region34: #{net_forward.1} parent=1 // pred_check
      _
    $region35: #{net_forward.1} parent=1 // pred_check_branch
      %37 = sbr.rel (0) target = $region37
    $region36: #{net_forward.1} parent=1 // pred_region
      _
    $region37: #{net_forward.1} parent=1 // pred_fallthru
      _
    // Predicated region
    $region38: #{net_forward.1} parent=1 // pred_check
      _
    $region39: #{net_forward.1} parent=1 // pred_check_branch
      %39 = sbr.rel (0) target = $region41
    $region40: #{net_forward.1} parent=1 // pred_region
      %s41 = ssub.s32 16384, 16384
      %42 = vsyncadd [#allocation3], %s41
      %s43 = sshll.u32 [#allocation2], 4
      %s44 = int_to_ptr.vmem [resolvable:$true] %s43
      %49 = dma.hbm_to_vmem [thread:$0]  %s9, 16384, %s44, [#allocation3], 512, 512, 32
    $region41: #{net_forward.1} parent=1 // pred_fallthru
      _
    // Predicated region
    $region42: #{net_forward.1} parent=1 // pred_check
      _
    $region43: #{net_forward.1} parent=1 // pred_check_branch
      %51 = sbr.rel (0) target = $region45
    $region44: #{net_forward.1} parent=1 // pred_region
      _
    $region45: #{net_forward.1} parent=1 // pred_fallthru
      _
    // Predicated region
    $region46: #{net_forward.1} parent=1 // pred_check
      _
    $region47: #{net_forward.1} parent=1 // pred_check_branch
      %53 = sbr.rel (0) target = $region49
    $region48: #{net_forward.1} parent=1 // pred_region
      %s55 = ssub.s32 8192, 8192
      %56 = vsyncadd [#allocation5], %s55
      %s57 = sshll.u32 [#allocation4], 4
      %s58 = int_to_ptr.vmem [resolvable:$true] %s57
      %63 = dma.hbm_to_vmem [thread:$0]  %s11, 8192, %s58, [#allocation5], 128, 128, 8
    $region49: #{net_forward.1} parent=1 // pred_fallthru
      _
    // Predicated region
    $region50: #{net_forward.1} parent=1 // pred_check
      _
    $region51: #{net_forward.1} parent=1 // pred_check_branch
      %65 = sbr.rel (0) target = $region53
    $region52: #{net_forward.1} parent=1 // pred_region
      _
    $region53: #{net_forward.1} parent=1 // pred_fallthru
      _
    // Predicated region
    $region54: #{net_forward.1} parent=1 // pred_check
      _
    $region55: #{net_forward.1} parent=1 // pred_check_branch
      %67 = sbr.rel (0) target = $region57
    $region56: #{net_forward.1} parent=1 // pred_region
      %68 = dma.done [#allocation3], 16384
    $region57: #{net_forward.1} parent=1 // pred_fallthru
      _
    // Predicated region
    $region58: #{net_forward.1} parent=1 // pred_check
      _
    $region59: #{net_forward.1} parent=1 // pred_check_branch
      %70 = sbr.rel (0) target = $region61
    $region60: #{net_forward.1} parent=1 // pred_region
      %71 = dma.done [#allocation5], 8192
    $region61: #{net_forward.1} parent=1 // pred_fallthru
      _
    %v72 = vld [vmem:[%s0] sm:$0xff]
    %v73 = vld [vmem:[%s0 + $0x8] sm:$0xff]
    %v74 = vld [vmem:[%s0 + $0x10] sm:$0xff]
    %v75 = vld [vmem:[%s0 + $0x18] sm:$0xff]
    %v76 = vld [vmem:[%s0 + $0x20] sm:$0xff]
    %v77 = vld [vmem:[%s0 + $0x28] sm:$0xff]
    %v78 = vld [vmem:[%s0 + $0x30] sm:$0xff]
    %v79 = vld [vmem:[%s0 + $0x38] sm:$0xff]
    %v80 = vld [vmem:[%s0 + $0x40] sm:$0xff]
    %v81 = vld [vmem:[%s0 + $0x48] sm:$0xff]
    %v82 = vld [vmem:[%s0 + $0x50] sm:$0xff]
    %v83 = vld [vmem:[%s0 + $0x58] sm:$0xff]
    %v84 = vld [vmem:[%s0 + $0x60] sm:$0xff]
    %v85 = vld [vmem:[%s0 + $0x68] sm:$0xff]
    %v86 = vld [vmem:[%s0 + $0x70] sm:$0xff]
    %v87 = vld [vmem:[%s0 + $0x78] sm:$0xff]
    %v88 = vld [vmem:[%s0 + $0x80] sm:$0xff]
    %v89 = vld [vmem:[%s0 + $0x88] sm:$0xff]
    %v90 = vld [vmem:[%s0 + $0x90] sm:$0xff]
    %v91 = vld [vmem:[%s0 + $0x98] sm:$0xff]
    %v92 = vld [vmem:[%s0 + $0xa0] sm:$0xff]
    %v93 = vld [vmem:[%s0 + $0xa8] sm:$0xff]
    %v94 = vld [vmem:[%s0 + $0xb0] sm:$0xff]
    %v95 = vld [vmem:[%s0 + $0xb8] sm:$0xff]
    %v96 = vld [vmem:[%s0 + $0xc0] sm:$0xff]
    %v97 = vld [vmem:[%s0 + $0xc8] sm:$0xff]
    %v98 = vld [vmem:[%s0 + $0xd0] sm:$0xff]
    %v99 = vld [vmem:[%s0 + $0xd8] sm:$0xff]
    %v100 = vld [vmem:[%s0 + $0xe0] sm:$0xff]
    %v101 = vld [vmem:[%s0 + $0xe8] sm:$0xff]
    %v102 = vld [vmem:[%s0 + $0xf0] sm:$0xff]
    %v103 = vld [vmem:[%s0 + $0xf8] sm:$0xff]
    %v104 = vld [vmem:[%s0 + $0x100] sm:$0xff]
    %v105 = vld [vmem:[%s0 + $0x108] sm:$0xff]
    %v106 = vld [vmem:[%s0 + $0x110] sm:$0xff]
    %v107 = vld [vmem:[%s0 + $0x118] sm:$0xff]
    %v108 = vld [vmem:[%s0 + $0x120] sm:$0xff]
    %v109 = vld [vmem:[%s0 + $0x128] sm:$0xff]
    %v110 = vld [vmem:[%s1] sm:$0xff]
    %v111 = vld [vmem:[%s1 + $0x8] sm:$0xff]
    %v112 = vld [vmem:[%s1 + $0x10] sm:$0xff]
    %v113 = vld [vmem:[%s1 + $0x18] sm:$0xff]
    %v114 = vld [vmem:[%s1 + $0x20] sm:$0xff]
    %v115 = vld [vmem:[%s1 + $0x28] sm:$0xff]
    %v116 = vld [vmem:[%s1 + $0x30] sm:$0xff]
    %v117 = vld [vmem:[%s1 + $0x38] sm:$0xff]
    %v118 = vld [vmem:[%s1 + $0x40] sm:$0xff]
    %v119 = vld [vmem:[%s1 + $0x48] sm:$0xff]
    %v120 = vld [vmem:[%s1 + $0x50] sm:$0xff]
    %v121 = vld [vmem:[%s1 + $0x58] sm:$0xff]
    %v122 = vld [vmem:[%s1 + $0x60] sm:$0xff]
    %v123 = vld [vmem:[%s1 + $0x68] sm:$0xff]
    %v124 = vld [vmem:[%s1 + $0x70] sm:$0xff]
    %v125 = vld [vmem:[%s1 + $0x78] sm:$0xff]
    %v126 = vld [vmem:[%s1 + $0x80] sm:$0xff]
    %v127 = vld [vmem:[%s1 + $0x88] sm:$0xff]
    %v128 = vld [vmem:[%s1 + $0x90] sm:$0xff]
    %v129 = vld [vmem:[%s1 + $0x98] sm:$0xff]
    %v130 = vld [vmem:[%s1 + $0xa0] sm:$0xff]
    %v131 = vld [vmem:[%s1 + $0xa8] sm:$0xff]
    %v132 = vld [vmem:[%s1 + $0xb0] sm:$0xff]
    %v133 = vld [vmem:[%s1 + $0xb8] sm:$0xff]
    %v134 = vld [vmem:[%s2] sm:$0xf]
    %v136 = vlaneseq
    %v137 = vshrl.u32 %v136, 7
    %v138 = vsub.s32 0, %v137
    %v139 = vrot.slane %v134, %v138
    %v140 = vlaneseq
    %v141 = vshrl.u32 %v140, 7
    %v142 = vsub.s32 1, %v141
    %v143 = vrot.slane %v134, %v142
    %v144 = vlaneseq
    %v145 = vshrl.u32 %v144, 7
    %v146 = vsub.s32 2, %v145
    %v147 = vrot.slane %v134, %v146
    %v148 = vlaneseq
    %v149 = vshrl.u32 %v148, 7
    %v150 = vsub.s32 3, %v149
    %v151 = vrot.slane %v134, %v150
    %vm156 = vcmask 392192
    %v158 = vsel %vm156, %v72, 0
    %v161 = vsel %vm156, %v73, 0
    %v164 = vsel %vm156, %v74, 0
    %v167 = vsel %vm156, %v75, 0
    %v170 = vsel %vm156, %v76, 0
    %v173 = vsel %vm156, %v77, 0
    %v176 = vsel %vm156, %v78, 0
    %v179 = vsel %vm156, %v79, 0
    %v182 = vsel %vm156, %v80, 0
    %v185 = vsel %vm156, %v81, 0
    %v188 = vsel %vm156, %v82, 0
    %v191 = vsel %vm156, %v83, 0
    %v194 = vsel %vm156, %v84, 0
    %v197 = vsel %vm156, %v85, 0
    %v200 = vsel %vm156, %v86, 0
    %v203 = vsel %vm156, %v87, 0
    %v206 = vsel %vm156, %v88, 0
    %v209 = vsel %vm156, %v89, 0
    %v212 = vsel %vm156, %v90, 0
    %v215 = vsel %vm156, %v91, 0
    %v218 = vsel %vm156, %v92, 0
    %v221 = vsel %vm156, %v93, 0
    %v224 = vsel %vm156, %v94, 0
    %v227 = vsel %vm156, %v95, 0
    %v230 = vsel %vm156, %v96, 0
    %v233 = vsel %vm156, %v97, 0
    %v236 = vsel %vm156, %v98, 0
    %v239 = vsel %vm156, %v99, 0
    %v242 = vsel %vm156, %v100, 0
    %v245 = vsel %vm156, %v101, 0
    %v248 = vsel %vm156, %v102, 0
    %v251 = vsel %vm156, %v103, 0
    %v254 = vsel %vm156, %v104, 0
    %v257 = vsel %vm156, %v105, 0
    %v260 = vsel %vm156, %v106, 0
    %v263 = vsel %vm156, %v107, 0
    %v266 = vsel %vm156, %v108, 0
    %v269 = vsel %vm156, %v109, 0
    %271 = vmatprep.subr.mxu0 0.0
    %272 = vmatpush1.msra.mxu0 0.0
    %273 = vmatprep.subr.mxu0 0.0
    %274 = vmatpush1.msra.mxu0 0.0
    %275 = vmatprep.subr.mxu0 0.0
    %276 = vmatpush1.msra.mxu0 0.0
    %277 = vmatprep.subr.mxu0 0.0
    %278 = vmatpush1.msra.mxu0 0.0
    %279 = vmatprep.subr.mxu0 0.0
    %280 = vmatpush1.msra.mxu0 0.0
    %281 = vmatprep.subr.mxu0 0.0
    %282 = vmatpush1.msra.mxu0 0.0
    %283 = vmatprep.subr.mxu0 0.0
    %284 = vmatpush1.msra.mxu0 0.0
    %285 = vmatprep.subr.mxu0 0.0
    %286 = vmatpush1.msra.mxu0 0.0
    %287 = vmatprep.subr.mxu0 0.0
    %288 = vmatpush1.msra.mxu0 0.0
    %289 = vmatprep.subr.mxu0 0.0
    %290 = vmatpush1.msra.mxu0 0.0
    %291 = vmatprep.subr.mxu0 %v131
    %292 = vmatpush1.msra.mxu0 %v130
    %293 = vmatprep.subr.mxu0 %v127
    %294 = vmatpush1.msra.mxu0 %v126
    %295 = vmatprep.subr.mxu0 %v123
    %296 = vmatpush1.msra.mxu0 %v122
    %297 = vmatprep.subr.mxu0 %v119
    %298 = vmatpush1.msra.mxu0 %v118
    %299 = vmatprep.subr.mxu0 %v115
    %300 = vmatpush1.msra.mxu0 %v114
    %301 = vmatprep.subr.mxu0 %v111
    %302 = vmatpush1.msra.mxu0 %v110
    %303 = vmatprep.subr.mxu0 0.0
    %304 = vmatpush2.msra.mxu0 0.0
    %305 = vmatprep.subr.mxu0 0.0
    %306 = vmatpush2.msra.mxu0 0.0
    %307 = vmatprep.subr.mxu0 0.0
    %308 = vmatpush2.msra.mxu0 0.0
    %309 = vmatprep.subr.mxu0 0.0
    %310 = vmatpush2.msra.mxu0 0.0
    %311 = vmatprep.subr.mxu0 0.0
    %312 = vmatpush2.msra.mxu0 0.0
    %313 = vmatprep.subr.mxu0 0.0
    %314 = vmatpush2.msra.mxu0 0.0
    %315 = vmatprep.subr.mxu0 0.0
    %316 = vmatpush2.msra.mxu0 0.0
    %317 = vmatprep.subr.mxu0 0.0
    %318 = vmatpush2.msra.mxu0 0.0
    %319 = vmatprep.subr.mxu0 0.0
    %320 = vmatpush2.msra.mxu0 0.0
    %321 = vmatprep.subr.mxu0 0.0
    %322 = vmatpush2.msra.mxu0 0.0
    %323 = vmatprep.subr.mxu0 0.0
    %324 = vmatpush2.msra.mxu0 0.0
    %325 = vmatprep.subr.mxu0 0.0
    %326 = vmatpush2.msra.mxu0 0.0
    %327 = vmatprep.subr.mxu0 0.0
    %328 = vmatpush2.msra.mxu0 0.0
    %329 = vmatprep.subr.mxu0 0.0
    %330 = vmatpush2.msra.mxu0 0.0
    %331 = vmatprep.subr.mxu0 0.0
    %332 = vmatpush2.msra.mxu0 0.0
    %333 = vmatprep.subr.mxu0 0.0
    %334 = vmatpush2.msra.mxu0 0.0
    %335 = vmatprep.mubr.f32.mxu0 0.0
    %336 = vmatmul.mubr.f32.gmra.mxu0 %v158
    %v337 = vpop.f32.mrf.mxu0
    %v338 = vadd.f32 %v139, %v337
    %v339 = vpop.f32.mrf.mxu0
    %v340 = vadd.f32 %v143, %v339
    %341 = vmatprep.mubr.f32.mxu0 0.0
    %342 = vmatmul.mubr.f32.gmra.mxu0 %v161
    %v343 = vpop.f32.mrf.mxu0
    %v344 = vadd.f32 %v139, %v343
    %v345 = vpop.f32.mrf.mxu0
    %v346 = vadd.f32 %v143, %v345
    %347 = vmatprep.mubr.f32.mxu0 0.0
    %348 = vmatmul.mubr.f32.gmra.mxu0 %v164
    %v349 = vpop.f32.mrf.mxu0
    %v350 = vadd.f32 %v139, %v349
    %v351 = vpop.f32.mrf.mxu0
    %v352 = vadd.f32 %v143, %v351
    %353 = vmatprep.mubr.f32.mxu0 0.0
    %354 = vmatmul.mubr.f32.gmra.mxu0 %v167
    %v355 = vpop.f32.mrf.mxu0
    %v356 = vadd.f32 %v139, %v355
    %v357 = vpop.f32.mrf.mxu0
    %v358 = vadd.f32 %v143, %v357
    %359 = vmatprep.mubr.f32.mxu0 0.0
    %360 = vmatmul.mubr.f32.gmra.mxu0 %v170
    %v361 = vpop.f32.mrf.mxu0
    %v362 = vadd.f32 %v139, %v361
    %v363 = vpop.f32.mrf.mxu0
    %v364 = vadd.f32 %v143, %v363
    %365 = vmatprep.mubr.f32.mxu0 0.0
    %366 = vmatmul.mubr.f32.gmra.mxu0 %v173
    %v367 = vpop.f32.mrf.mxu0
    %v368 = vadd.f32 %v139, %v367
    %v369 = vpop.f32.mrf.mxu0
    %v370 = vadd.f32 %v143, %v369
    %371 = vmatprep.mubr.f32.mxu0 0.0
    %372 = vmatmul.mubr.f32.gmra.mxu0 %v176
    %v373 = vpop.f32.mrf.mxu0
    %v374 = vadd.f32 %v139, %v373
    %v375 = vpop.f32.mrf.mxu0
    %v376 = vadd.f32 %v143, %v375
    %377 = vmatprep.mubr.f32.mxu0 0.0
    %378 = vmatmul.mubr.f32.gmra.mxu0 %v179
    %v379 = vpop.f32.mrf.mxu0
    %v380 = vadd.f32 %v139, %v379
    %v381 = vpop.f32.mrf.mxu0
    %v382 = vadd.f32 %v143, %v381
    %383 = vmatprep.mubr.f32.mxu0 0.0
    %384 = vmatmul.mubr.f32.gmra.mxu0 %v182
    %v385 = vpop.f32.mrf.mxu0
    %v386 = vadd.f32 %v139, %v385
    %v387 = vpop.f32.mrf.mxu0
    %v388 = vadd.f32 %v143, %v387
    %389 = vmatprep.mubr.f32.mxu0 0.0
    %390 = vmatmul.mubr.f32.gmra.mxu0 %v185
    %v391 = vpop.f32.mrf.mxu0
    %v392 = vadd.f32 %v139, %v391
    %v393 = vpop.f32.mrf.mxu0
    %v394 = vadd.f32 %v143, %v393
    %395 = vmatprep.mubr.f32.mxu0 0.0
    %396 = vmatmul.mubr.f32.gmra.mxu0 %v188
    %v397 = vpop.f32.mrf.mxu0
    %v398 = vadd.f32 %v139, %v397
    %v399 = vpop.f32.mrf.mxu0
    %v400 = vadd.f32 %v143, %v399
    %401 = vmatprep.mubr.f32.mxu0 0.0
    %402 = vmatmul.mubr.f32.gmra.mxu0 %v191
    %v403 = vpop.f32.mrf.mxu0
    %v404 = vadd.f32 %v139, %v403
    %v405 = vpop.f32.mrf.mxu0
    %v406 = vadd.f32 %v143, %v405
    %407 = vmatprep.mubr.f32.mxu0 0.0
    %408 = vmatmul.mubr.f32.gmra.mxu0 %v194
    %v409 = vpop.f32.mrf.mxu0
    %v410 = vadd.f32 %v139, %v409
    %v411 = vpop.f32.mrf.mxu0
    %v412 = vadd.f32 %v143, %v411
    %413 = vmatprep.mubr.f32.mxu0 0.0
    %414 = vmatmul.mubr.f32.gmra.mxu0 %v197
    %v415 = vpop.f32.mrf.mxu0
    %v416 = vadd.f32 %v139, %v415
    %v417 = vpop.f32.mrf.mxu0
    %v418 = vadd.f32 %v143, %v417
    %419 = vmatprep.mubr.f32.mxu0 0.0
    %420 = vmatmul.mubr.f32.gmra.mxu0 %v200
    %v421 = vpop.f32.mrf.mxu0
    %v422 = vadd.f32 %v139, %v421
    %v423 = vpop.f32.mrf.mxu0
    %v424 = vadd.f32 %v143, %v423
    %425 = vmatprep.mubr.f32.mxu0 0.0
    %426 = vmatmul.mubr.f32.gmra.mxu0 %v203
    %v427 = vpop.f32.mrf.mxu0
    %v428 = vadd.f32 %v139, %v427
    %v429 = vpop.f32.mrf.mxu0
    %v430 = vadd.f32 %v143, %v429
    %431 = vmatprep.mubr.f32.mxu0 0.0
    %432 = vmatmul.mubr.f32.gmra.mxu0 %v206
    %v433 = vpop.f32.mrf.mxu0
    %v434 = vadd.f32 %v139, %v433
    %v435 = vpop.f32.mrf.mxu0
    %v436 = vadd.f32 %v143, %v435
    %437 = vmatprep.mubr.f32.mxu0 0.0
    %438 = vmatmul.mubr.f32.gmra.mxu0 %v209
    %v439 = vpop.f32.mrf.mxu0
    %v440 = vadd.f32 %v139, %v439
    %v441 = vpop.f32.mrf.mxu0
    %v442 = vadd.f32 %v143, %v441
    %443 = vmatprep.mubr.f32.mxu0 0.0
    %444 = vmatmul.mubr.f32.gmra.mxu0 %v212
    %v445 = vpop.f32.mrf.mxu0
    %v446 = vadd.f32 %v139, %v445
    %v447 = vpop.f32.mrf.mxu0
    %v448 = vadd.f32 %v143, %v447
    %449 = vmatprep.mubr.f32.mxu0 0.0
    %450 = vmatmul.mubr.f32.gmra.mxu0 %v215
    %v451 = vpop.f32.mrf.mxu0
    %v452 = vadd.f32 %v139, %v451
    %v453 = vpop.f32.mrf.mxu0
    %v454 = vadd.f32 %v143, %v453
    %455 = vmatprep.mubr.f32.mxu0 0.0
    %456 = vmatmul.mubr.f32.gmra.mxu0 %v218
    %v457 = vpop.f32.mrf.mxu0
    %v458 = vadd.f32 %v139, %v457
    %v459 = vpop.f32.mrf.mxu0
    %v460 = vadd.f32 %v143, %v459
    %461 = vmatprep.mubr.f32.mxu0 0.0
    %462 = vmatmul.mubr.f32.gmra.mxu0 %v221
    %v463 = vpop.f32.mrf.mxu0
    %v464 = vadd.f32 %v139, %v463
    %v465 = vpop.f32.mrf.mxu0
    %v466 = vadd.f32 %v143, %v465
    %467 = vmatprep.mubr.f32.mxu0 0.0
    %468 = vmatmul.mubr.f32.gmra.mxu0 %v224
    %v469 = vpop.f32.mrf.mxu0
    %v470 = vadd.f32 %v139, %v469
    %v471 = vpop.f32.mrf.mxu0
    %v472 = vadd.f32 %v143, %v471
    %473 = vmatprep.mubr.f32.mxu0 0.0
    %474 = vmatmul.mubr.f32.gmra.mxu0 %v227
    %v475 = vpop.f32.mrf.mxu0
    %v476 = vadd.f32 %v139, %v475
    %v477 = vpop.f32.mrf.mxu0
    %v478 = vadd.f32 %v143, %v477
    %479 = vmatprep.mubr.f32.mxu0 0.0
    %480 = vmatmul.mubr.f32.gmra.mxu0 %v230
    %v481 = vpop.f32.mrf.mxu0
    %v482 = vadd.f32 %v139, %v481
    %v483 = vpop.f32.mrf.mxu0
    %v484 = vadd.f32 %v143, %v483
    %485 = vmatprep.mubr.f32.mxu0 0.0
    %486 = vmatmul.mubr.f32.gmra.mxu0 %v233
    %v487 = vpop.f32.mrf.mxu0
    %v488 = vadd.f32 %v139, %v487
    %v489 = vpop.f32.mrf.mxu0
    %v490 = vadd.f32 %v143, %v489
    %491 = vmatprep.mubr.f32.mxu0 0.0
    %492 = vmatmul.mubr.f32.gmra.mxu0 %v236
    %v493 = vpop.f32.mrf.mxu0
    %v494 = vadd.f32 %v139, %v493
    %v495 = vpop.f32.mrf.mxu0
    %v496 = vadd.f32 %v143, %v495
    %497 = vmatprep.mubr.f32.mxu0 0.0
    %498 = vmatmul.mubr.f32.gmra.mxu0 %v239
    %v499 = vpop.f32.mrf.mxu0
    %v500 = vadd.f32 %v139, %v499
    %v501 = vpop.f32.mrf.mxu0
    %v502 = vadd.f32 %v143, %v501
    %503 = vmatprep.mubr.f32.mxu0 0.0
    %504 = vmatmul.mubr.f32.gmra.mxu0 %v242
    %v505 = vpop.f32.mrf.mxu0
    %v506 = vadd.f32 %v139, %v505
    %v507 = vpop.f32.mrf.mxu0
    %v508 = vadd.f32 %v143, %v507
    %509 = vmatprep.mubr.f32.mxu0 0.0
    %510 = vmatmul.mubr.f32.gmra.mxu0 %v245
    %v511 = vpop.f32.mrf.mxu0
    %v512 = vadd.f32 %v139, %v511
    %v513 = vpop.f32.mrf.mxu0
    %v514 = vadd.f32 %v143, %v513
    %515 = vmatprep.mubr.f32.mxu0 0.0
    %516 = vmatmul.mubr.f32.gmra.mxu0 %v248
    %v517 = vpop.f32.mrf.mxu0
    %v518 = vadd.f32 %v139, %v517
    %v519 = vpop.f32.mrf.mxu0
    %v520 = vadd.f32 %v143, %v519
    %521 = vmatprep.mubr.f32.mxu0 0.0
    %522 = vmatmul.mubr.f32.gmra.mxu0 %v251
    %v523 = vpop.f32.mrf.mxu0
    %v524 = vadd.f32 %v139, %v523
    %v525 = vpop.f32.mrf.mxu0
    %v526 = vadd.f32 %v143, %v525
    %527 = vmatprep.mubr.f32.mxu0 0.0
    %528 = vmatmul.mubr.f32.gmra.mxu0 %v254
    %v529 = vpop.f32.mrf.mxu0
    %v530 = vadd.f32 %v139, %v529
    %v531 = vpop.f32.mrf.mxu0
    %v532 = vadd.f32 %v143, %v531
    %533 = vmatprep.mubr.f32.mxu0 0.0
    %534 = vmatmul.mubr.f32.gmra.mxu0 %v257
    %v535 = vpop.f32.mrf.mxu0
    %v536 = vadd.f32 %v139, %v535
    %v537 = vpop.f32.mrf.mxu0
    %v538 = vadd.f32 %v143, %v537
    %539 = vmatprep.mubr.f32.mxu0 0.0
    %540 = vmatmul.mubr.f32.gmra.mxu0 %v260
    %v541 = vpop.f32.mrf.mxu0
    %v542 = vadd.f32 %v139, %v541
    %v543 = vpop.f32.mrf.mxu0
    %v544 = vadd.f32 %v143, %v543
    %545 = vmatprep.mubr.f32.mxu0 0.0
    %546 = vmatmul.mubr.f32.gmra.mxu0 %v263
    %v547 = vpop.f32.mrf.mxu0
    %v548 = vadd.f32 %v139, %v547
    %v549 = vpop.f32.mrf.mxu0
    %v550 = vadd.f32 %v143, %v549
    %551 = vmatprep.mubr.f32.mxu0 0.0
    %552 = vmatmul.mubr.f32.gmra.mxu0 %v266
    %v553 = vpop.f32.mrf.mxu0
    %v554 = vadd.f32 %v139, %v553
    %v555 = vpop.f32.mrf.mxu0
    %v556 = vadd.f32 %v143, %v555
    %557 = vmatprep.mubr.f32.mxu0 0.0
    %558 = vmatmul.mubr.f32.gmra.mxu0 %v269
    %v559 = vpop.f32.mrf.mxu0
    %v560 = vadd.f32 %v139, %v559
    %v561 = vpop.f32.mrf.mxu0
    %v562 = vadd.f32 %v143, %v561
    %563 = vdwg.mxu0
    %564 = vmatprep.subr.mxu0 0.0
    %565 = vmatpush1.msra.mxu0 0.0
    %566 = vmatprep.subr.mxu0 0.0
    %567 = vmatpush1.msra.mxu0 0.0
    %568 = vmatprep.subr.mxu0 0.0
    %569 = vmatpush1.msra.mxu0 0.0
    %570 = vmatprep.subr.mxu0 0.0
    %571 = vmatpush1.msra.mxu0 0.0
    %572 = vmatprep.subr.mxu0 0.0
    %573 = vmatpush1.msra.mxu0 0.0
    %574 = vmatprep.subr.mxu0 0.0
    %575 = vmatpush1.msra.mxu0 0.0
    %576 = vmatprep.subr.mxu0 0.0
    %577 = vmatpush1.msra.mxu0 0.0
    %578 = vmatprep.subr.mxu0 0.0
    %579 = vmatpush1.msra.mxu0 0.0
    %580 = vmatprep.subr.mxu0 0.0
    %581 = vmatpush1.msra.mxu0 0.0
    %582 = vmatprep.subr.mxu0 0.0
    %583 = vmatpush1.msra.mxu0 0.0
    %584 = vmatprep.subr.mxu0 %v133
    %585 = vmatpush1.msra.mxu0 %v132
    %586 = vmatprep.subr.mxu0 %v129
    %587 = vmatpush1.msra.mxu0 %v128
    %588 = vmatprep.subr.mxu0 %v125
    %589 = vmatpush1.msra.mxu0 %v124
    %590 = vmatprep.subr.mxu0 %v121
    %591 = vmatpush1.msra.mxu0 %v120
    %592 = vmatprep.subr.mxu0 %v117
    %593 = vmatpush1.msra.mxu0 %v116
    %594 = vmatprep.subr.mxu0 %v113
    %595 = vmatpush1.msra.mxu0 %v112
    %596 = vmatprep.subr.mxu0 0.0
    %597 = vmatpush2.msra.mxu0 0.0
    %598 = vmatprep.subr.mxu0 0.0
    %599 = vmatpush2.msra.mxu0 0.0
    %600 = vmatprep.subr.mxu0 0.0
    %601 = vmatpush2.msra.mxu0 0.0
    %602 = vmatprep.subr.mxu0 0.0
    %603 = vmatpush2.msra.mxu0 0.0
    %604 = vmatprep.subr.mxu0 0.0
    %605 = vmatpush2.msra.mxu0 0.0
    %606 = vmatprep.subr.mxu0 0.0
    %607 = vmatpush2.msra.mxu0 0.0
    %608 = vmatprep.subr.mxu0 0.0
    %609 = vmatpush2.msra.mxu0 0.0
    %610 = vmatprep.subr.mxu0 0.0
    %611 = vmatpush2.msra.mxu0 0.0
    %612 = vmatprep.subr.mxu0 0.0
    %613 = vmatpush2.msra.mxu0 0.0
    %614 = vmatprep.subr.mxu0 0.0
    %615 = vmatpush2.msra.mxu0 0.0
    %616 = vmatprep.subr.mxu0 0.0
    %617 = vmatpush2.msra.mxu0 0.0
    %618 = vmatprep.subr.mxu0 0.0
    %619 = vmatpush2.msra.mxu0 0.0
    %620 = vmatprep.subr.mxu0 0.0
    %621 = vmatpush2.msra.mxu0 0.0
    %622 = vmatprep.subr.mxu0 0.0
    %623 = vmatpush2.msra.mxu0 0.0
    %624 = vmatprep.subr.mxu0 0.0
    %625 = vmatpush2.msra.mxu0 0.0
    %626 = vmatprep.subr.mxu0 0.0
    %627 = vmatpush2.msra.mxu0 0.0
    %628 = vmatprep.mubr.f32.mxu0 0.0
    %629 = vmatmul.mubr.f32.gmra.mxu0 %v158
    %v630 = vpop.f32.mrf.mxu0
    %v631 = vadd.f32 %v147, %v630
    %v632 = vpop.f32.mrf.mxu0
    %v633 = vadd.f32 %v151, %v632
    %634 = vmatprep.mubr.f32.mxu0 0.0
    %635 = vmatmul.mubr.f32.gmra.mxu0 %v161
    %v636 = vpop.f32.mrf.mxu0
    %v637 = vadd.f32 %v147, %v636
    %v638 = vpop.f32.mrf.mxu0
    %v639 = vadd.f32 %v151, %v638
    %640 = vmatprep.mubr.f32.mxu0 0.0
    %641 = vmatmul.mubr.f32.gmra.mxu0 %v164
    %v642 = vpop.f32.mrf.mxu0
    %v643 = vadd.f32 %v147, %v642
    %v644 = vpop.f32.mrf.mxu0
    %v645 = vadd.f32 %v151, %v644
    %646 = vmatprep.mubr.f32.mxu0 0.0
    %647 = vmatmul.mubr.f32.gmra.mxu0 %v167
    %v648 = vpop.f32.mrf.mxu0
    %v649 = vadd.f32 %v147, %v648
    %v650 = vpop.f32.mrf.mxu0
    %v651 = vadd.f32 %v151, %v650
    %652 = vmatprep.mubr.f32.mxu0 0.0
    %653 = vmatmul.mubr.f32.gmra.mxu0 %v170
    %v654 = vpop.f32.mrf.mxu0
    %v655 = vadd.f32 %v147, %v654
    %v656 = vpop.f32.mrf.mxu0
    %v657 = vadd.f32 %v151, %v656
    %658 = vmatprep.mubr.f32.mxu0 0.0
    %659 = vmatmul.mubr.f32.gmra.mxu0 %v173
    %v660 = vpop.f32.mrf.mxu0
    %v661 = vadd.f32 %v147, %v660
    %v662 = vpop.f32.mrf.mxu0
    %v663 = vadd.f32 %v151, %v662
    %664 = vmatprep.mubr.f32.mxu0 0.0
    %665 = vmatmul.mubr.f32.gmra.mxu0 %v176
    %v666 = vpop.f32.mrf.mxu0
    %v667 = vadd.f32 %v147, %v666
    %v668 = vpop.f32.mrf.mxu0
    %v669 = vadd.f32 %v151, %v668
    %670 = vmatprep.mubr.f32.mxu0 0.0
    %671 = vmatmul.mubr.f32.gmra.mxu0 %v179
    %v672 = vpop.f32.mrf.mxu0
    %v673 = vadd.f32 %v147, %v672
    %v674 = vpop.f32.mrf.mxu0
    %v675 = vadd.f32 %v151, %v674
    %676 = vmatprep.mubr.f32.mxu0 0.0
    %677 = vmatmul.mubr.f32.gmra.mxu0 %v182
    %v678 = vpop.f32.mrf.mxu0
    %v679 = vadd.f32 %v147, %v678
    %v680 = vpop.f32.mrf.mxu0
    %v681 = vadd.f32 %v151, %v680
    %682 = vmatprep.mubr.f32.mxu0 0.0
    %683 = vmatmul.mubr.f32.gmra.mxu0 %v185
    %v684 = vpop.f32.mrf.mxu0
    %v685 = vadd.f32 %v147, %v684
    %v686 = vpop.f32.mrf.mxu0
    %v687 = vadd.f32 %v151, %v686
    %688 = vmatprep.mubr.f32.mxu0 0.0
    %689 = vmatmul.mubr.f32.gmra.mxu0 %v188
    %v690 = vpop.f32.mrf.mxu0
    %v691 = vadd.f32 %v147, %v690
    %v692 = vpop.f32.mrf.mxu0
    %v693 = vadd.f32 %v151, %v692
    %694 = vmatprep.mubr.f32.mxu0 0.0
    %695 = vmatmul.mubr.f32.gmra.mxu0 %v191
    %v696 = vpop.f32.mrf.mxu0
    %v697 = vadd.f32 %v147, %v696
    %v698 = vpop.f32.mrf.mxu0
    %v699 = vadd.f32 %v151, %v698
    %700 = vmatprep.mubr.f32.mxu0 0.0
    %701 = vmatmul.mubr.f32.gmra.mxu0 %v194
    %v702 = vpop.f32.mrf.mxu0
    %v703 = vadd.f32 %v147, %v702
    %v704 = vpop.f32.mrf.mxu0
    %v705 = vadd.f32 %v151, %v704
    %706 = vmatprep.mubr.f32.mxu0 0.0
    %707 = vmatmul.mubr.f32.gmra.mxu0 %v197
    %v708 = vpop.f32.mrf.mxu0
    %v709 = vadd.f32 %v147, %v708
    %v710 = vpop.f32.mrf.mxu0
    %v711 = vadd.f32 %v151, %v710
    %712 = vmatprep.mubr.f32.mxu0 0.0
    %713 = vmatmul.mubr.f32.gmra.mxu0 %v200
    %v714 = vpop.f32.mrf.mxu0
    %v715 = vadd.f32 %v147, %v714
    %v716 = vpop.f32.mrf.mxu0
    %v717 = vadd.f32 %v151, %v716
    %718 = vmatprep.mubr.f32.mxu0 0.0
    %719 = vmatmul.mubr.f32.gmra.mxu0 %v203
    %v720 = vpop.f32.mrf.mxu0
    %v721 = vadd.f32 %v147, %v720
    %v722 = vpop.f32.mrf.mxu0
    %v723 = vadd.f32 %v151, %v722
    %724 = vmatprep.mubr.f32.mxu0 0.0
    %725 = vmatmul.mubr.f32.gmra.mxu0 %v206
    %v726 = vpop.f32.mrf.mxu0
    %v727 = vadd.f32 %v147, %v726
    %v728 = vpop.f32.mrf.mxu0
    %v729 = vadd.f32 %v151, %v728
    %730 = vmatprep.mubr.f32.mxu0 0.0
    %731 = vmatmul.mubr.f32.gmra.mxu0 %v209
    %v732 = vpop.f32.mrf.mxu0
    %v733 = vadd.f32 %v147, %v732
    %v734 = vpop.f32.mrf.mxu0
    %v735 = vadd.f32 %v151, %v734
    %736 = vmatprep.mubr.f32.mxu0 0.0
    %737 = vmatmul.mubr.f32.gmra.mxu0 %v212
    %v738 = vpop.f32.mrf.mxu0
    %v739 = vadd.f32 %v147, %v738
    %v740 = vpop.f32.mrf.mxu0
    %v741 = vadd.f32 %v151, %v740
    %742 = vmatprep.mubr.f32.mxu0 0.0
    %743 = vmatmul.mubr.f32.gmra.mxu0 %v215
    %v744 = vpop.f32.mrf.mxu0
    %v745 = vadd.f32 %v147, %v744
    %v746 = vpop.f32.mrf.mxu0
    %v747 = vadd.f32 %v151, %v746
    %748 = vmatprep.mubr.f32.mxu0 0.0
    %749 = vmatmul.mubr.f32.gmra.mxu0 %v218
    %v750 = vpop.f32.mrf.mxu0
    %v751 = vadd.f32 %v147, %v750
    %v752 = vpop.f32.mrf.mxu0
    %v753 = vadd.f32 %v151, %v752
    %754 = vmatprep.mubr.f32.mxu0 0.0
    %755 = vmatmul.mubr.f32.gmra.mxu0 %v221
    %v756 = vpop.f32.mrf.mxu0
    %v757 = vadd.f32 %v147, %v756
    %v758 = vpop.f32.mrf.mxu0
    %v759 = vadd.f32 %v151, %v758
    %760 = vmatprep.mubr.f32.mxu0 0.0
    %761 = vmatmul.mubr.f32.gmra.mxu0 %v224
    %v762 = vpop.f32.mrf.mxu0
    %v763 = vadd.f32 %v147, %v762
    %v764 = vpop.f32.mrf.mxu0
    %v765 = vadd.f32 %v151, %v764
    %766 = vmatprep.mubr.f32.mxu0 0.0
    %767 = vmatmul.mubr.f32.gmra.mxu0 %v227
    %v768 = vpop.f32.mrf.mxu0
    %v769 = vadd.f32 %v147, %v768
    %v770 = vpop.f32.mrf.mxu0
    %v771 = vadd.f32 %v151, %v770
    %772 = vmatprep.mubr.f32.mxu0 0.0
    %773 = vmatmul.mubr.f32.gmra.mxu0 %v230
    %v774 = vpop.f32.mrf.mxu0
    %v775 = vadd.f32 %v147, %v774
    %v776 = vpop.f32.mrf.mxu0
    %v777 = vadd.f32 %v151, %v776
    %778 = vmatprep.mubr.f32.mxu0 0.0
    %779 = vmatmul.mubr.f32.gmra.mxu0 %v233
    %v780 = vpop.f32.mrf.mxu0
    %v781 = vadd.f32 %v147, %v780
    %v782 = vpop.f32.mrf.mxu0
    %v783 = vadd.f32 %v151, %v782
    %784 = vmatprep.mubr.f32.mxu0 0.0
    %785 = vmatmul.mubr.f32.gmra.mxu0 %v236
    %v786 = vpop.f32.mrf.mxu0
    %v787 = vadd.f32 %v147, %v786
    %v788 = vpop.f32.mrf.mxu0
    %v789 = vadd.f32 %v151, %v788
    %790 = vmatprep.mubr.f32.mxu0 0.0
    %791 = vmatmul.mubr.f32.gmra.mxu0 %v239
    %v792 = vpop.f32.mrf.mxu0
    %v793 = vadd.f32 %v147, %v792
    %v794 = vpop.f32.mrf.mxu0
    %v795 = vadd.f32 %v151, %v794
    %796 = vmatprep.mubr.f32.mxu0 0.0
    %797 = vmatmul.mubr.f32.gmra.mxu0 %v242
    %v798 = vpop.f32.mrf.mxu0
    %v799 = vadd.f32 %v147, %v798
    %v800 = vpop.f32.mrf.mxu0
    %v801 = vadd.f32 %v151, %v800
    %802 = vmatprep.mubr.f32.mxu0 0.0
    %803 = vmatmul.mubr.f32.gmra.mxu0 %v245
    %v804 = vpop.f32.mrf.mxu0
    %v805 = vadd.f32 %v147, %v804
    %v806 = vpop.f32.mrf.mxu0
    %v807 = vadd.f32 %v151, %v806
    %808 = vmatprep.mubr.f32.mxu0 0.0
    %809 = vmatmul.mubr.f32.gmra.mxu0 %v248
    %v810 = vpop.f32.mrf.mxu0
    %v811 = vadd.f32 %v147, %v810
    %v812 = vpop.f32.mrf.mxu0
    %v813 = vadd.f32 %v151, %v812
    %814 = vmatprep.mubr.f32.mxu0 0.0
    %815 = vmatmul.mubr.f32.gmra.mxu0 %v251
    %v816 = vpop.f32.mrf.mxu0
    %v817 = vadd.f32 %v147, %v816
    %v818 = vpop.f32.mrf.mxu0
    %v819 = vadd.f32 %v151, %v818
    %820 = vmatprep.mubr.f32.mxu0 0.0
    %821 = vmatmul.mubr.f32.gmra.mxu0 %v254
    %v822 = vpop.f32.mrf.mxu0
    %v823 = vadd.f32 %v147, %v822
    %v824 = vpop.f32.mrf.mxu0
    %v825 = vadd.f32 %v151, %v824
    %826 = vmatprep.mubr.f32.mxu0 0.0
    %827 = vmatmul.mubr.f32.gmra.mxu0 %v257
    %v828 = vpop.f32.mrf.mxu0
    %v829 = vadd.f32 %v147, %v828
    %v830 = vpop.f32.mrf.mxu0
    %v831 = vadd.f32 %v151, %v830
    %832 = vmatprep.mubr.f32.mxu0 0.0
    %833 = vmatmul.mubr.f32.gmra.mxu0 %v260
    %v834 = vpop.f32.mrf.mxu0
    %v835 = vadd.f32 %v147, %v834
    %v836 = vpop.f32.mrf.mxu0
    %v837 = vadd.f32 %v151, %v836
    %838 = vmatprep.mubr.f32.mxu0 0.0
    %839 = vmatmul.mubr.f32.gmra.mxu0 %v263
    %v840 = vpop.f32.mrf.mxu0
    %v841 = vadd.f32 %v147, %v840
    %v842 = vpop.f32.mrf.mxu0
    %v843 = vadd.f32 %v151, %v842
    %844 = vmatprep.mubr.f32.mxu0 0.0
    %845 = vmatmul.mubr.f32.gmra.mxu0 %v266
    %v846 = vpop.f32.mrf.mxu0
    %v847 = vadd.f32 %v147, %v846
    %v848 = vpop.f32.mrf.mxu0
    %v849 = vadd.f32 %v151, %v848
    %850 = vmatprep.mubr.f32.mxu0 0.0
    %851 = vmatmul.mubr.f32.gmra.mxu0 %v269
    %v852 = vpop.f32.mrf.mxu0
    %v853 = vadd.f32 %v147, %v852
    %v854 = vpop.f32.mrf.mxu0
    %v855 = vadd.f32 %v151, %v854
    %856 = vdwg.mxu0
    %v857 = vmax.f32 %v338, 0.0
    %v858 = vmax.f32 %v340, 0.0
    %v859 = vmax.f32 %v631, 0.0
    %v860 = vmax.f32 %v633, 0.0
    %v861 = vmax.f32 %v344, 0.0
    %v862 = vmax.f32 %v346, 0.0
    %v863 = vmax.f32 %v637, 0.0
    %v864 = vmax.f32 %v639, 0.0
    %v865 = vmax.f32 %v350, 0.0
    %v866 = vmax.f32 %v352, 0.0
    %v867 = vmax.f32 %v643, 0.0
    %v868 = vmax.f32 %v645, 0.0
    %v869 = vmax.f32 %v356, 0.0
    %v870 = vmax.f32 %v358, 0.0
    %v871 = vmax.f32 %v649, 0.0
    %v872 = vmax.f32 %v651, 0.0
    %v873 = vmax.f32 %v362, 0.0
    %v874 = vmax.f32 %v364, 0.0
    %v875 = vmax.f32 %v655, 0.0
    %v876 = vmax.f32 %v657, 0.0
    %v877 = vmax.f32 %v368, 0.0
    %v878 = vmax.f32 %v370, 0.0
    %v879 = vmax.f32 %v661, 0.0
    %v880 = vmax.f32 %v663, 0.0
    %v881 = vmax.f32 %v374, 0.0
    %v882 = vmax.f32 %v376, 0.0
    %v883 = vmax.f32 %v667, 0.0
    %v884 = vmax.f32 %v669, 0.0
    %v885 = vmax.f32 %v380, 0.0
    %v886 = vmax.f32 %v382, 0.0
    %v887 = vmax.f32 %v673, 0.0
    %v888 = vmax.f32 %v675, 0.0
    %v889 = vmax.f32 %v386, 0.0
    %v890 = vmax.f32 %v388, 0.0
    %v891 = vmax.f32 %v679, 0.0
    %v892 = vmax.f32 %v681, 0.0
    %v893 = vmax.f32 %v392, 0.0
    %v894 = vmax.f32 %v394, 0.0
    %v895 = vmax.f32 %v685, 0.0
    %v896 = vmax.f32 %v687, 0.0
    %v897 = vmax.f32 %v398, 0.0
    %v898 = vmax.f32 %v400, 0.0
    %v899 = vmax.f32 %v691, 0.0
    %v900 = vmax.f32 %v693, 0.0
    %v901 = vmax.f32 %v404, 0.0
    %v902 = vmax.f32 %v406, 0.0
    %v903 = vmax.f32 %v697, 0.0
    %v904 = vmax.f32 %v699, 0.0
    %v905 = vmax.f32 %v410, 0.0
    %v906 = vmax.f32 %v412, 0.0
    %v907 = vmax.f32 %v703, 0.0
    %v908 = vmax.f32 %v705, 0.0
    %v909 = vmax.f32 %v416, 0.0
    %v910 = vmax.f32 %v418, 0.0
    %v911 = vmax.f32 %v709, 0.0
    %v912 = vmax.f32 %v711, 0.0
    %v913 = vmax.f32 %v422, 0.0
    %v914 = vmax.f32 %v424, 0.0
    %v915 = vmax.f32 %v715, 0.0
    %v916 = vmax.f32 %v717, 0.0
    %v917 = vmax.f32 %v428, 0.0
    %v918 = vmax.f32 %v430, 0.0
    %v919 = vmax.f32 %v721, 0.0
    %v920 = vmax.f32 %v723, 0.0
    %v921 = vmax.f32 %v434, 0.0
    %v922 = vmax.f32 %v436, 0.0
    %v923 = vmax.f32 %v727, 0.0
    %v924 = vmax.f32 %v729, 0.0
    %v925 = vmax.f32 %v440, 0.0
    %v926 = vmax.f32 %v442, 0.0
    %v927 = vmax.f32 %v733, 0.0
    %v928 = vmax.f32 %v735, 0.0
    %v929 = vmax.f32 %v446, 0.0
    %v930 = vmax.f32 %v448, 0.0
    %v931 = vmax.f32 %v739, 0.0
    %v932 = vmax.f32 %v741, 0.0
    %v933 = vmax.f32 %v452, 0.0
    %v934 = vmax.f32 %v454, 0.0
    %v935 = vmax.f32 %v745, 0.0
    %v936 = vmax.f32 %v747, 0.0
    %v937 = vmax.f32 %v458, 0.0
    %v938 = vmax.f32 %v460, 0.0
    %v939 = vmax.f32 %v751, 0.0
    %v940 = vmax.f32 %v753, 0.0
    %v941 = vmax.f32 %v464, 0.0
    %v942 = vmax.f32 %v466, 0.0
    %v943 = vmax.f32 %v757, 0.0
    %v944 = vmax.f32 %v759, 0.0
    %v945 = vmax.f32 %v470, 0.0
    %v946 = vmax.f32 %v472, 0.0
    %v947 = vmax.f32 %v763, 0.0
    %v948 = vmax.f32 %v765, 0.0
    %v949 = vmax.f32 %v476, 0.0
    %v950 = vmax.f32 %v478, 0.0
    %v951 = vmax.f32 %v769, 0.0
    %v952 = vmax.f32 %v771, 0.0
    %v953 = vmax.f32 %v482, 0.0
    %v954 = vmax.f32 %v484, 0.0
    %v955 = vmax.f32 %v775, 0.0
    %v956 = vmax.f32 %v777, 0.0
    %v957 = vmax.f32 %v488, 0.0
    %v958 = vmax.f32 %v490, 0.0
    %v959 = vmax.f32 %v781, 0.0
    %v960 = vmax.f32 %v783, 0.0
    %v961 = vmax.f32 %v494, 0.0
    %v962 = vmax.f32 %v496, 0.0
    %v963 = vmax.f32 %v787, 0.0
    %v964 = vmax.f32 %v789, 0.0
    %v965 = vmax.f32 %v500, 0.0
    %v966 = vmax.f32 %v502, 0.0
    %v967 = vmax.f32 %v793, 0.0
    %v968 = vmax.f32 %v795, 0.0
    %v969 = vmax.f32 %v506, 0.0
    %v970 = vmax.f32 %v508, 0.0
    %v971 = vmax.f32 %v799, 0.0
    %v972 = vmax.f32 %v801, 0.0
    %v973 = vmax.f32 %v512, 0.0
    %v974 = vmax.f32 %v514, 0.0
    %v975 = vmax.f32 %v805, 0.0
    %v976 = vmax.f32 %v807, 0.0
    %v977 = vmax.f32 %v518, 0.0
    %v978 = vmax.f32 %v520, 0.0
    %v979 = vmax.f32 %v811, 0.0
    %v980 = vmax.f32 %v813, 0.0
    %v981 = vmax.f32 %v524, 0.0
    %v982 = vmax.f32 %v526, 0.0
    %v983 = vmax.f32 %v817, 0.0
    %v984 = vmax.f32 %v819, 0.0
    %v985 = vmax.f32 %v530, 0.0
    %v986 = vmax.f32 %v532, 0.0
    %v987 = vmax.f32 %v823, 0.0
    %v988 = vmax.f32 %v825, 0.0
    %v989 = vmax.f32 %v536, 0.0
    %v990 = vmax.f32 %v538, 0.0
    %v991 = vmax.f32 %v829, 0.0
    %v992 = vmax.f32 %v831, 0.0
    %v993 = vmax.f32 %v542, 0.0
    %v994 = vmax.f32 %v544, 0.0
    %v995 = vmax.f32 %v835, 0.0
    %v996 = vmax.f32 %v837, 0.0
    %v997 = vmax.f32 %v548, 0.0
    %v998 = vmax.f32 %v550, 0.0
    %v999 = vmax.f32 %v841, 0.0
    %v1000 = vmax.f32 %v843, 0.0
    %v1001 = vmax.f32 %v554, 0.0
    %v1002 = vmax.f32 %v556, 0.0
    %v1003 = vmax.f32 %v847, 0.0
    %v1004 = vmax.f32 %v849, 0.0
    %v1005 = vmax.f32 %v560, 0.0
    %v1006 = vmax.f32 %v562, 0.0
    %v1007 = vmax.f32 %v853, 0.0
    %v1008 = vmax.f32 %v855, 0.0
    %v1009 = vld [vmem:[%s3] sm:$0xff]
    %v1010 = vld [vmem:[%s3 + $0x8] sm:$0xff]
    %v1011 = vld [vmem:[%s3 + $0x10] sm:$0xff]
    %v1012 = vld [vmem:[%s3 + $0x18] sm:$0xff]
    %v1013 = vld [vmem:[%s3 + $0x20] sm:$0xff]
    %v1014 = vld [vmem:[%s3 + $0x28] sm:$0xff]
    %v1015 = vld [vmem:[%s3 + $0x30] sm:$0xff]
    %v1016 = vld [vmem:[%s3 + $0x38] sm:$0xff]
    %v1017 = vld [vmem:[%s3 + $0x40] sm:$0xff]
    %v1018 = vld [vmem:[%s3 + $0x48] sm:$0xff]
    %v1019 = vld [vmem:[%s3 + $0x50] sm:$0xff]
    %v1020 = vld [vmem:[%s3 + $0x58] sm:$0xff]
    %v1021 = vld [vmem:[%s3 + $0x60] sm:$0xff]
    %v1022 = vld [vmem:[%s3 + $0x68] sm:$0xff]
    %v1023 = vld [vmem:[%s3 + $0x70] sm:$0xff]
    %v1024 = vld [vmem:[%s3 + $0x78] sm:$0xff]
    %v1025 = vld [vmem:[%s3 + $0x80] sm:$0xff]
    %v1026 = vld [vmem:[%s3 + $0x88] sm:$0xff]
    %v1027 = vld [vmem:[%s3 + $0x90] sm:$0xff]
    %v1028 = vld [vmem:[%s3 + $0x98] sm:$0xff]
    %v1029 = vld [vmem:[%s3 + $0xa0] sm:$0xff]
    %v1030 = vld [vmem:[%s3 + $0xa8] sm:$0xff]
    %v1031 = vld [vmem:[%s3 + $0xb0] sm:$0xff]
    %v1032 = vld [vmem:[%s3 + $0xb8] sm:$0xff]
    %v1033 = vld [vmem:[%s3 + $0xc0] sm:$0xff]
    %v1034 = vld [vmem:[%s3 + $0xc8] sm:$0xff]
    %v1035 = vld [vmem:[%s3 + $0xd0] sm:$0xff]
    %v1036 = vld [vmem:[%s3 + $0xd8] sm:$0xff]
    %v1037 = vld [vmem:[%s3 + $0xe0] sm:$0xff]
    %v1038 = vld [vmem:[%s3 + $0xe8] sm:$0xff]
    %v1039 = vld [vmem:[%s3 + $0xf0] sm:$0xff]
    %v1040 = vld [vmem:[%s3 + $0xf8] sm:$0xff]
    %v1041 = vld [vmem:[%s3 + $0x100] sm:$0xff]
    %v1042 = vld [vmem:[%s3 + $0x108] sm:$0xff]
    %v1043 = vld [vmem:[%s3 + $0x110] sm:$0xff]
    %v1044 = vld [vmem:[%s3 + $0x118] sm:$0xff]
    %v1045 = vld [vmem:[%s3 + $0x120] sm:$0xff]
    %v1046 = vld [vmem:[%s3 + $0x128] sm:$0xff]
    %v1047 = vld [vmem:[%s3 + $0x130] sm:$0xff]
    %v1048 = vld [vmem:[%s3 + $0x138] sm:$0xff]
    %v1049 = vld [vmem:[%s3 + $0x140] sm:$0xff]
    %v1050 = vld [vmem:[%s3 + $0x148] sm:$0xff]
    %v1051 = vld [vmem:[%s3 + $0x150] sm:$0xff]
    %v1052 = vld [vmem:[%s3 + $0x158] sm:$0xff]
    %v1053 = vld [vmem:[%s3 + $0x160] sm:$0xff]
    %v1054 = vld [vmem:[%s3 + $0x168] sm:$0xff]
    %v1055 = vld [vmem:[%s3 + $0x170] sm:$0xff]
    %v1056 = vld [vmem:[%s3 + $0x178] sm:$0xff]
    %v1057 = vld [vmem:[%s3 + $0x180] sm:$0xff]
    %v1058 = vld [vmem:[%s3 + $0x188] sm:$0xff]
    %v1059 = vld [vmem:[%s3 + $0x190] sm:$0xff]
    %v1060 = vld [vmem:[%s3 + $0x198] sm:$0xff]
    %v1061 = vld [vmem:[%s3 + $0x1a0] sm:$0xff]
    %v1062 = vld [vmem:[%s3 + $0x1a8] sm:$0xff]
    %v1063 = vld [vmem:[%s3 + $0x1b0] sm:$0xff]
    %v1064 = vld [vmem:[%s3 + $0x1b8] sm:$0xff]
    %v1065 = vld [vmem:[%s3 + $0x1c0] sm:$0xff]
    %v1066 = vld [vmem:[%s3 + $0x1c8] sm:$0xff]
    %v1067 = vld [vmem:[%s3 + $0x1d0] sm:$0xff]
    %v1068 = vld [vmem:[%s3 + $0x1d8] sm:$0xff]
    %v1069 = vld [vmem:[%s3 + $0x1e0] sm:$0xff]
    %v1070 = vld [vmem:[%s3 + $0x1e8] sm:$0xff]
    %v1071 = vld [vmem:[%s3 + $0x1f0] sm:$0xff]
    %v1072 = vld [vmem:[%s3 + $0x1f8] sm:$0xff]
    %v1073 = vld [vmem:[%s3 + $0x200] sm:$0xff]
    %v1074 = vld [vmem:[%s3 + $0x208] sm:$0xff]
    %v1075 = vld [vmem:[%s3 + $0x210] sm:$0xff]
    %v1076 = vld [vmem:[%s3 + $0x218] sm:$0xff]
    %v1077 = vld [vmem:[%s3 + $0x220] sm:$0xff]
    %v1078 = vld [vmem:[%s3 + $0x228] sm:$0xff]
    %v1079 = vld [vmem:[%s3 + $0x230] sm:$0xff]
    %v1080 = vld [vmem:[%s3 + $0x238] sm:$0xff]
    %v1081 = vld [vmem:[%s3 + $0x240] sm:$0xff]
    %v1082 = vld [vmem:[%s3 + $0x248] sm:$0xff]
    %v1083 = vld [vmem:[%s3 + $0x250] sm:$0xff]
    %v1084 = vld [vmem:[%s3 + $0x258] sm:$0xff]
    %v1085 = vld [vmem:[%s3 + $0x260] sm:$0xff]
    %v1086 = vld [vmem:[%s3 + $0x268] sm:$0xff]
    %v1087 = vld [vmem:[%s3 + $0x270] sm:$0xff]
    %v1088 = vld [vmem:[%s3 + $0x278] sm:$0xff]
    %v1089 = vld [vmem:[%s3 + $0x280] sm:$0xff]
    %v1090 = vld [vmem:[%s3 + $0x288] sm:$0xff]
    %v1091 = vld [vmem:[%s3 + $0x290] sm:$0xff]
    %v1092 = vld [vmem:[%s3 + $0x298] sm:$0xff]
    %v1093 = vld [vmem:[%s3 + $0x2a0] sm:$0xff]
    %v1094 = vld [vmem:[%s3 + $0x2a8] sm:$0xff]
    %v1095 = vld [vmem:[%s3 + $0x2b0] sm:$0xff]
    %v1096 = vld [vmem:[%s3 + $0x2b8] sm:$0xff]
    %v1097 = vld [vmem:[%s3 + $0x2c0] sm:$0xff]
    %v1098 = vld [vmem:[%s3 + $0x2c8] sm:$0xff]
    %v1099 = vld [vmem:[%s3 + $0x2d0] sm:$0xff]
    %v1100 = vld [vmem:[%s3 + $0x2d8] sm:$0xff]
    %v1101 = vld [vmem:[%s3 + $0x2e0] sm:$0xff]
    %v1102 = vld [vmem:[%s3 + $0x2e8] sm:$0xff]
    %v1103 = vld [vmem:[%s3 + $0x2f0] sm:$0xff]
    %v1104 = vld [vmem:[%s3 + $0x2f8] sm:$0xff]
    %v1105 = vld [vmem:[%s3 + $0x300] sm:$0xff]
    %v1106 = vld [vmem:[%s3 + $0x308] sm:$0xff]
    %v1107 = vld [vmem:[%s3 + $0x310] sm:$0xff]
    %v1108 = vld [vmem:[%s3 + $0x318] sm:$0xff]
    %v1109 = vld [vmem:[%s3 + $0x320] sm:$0xff]
    %v1110 = vld [vmem:[%s3 + $0x328] sm:$0xff]
    %v1111 = vld [vmem:[%s3 + $0x330] sm:$0xff]
    %v1112 = vld [vmem:[%s3 + $0x338] sm:$0xff]
    %v1113 = vld [vmem:[%s3 + $0x340] sm:$0xff]
    %v1114 = vld [vmem:[%s3 + $0x348] sm:$0xff]
    %v1115 = vld [vmem:[%s3 + $0x350] sm:$0xff]
    %v1116 = vld [vmem:[%s3 + $0x358] sm:$0xff]
    %v1117 = vld [vmem:[%s3 + $0x360] sm:$0xff]
    %v1118 = vld [vmem:[%s3 + $0x368] sm:$0xff]
    %v1119 = vld [vmem:[%s3 + $0x370] sm:$0xff]
    %v1120 = vld [vmem:[%s3 + $0x378] sm:$0xff]
    %v1121 = vld [vmem:[%s3 + $0x380] sm:$0xff]
    %v1122 = vld [vmem:[%s3 + $0x388] sm:$0xff]
    %v1123 = vld [vmem:[%s3 + $0x390] sm:$0xff]
    %v1124 = vld [vmem:[%s3 + $0x398] sm:$0xff]
    %v1125 = vld [vmem:[%s3 + $0x3a0] sm:$0xff]
    %v1126 = vld [vmem:[%s3 + $0x3a8] sm:$0xff]
    %v1127 = vld [vmem:[%s3 + $0x3b0] sm:$0xff]
    %v1128 = vld [vmem:[%s3 + $0x3b8] sm:$0xff]
    %v1129 = vld [vmem:[%s3 + $0x3c0] sm:$0xff]
    %v1130 = vld [vmem:[%s3 + $0x3c8] sm:$0xff]
    %v1131 = vld [vmem:[%s3 + $0x3d0] sm:$0xff]
    %v1132 = vld [vmem:[%s3 + $0x3d8] sm:$0xff]
    %v1133 = vld [vmem:[%s3 + $0x3e0] sm:$0xff]
    %v1134 = vld [vmem:[%s3 + $0x3e8] sm:$0xff]
    %v1135 = vld [vmem:[%s3 + $0x3f0] sm:$0xff]
    %v1136 = vld [vmem:[%s3 + $0x3f8] sm:$0xff]
    %v1137 = vld [vmem:[%s4] sm:$0x3]
    %v1139 = vlaneseq
    %v1140 = vshrl.u32 %v1139, 7
    %v1141 = vsub.s32 0, %v1140
    %v1142 = vrot.slane %v1137, %v1141
    %v1143 = vlaneseq
    %v1144 = vshrl.u32 %v1143, 7
    %v1145 = vsub.s32 1, %v1144
    %v1146 = vrot.slane %v1137, %v1145
    %1149 = vmatprep.subr.mxu0 %v1040
    %1150 = vmatpush1.msra.mxu0 %v1039
    %1151 = vmatprep.subr.mxu0 %v1038
    %1152 = vmatpush1.msra.mxu0 %v1037
    %1153 = vmatprep.subr.mxu0 %v1036
    %1154 = vmatpush1.msra.mxu0 %v1035
    %1155 = vmatprep.subr.mxu0 %v1034
    %1156 = vmatpush1.msra.mxu0 %v1033
    %1157 = vmatprep.subr.mxu0 %v1032
    %1158 = vmatpush1.msra.mxu0 %v1031
    %1159 = vmatprep.subr.mxu0 %v1030
    %1160 = vmatpush1.msra.mxu0 %v1029
    %1161 = vmatprep.subr.mxu0 %v1028
    %1162 = vmatpush1.msra.mxu0 %v1027
    %1163 = vmatprep.subr.mxu0 %v1026
    %1164 = vmatpush1.msra.mxu0 %v1025
    %1165 = vmatprep.subr.mxu0 %v1024
    %1166 = vmatpush1.msra.mxu0 %v1023
    %1167 = vmatprep.subr.mxu0 %v1022
    %1168 = vmatpush1.msra.mxu0 %v1021
    %1169 = vmatprep.subr.mxu0 %v1020
    %1170 = vmatpush1.msra.mxu0 %v1019
    %1171 = vmatprep.subr.mxu0 %v1018
    %1172 = vmatpush1.msra.mxu0 %v1017
    %1173 = vmatprep.subr.mxu0 %v1016
    %1174 = vmatpush1.msra.mxu0 %v1015
    %1175 = vmatprep.subr.mxu0 %v1014
    %1176 = vmatpush1.msra.mxu0 %v1013
    %1177 = vmatprep.subr.mxu0 %v1012
    %1178 = vmatpush1.msra.mxu0 %v1011
    %1179 = vmatprep.subr.mxu0 %v1010
    %1180 = vmatpush1.msra.mxu0 %v1009
    %1181 = vmatprep.subr.mxu0 %v1072
    %1182 = vmatpush2.msra.mxu0 %v1071
    %1183 = vmatprep.subr.mxu0 %v1070
    %1184 = vmatpush2.msra.mxu0 %v1069
    %1185 = vmatprep.subr.mxu0 %v1068
    %1186 = vmatpush2.msra.mxu0 %v1067
    %1187 = vmatprep.subr.mxu0 %v1066
    %1188 = vmatpush2.msra.mxu0 %v1065
    %1189 = vmatprep.subr.mxu0 %v1064
    %1190 = vmatpush2.msra.mxu0 %v1063
    %1191 = vmatprep.subr.mxu0 %v1062
    %1192 = vmatpush2.msra.mxu0 %v1061
    %1193 = vmatprep.subr.mxu0 %v1060
    %1194 = vmatpush2.msra.mxu0 %v1059
    %1195 = vmatprep.subr.mxu0 %v1058
    %1196 = vmatpush2.msra.mxu0 %v1057
    %1197 = vmatprep.subr.mxu0 %v1056
    %1198 = vmatpush2.msra.mxu0 %v1055
    %1199 = vmatprep.subr.mxu0 %v1054
    %1200 = vmatpush2.msra.mxu0 %v1053
    %1201 = vmatprep.subr.mxu0 %v1052
    %1202 = vmatpush2.msra.mxu0 %v1051
    %1203 = vmatprep.subr.mxu0 %v1050
    %1204 = vmatpush2.msra.mxu0 %v1049
    %1205 = vmatprep.subr.mxu0 %v1048
    %1206 = vmatpush2.msra.mxu0 %v1047
    %1207 = vmatprep.subr.mxu0 %v1046
    %1208 = vmatpush2.msra.mxu0 %v1045
    %1209 = vmatprep.subr.mxu0 %v1044
    %1210 = vmatpush2.msra.mxu0 %v1043
    %1211 = vmatprep.subr.mxu0 %v1042
    %1212 = vmatpush2.msra.mxu0 %v1041
    %1213 = vmatprep.mubr.f32.mxu0 %v858
    %1214 = vmatmul.mubr.f32.gmra.mxu0 %v857
    %v1215 = vpop.f32.mrf.mxu0
    %v1216 = vadd.f32 %v1142, %v1215
    %v1217 = vpop.f32.mrf.mxu0
    %v1218 = vadd.f32 %v1146, %v1217
    %1219 = vmatprep.mubr.f32.mxu0 %v862
    %1220 = vmatmul.mubr.f32.gmra.mxu0 %v861
    %v1221 = vpop.f32.mrf.mxu0
    %v1222 = vadd.f32 %v1142, %v1221
    %v1223 = vpop.f32.mrf.mxu0
    %v1224 = vadd.f32 %v1146, %v1223
    %1225 = vmatprep.mubr.f32.mxu0 %v866
    %1226 = vmatmul.mubr.f32.gmra.mxu0 %v865
    %v1227 = vpop.f32.mrf.mxu0
    %v1228 = vadd.f32 %v1142, %v1227
    %v1229 = vpop.f32.mrf.mxu0
    %v1230 = vadd.f32 %v1146, %v1229
    %1231 = vmatprep.mubr.f32.mxu0 %v870
    %1232 = vmatmul.mubr.f32.gmra.mxu0 %v869
    %v1233 = vpop.f32.mrf.mxu0
    %v1234 = vadd.f32 %v1142, %v1233
    %v1235 = vpop.f32.mrf.mxu0
    %v1236 = vadd.f32 %v1146, %v1235
    %1237 = vmatprep.mubr.f32.mxu0 %v874
    %1238 = vmatmul.mubr.f32.gmra.mxu0 %v873
    %v1239 = vpop.f32.mrf.mxu0
    %v1240 = vadd.f32 %v1142, %v1239
    %v1241 = vpop.f32.mrf.mxu0
    %v1242 = vadd.f32 %v1146, %v1241
    %1243 = vmatprep.mubr.f32.mxu0 %v878
    %1244 = vmatmul.mubr.f32.gmra.mxu0 %v877
    %v1245 = vpop.f32.mrf.mxu0
    %v1246 = vadd.f32 %v1142, %v1245
    %v1247 = vpop.f32.mrf.mxu0
    %v1248 = vadd.f32 %v1146, %v1247
    %1249 = vmatprep.mubr.f32.mxu0 %v882
    %1250 = vmatmul.mubr.f32.gmra.mxu0 %v881
    %v1251 = vpop.f32.mrf.mxu0
    %v1252 = vadd.f32 %v1142, %v1251
    %v1253 = vpop.f32.mrf.mxu0
    %v1254 = vadd.f32 %v1146, %v1253
    %1255 = vmatprep.mubr.f32.mxu0 %v886
    %1256 = vmatmul.mubr.f32.gmra.mxu0 %v885
    %v1257 = vpop.f32.mrf.mxu0
    %v1258 = vadd.f32 %v1142, %v1257
    %v1259 = vpop.f32.mrf.mxu0
    %v1260 = vadd.f32 %v1146, %v1259
    %1261 = vmatprep.mubr.f32.mxu0 %v890
    %1262 = vmatmul.mubr.f32.gmra.mxu0 %v889
    %v1263 = vpop.f32.mrf.mxu0
    %v1264 = vadd.f32 %v1142, %v1263
    %v1265 = vpop.f32.mrf.mxu0
    %v1266 = vadd.f32 %v1146, %v1265
    %1267 = vmatprep.mubr.f32.mxu0 %v894
    %1268 = vmatmul.mubr.f32.gmra.mxu0 %v893
    %v1269 = vpop.f32.mrf.mxu0
    %v1270 = vadd.f32 %v1142, %v1269
    %v1271 = vpop.f32.mrf.mxu0
    %v1272 = vadd.f32 %v1146, %v1271
    %1273 = vmatprep.mubr.f32.mxu0 %v898
    %1274 = vmatmul.mubr.f32.gmra.mxu0 %v897
    %v1275 = vpop.f32.mrf.mxu0
    %v1276 = vadd.f32 %v1142, %v1275
    %v1277 = vpop.f32.mrf.mxu0
    %v1278 = vadd.f32 %v1146, %v1277
    %1279 = vmatprep.mubr.f32.mxu0 %v902
    %1280 = vmatmul.mubr.f32.gmra.mxu0 %v901
    %v1281 = vpop.f32.mrf.mxu0
    %v1282 = vadd.f32 %v1142, %v1281
    %v1283 = vpop.f32.mrf.mxu0
    %v1284 = vadd.f32 %v1146, %v1283
    %1285 = vmatprep.mubr.f32.mxu0 %v906
    %1286 = vmatmul.mubr.f32.gmra.mxu0 %v905
    %v1287 = vpop.f32.mrf.mxu0
    %v1288 = vadd.f32 %v1142, %v1287
    %v1289 = vpop.f32.mrf.mxu0
    %v1290 = vadd.f32 %v1146, %v1289
    %1291 = vmatprep.mubr.f32.mxu0 %v910
    %1292 = vmatmul.mubr.f32.gmra.mxu0 %v909
    %v1293 = vpop.f32.mrf.mxu0
    %v1294 = vadd.f32 %v1142, %v1293
    %v1295 = vpop.f32.mrf.mxu0
    %v1296 = vadd.f32 %v1146, %v1295
    %1297 = vmatprep.mubr.f32.mxu0 %v914
    %1298 = vmatmul.mubr.f32.gmra.mxu0 %v913
    %v1299 = vpop.f32.mrf.mxu0
    %v1300 = vadd.f32 %v1142, %v1299
    %v1301 = vpop.f32.mrf.mxu0
    %v1302 = vadd.f32 %v1146, %v1301
    %1303 = vmatprep.mubr.f32.mxu0 %v918
    %1304 = vmatmul.mubr.f32.gmra.mxu0 %v917
    %v1305 = vpop.f32.mrf.mxu0
    %v1306 = vadd.f32 %v1142, %v1305
    %v1307 = vpop.f32.mrf.mxu0
    %v1308 = vadd.f32 %v1146, %v1307
    %1309 = vmatprep.mubr.f32.mxu0 %v922
    %1310 = vmatmul.mubr.f32.gmra.mxu0 %v921
    %v1311 = vpop.f32.mrf.mxu0
    %v1312 = vadd.f32 %v1142, %v1311
    %v1313 = vpop.f32.mrf.mxu0
    %v1314 = vadd.f32 %v1146, %v1313
    %1315 = vmatprep.mubr.f32.mxu0 %v926
    %1316 = vmatmul.mubr.f32.gmra.mxu0 %v925
    %v1317 = vpop.f32.mrf.mxu0
    %v1318 = vadd.f32 %v1142, %v1317
    %v1319 = vpop.f32.mrf.mxu0
    %v1320 = vadd.f32 %v1146, %v1319
    %1321 = vmatprep.mubr.f32.mxu0 %v930
    %1322 = vmatmul.mubr.f32.gmra.mxu0 %v929
    %v1323 = vpop.f32.mrf.mxu0
    %v1324 = vadd.f32 %v1142, %v1323
    %v1325 = vpop.f32.mrf.mxu0
    %v1326 = vadd.f32 %v1146, %v1325
    %1327 = vmatprep.mubr.f32.mxu0 %v934
    %1328 = vmatmul.mubr.f32.gmra.mxu0 %v933
    %v1329 = vpop.f32.mrf.mxu0
    %v1330 = vadd.f32 %v1142, %v1329
    %v1331 = vpop.f32.mrf.mxu0
    %v1332 = vadd.f32 %v1146, %v1331
    %1333 = vmatprep.mubr.f32.mxu0 %v938
    %1334 = vmatmul.mubr.f32.gmra.mxu0 %v937
    %v1335 = vpop.f32.mrf.mxu0
    %v1336 = vadd.f32 %v1142, %v1335
    %v1337 = vpop.f32.mrf.mxu0
    %v1338 = vadd.f32 %v1146, %v1337
    %1339 = vmatprep.mubr.f32.mxu0 %v942
    %1340 = vmatmul.mubr.f32.gmra.mxu0 %v941
    %v1341 = vpop.f32.mrf.mxu0
    %v1342 = vadd.f32 %v1142, %v1341
    %v1343 = vpop.f32.mrf.mxu0
    %v1344 = vadd.f32 %v1146, %v1343
    %1345 = vmatprep.mubr.f32.mxu0 %v946
    %1346 = vmatmul.mubr.f32.gmra.mxu0 %v945
    %v1347 = vpop.f32.mrf.mxu0
    %v1348 = vadd.f32 %v1142, %v1347
    %v1349 = vpop.f32.mrf.mxu0
    %v1350 = vadd.f32 %v1146, %v1349
    %1351 = vmatprep.mubr.f32.mxu0 %v950
    %1352 = vmatmul.mubr.f32.gmra.mxu0 %v949
    %v1353 = vpop.f32.mrf.mxu0
    %v1354 = vadd.f32 %v1142, %v1353
    %v1355 = vpop.f32.mrf.mxu0
    %v1356 = vadd.f32 %v1146, %v1355
    %1357 = vmatprep.mubr.f32.mxu0 %v954
    %1358 = vmatmul.mubr.f32.gmra.mxu0 %v953
    %v1359 = vpop.f32.mrf.mxu0
    %v1360 = vadd.f32 %v1142, %v1359
    %v1361 = vpop.f32.mrf.mxu0
    %v1362 = vadd.f32 %v1146, %v1361
    %1363 = vmatprep.mubr.f32.mxu0 %v958
    %1364 = vmatmul.mubr.f32.gmra.mxu0 %v957
    %v1365 = vpop.f32.mrf.mxu0
    %v1366 = vadd.f32 %v1142, %v1365
    %v1367 = vpop.f32.mrf.mxu0
    %v1368 = vadd.f32 %v1146, %v1367
    %1369 = vmatprep.mubr.f32.mxu0 %v962
    %1370 = vmatmul.mubr.f32.gmra.mxu0 %v961
    %v1371 = vpop.f32.mrf.mxu0
    %v1372 = vadd.f32 %v1142, %v1371
    %v1373 = vpop.f32.mrf.mxu0
    %v1374 = vadd.f32 %v1146, %v1373
    %1375 = vmatprep.mubr.f32.mxu0 %v966
    %1376 = vmatmul.mubr.f32.gmra.mxu0 %v965
    %v1377 = vpop.f32.mrf.mxu0
    %v1378 = vadd.f32 %v1142, %v1377
    %v1379 = vpop.f32.mrf.mxu0
    %v1380 = vadd.f32 %v1146, %v1379
    %1381 = vmatprep.mubr.f32.mxu0 %v970
    %1382 = vmatmul.mubr.f32.gmra.mxu0 %v969
    %v1383 = vpop.f32.mrf.mxu0
    %v1384 = vadd.f32 %v1142, %v1383
    %v1385 = vpop.f32.mrf.mxu0
    %v1386 = vadd.f32 %v1146, %v1385
    %1387 = vmatprep.mubr.f32.mxu0 %v974
    %1388 = vmatmul.mubr.f32.gmra.mxu0 %v973
    %v1389 = vpop.f32.mrf.mxu0
    %v1390 = vadd.f32 %v1142, %v1389
    %v1391 = vpop.f32.mrf.mxu0
    %v1392 = vadd.f32 %v1146, %v1391
    %1393 = vmatprep.mubr.f32.mxu0 %v978
    %1394 = vmatmul.mubr.f32.gmra.mxu0 %v977
    %v1395 = vpop.f32.mrf.mxu0
    %v1396 = vadd.f32 %v1142, %v1395
    %v1397 = vpop.f32.mrf.mxu0
    %v1398 = vadd.f32 %v1146, %v1397
    %1399 = vmatprep.mubr.f32.mxu0 %v982
    %1400 = vmatmul.mubr.f32.gmra.mxu0 %v981
    %v1401 = vpop.f32.mrf.mxu0
    %v1402 = vadd.f32 %v1142, %v1401
    %v1403 = vpop.f32.mrf.mxu0
    %v1404 = vadd.f32 %v1146, %v1403
    %1405 = vmatprep.mubr.f32.mxu0 %v986
    %1406 = vmatmul.mubr.f32.gmra.mxu0 %v985
    %v1407 = vpop.f32.mrf.mxu0
    %v1408 = vadd.f32 %v1142, %v1407
    %v1409 = vpop.f32.mrf.mxu0
    %v1410 = vadd.f32 %v1146, %v1409
    %1411 = vmatprep.mubr.f32.mxu0 %v990
    %1412 = vmatmul.mubr.f32.gmra.mxu0 %v989
    %v1413 = vpop.f32.mrf.mxu0
    %v1414 = vadd.f32 %v1142, %v1413
    %v1415 = vpop.f32.mrf.mxu0
    %v1416 = vadd.f32 %v1146, %v1415
    %1417 = vmatprep.mubr.f32.mxu0 %v994
    %1418 = vmatmul.mubr.f32.gmra.mxu0 %v993
    %v1419 = vpop.f32.mrf.mxu0
    %v1420 = vadd.f32 %v1142, %v1419
    %v1421 = vpop.f32.mrf.mxu0
    %v1422 = vadd.f32 %v1146, %v1421
    %1423 = vmatprep.mubr.f32.mxu0 %v998
    %1424 = vmatmul.mubr.f32.gmra.mxu0 %v997
    %v1425 = vpop.f32.mrf.mxu0
    %v1426 = vadd.f32 %v1142, %v1425
    %v1427 = vpop.f32.mrf.mxu0
    %v1428 = vadd.f32 %v1146, %v1427
    %1429 = vmatprep.mubr.f32.mxu0 %v1002
    %1430 = vmatmul.mubr.f32.gmra.mxu0 %v1001
    %v1431 = vpop.f32.mrf.mxu0
    %v1432 = vadd.f32 %v1142, %v1431
    %v1433 = vpop.f32.mrf.mxu0
    %v1434 = vadd.f32 %v1146, %v1433
    %1435 = vmatprep.mubr.f32.mxu0 %v1006
    %1436 = vmatmul.mubr.f32.gmra.mxu0 %v1005
    %v1437 = vpop.f32.mrf.mxu0
    %v1438 = vadd.f32 %v1142, %v1437
    %v1439 = vpop.f32.mrf.mxu0
    %v1440 = vadd.f32 %v1146, %v1439
    %1441 = vdwg.mxu0
    %1442 = vmatprep.subr.mxu0 %v1104
    %1443 = vmatpush1.msra.mxu0 %v1103
    %1444 = vmatprep.subr.mxu0 %v1102
    %1445 = vmatpush1.msra.mxu0 %v1101
    %1446 = vmatprep.subr.mxu0 %v1100
    %1447 = vmatpush1.msra.mxu0 %v1099
    %1448 = vmatprep.subr.mxu0 %v1098
    %1449 = vmatpush1.msra.mxu0 %v1097
    %1450 = vmatprep.subr.mxu0 %v1096
    %1451 = vmatpush1.msra.mxu0 %v1095
    %1452 = vmatprep.subr.mxu0 %v1094
    %1453 = vmatpush1.msra.mxu0 %v1093
    %1454 = vmatprep.subr.mxu0 %v1092
    %1455 = vmatpush1.msra.mxu0 %v1091
    %1456 = vmatprep.subr.mxu0 %v1090
    %1457 = vmatpush1.msra.mxu0 %v1089
    %1458 = vmatprep.subr.mxu0 %v1088
    %1459 = vmatpush1.msra.mxu0 %v1087
    %1460 = vmatprep.subr.mxu0 %v1086
    %1461 = vmatpush1.msra.mxu0 %v1085
    %1462 = vmatprep.subr.mxu0 %v1084
    %1463 = vmatpush1.msra.mxu0 %v1083
    %1464 = vmatprep.subr.mxu0 %v1082
    %1465 = vmatpush1.msra.mxu0 %v1081
    %1466 = vmatprep.subr.mxu0 %v1080
    %1467 = vmatpush1.msra.mxu0 %v1079
    %1468 = vmatprep.subr.mxu0 %v1078
    %1469 = vmatpush1.msra.mxu0 %v1077
    %1470 = vmatprep.subr.mxu0 %v1076
    %1471 = vmatpush1.msra.mxu0 %v1075
    %1472 = vmatprep.subr.mxu0 %v1074
    %1473 = vmatpush1.msra.mxu0 %v1073
    %1474 = vmatprep.subr.mxu0 %v1136
    %1475 = vmatpush2.msra.mxu0 %v1135
    %1476 = vmatprep.subr.mxu0 %v1134
    %1477 = vmatpush2.msra.mxu0 %v1133
    %1478 = vmatprep.subr.mxu0 %v1132
    %1479 = vmatpush2.msra.mxu0 %v1131
    %1480 = vmatprep.subr.mxu0 %v1130
    %1481 = vmatpush2.msra.mxu0 %v1129
    %1482 = vmatprep.subr.mxu0 %v1128
    %1483 = vmatpush2.msra.mxu0 %v1127
    %1484 = vmatprep.subr.mxu0 %v1126
    %1485 = vmatpush2.msra.mxu0 %v1125
    %1486 = vmatprep.subr.mxu0 %v1124
    %1487 = vmatpush2.msra.mxu0 %v1123
    %1488 = vmatprep.subr.mxu0 %v1122
    %1489 = vmatpush2.msra.mxu0 %v1121
    %1490 = vmatprep.subr.mxu0 %v1120
    %1491 = vmatpush2.msra.mxu0 %v1119
    %1492 = vmatprep.subr.mxu0 %v1118
    %1493 = vmatpush2.msra.mxu0 %v1117
    %1494 = vmatprep.subr.mxu0 %v1116
    %1495 = vmatpush2.msra.mxu0 %v1115
    %1496 = vmatprep.subr.mxu0 %v1114
    %1497 = vmatpush2.msra.mxu0 %v1113
    %1498 = vmatprep.subr.mxu0 %v1112
    %1499 = vmatpush2.msra.mxu0 %v1111
    %1500 = vmatprep.subr.mxu0 %v1110
    %1501 = vmatpush2.msra.mxu0 %v1109
    %1502 = vmatprep.subr.mxu0 %v1108
    %1503 = vmatpush2.msra.mxu0 %v1107
    %1504 = vmatprep.subr.mxu0 %v1106
    %1505 = vmatpush2.msra.mxu0 %v1105
    %1506 = vmatprep.mubr.f32.mxu0 %v860
    %1507 = vmatmul.mubr.f32.gmra.mxu0 %v859
    %v1508 = vpop.f32.mrf.mxu0
    %v1509 = vadd.f32 %v1216, %v1508
    %v1510 = vpop.f32.mrf.mxu0
    %v1511 = vadd.f32 %v1218, %v1510
    %1512 = vmatprep.mubr.f32.mxu0 %v864
    %1513 = vmatmul.mubr.f32.gmra.mxu0 %v863
    %v1514 = vpop.f32.mrf.mxu0
    %v1515 = vadd.f32 %v1222, %v1514
    %v1516 = vpop.f32.mrf.mxu0
    %v1517 = vadd.f32 %v1224, %v1516
    %1518 = vmatprep.mubr.f32.mxu0 %v868
    %1519 = vmatmul.mubr.f32.gmra.mxu0 %v867
    %v1520 = vpop.f32.mrf.mxu0
    %v1521 = vadd.f32 %v1228, %v1520
    %v1522 = vpop.f32.mrf.mxu0
    %v1523 = vadd.f32 %v1230, %v1522
    %1524 = vmatprep.mubr.f32.mxu0 %v872
    %1525 = vmatmul.mubr.f32.gmra.mxu0 %v871
    %v1526 = vpop.f32.mrf.mxu0
    %v1527 = vadd.f32 %v1234, %v1526
    %v1528 = vpop.f32.mrf.mxu0
    %v1529 = vadd.f32 %v1236, %v1528
    %1530 = vmatprep.mubr.f32.mxu0 %v876
    %1531 = vmatmul.mubr.f32.gmra.mxu0 %v875
    %v1532 = vpop.f32.mrf.mxu0
    %v1533 = vadd.f32 %v1240, %v1532
    %v1534 = vpop.f32.mrf.mxu0
    %v1535 = vadd.f32 %v1242, %v1534
    %1536 = vmatprep.mubr.f32.mxu0 %v880
    %1537 = vmatmul.mubr.f32.gmra.mxu0 %v879
    %v1538 = vpop.f32.mrf.mxu0
    %v1539 = vadd.f32 %v1246, %v1538
    %v1540 = vpop.f32.mrf.mxu0
    %v1541 = vadd.f32 %v1248, %v1540
    %1542 = vmatprep.mubr.f32.mxu0 %v884
    %1543 = vmatmul.mubr.f32.gmra.mxu0 %v883
    %v1544 = vpop.f32.mrf.mxu0
    %v1545 = vadd.f32 %v1252, %v1544
    %v1546 = vpop.f32.mrf.mxu0
    %v1547 = vadd.f32 %v1254, %v1546
    %1548 = vmatprep.mubr.f32.mxu0 %v888
    %1549 = vmatmul.mubr.f32.gmra.mxu0 %v887
    %v1550 = vpop.f32.mrf.mxu0
    %v1551 = vadd.f32 %v1258, %v1550
    %v1552 = vpop.f32.mrf.mxu0
    %v1553 = vadd.f32 %v1260, %v1552
    %1554 = vmatprep.mubr.f32.mxu0 %v892
    %1555 = vmatmul.mubr.f32.gmra.mxu0 %v891
    %v1556 = vpop.f32.mrf.mxu0
    %v1557 = vadd.f32 %v1264, %v1556
    %v1558 = vpop.f32.mrf.mxu0
    %v1559 = vadd.f32 %v1266, %v1558
    %1560 = vmatprep.mubr.f32.mxu0 %v896
    %1561 = vmatmul.mubr.f32.gmra.mxu0 %v895
    %v1562 = vpop.f32.mrf.mxu0
    %v1563 = vadd.f32 %v1270, %v1562
    %v1564 = vpop.f32.mrf.mxu0
    %v1565 = vadd.f32 %v1272, %v1564
    %1566 = vmatprep.mubr.f32.mxu0 %v900
    %1567 = vmatmul.mubr.f32.gmra.mxu0 %v899
    %v1568 = vpop.f32.mrf.mxu0
    %v1569 = vadd.f32 %v1276, %v1568
    %v1570 = vpop.f32.mrf.mxu0
    %v1571 = vadd.f32 %v1278, %v1570
    %1572 = vmatprep.mubr.f32.mxu0 %v904
    %1573 = vmatmul.mubr.f32.gmra.mxu0 %v903
    %v1574 = vpop.f32.mrf.mxu0
    %v1575 = vadd.f32 %v1282, %v1574
    %v1576 = vpop.f32.mrf.mxu0
    %v1577 = vadd.f32 %v1284, %v1576
    %1578 = vmatprep.mubr.f32.mxu0 %v908
    %1579 = vmatmul.mubr.f32.gmra.mxu0 %v907
    %v1580 = vpop.f32.mrf.mxu0
    %v1581 = vadd.f32 %v1288, %v1580
    %v1582 = vpop.f32.mrf.mxu0
    %v1583 = vadd.f32 %v1290, %v1582
    %1584 = vmatprep.mubr.f32.mxu0 %v912
    %1585 = vmatmul.mubr.f32.gmra.mxu0 %v911
    %v1586 = vpop.f32.mrf.mxu0
    %v1587 = vadd.f32 %v1294, %v1586
    %v1588 = vpop.f32.mrf.mxu0
    %v1589 = vadd.f32 %v1296, %v1588
    %1590 = vmatprep.mubr.f32.mxu0 %v916
    %1591 = vmatmul.mubr.f32.gmra.mxu0 %v915
    %v1592 = vpop.f32.mrf.mxu0
    %v1593 = vadd.f32 %v1300, %v1592
    %v1594 = vpop.f32.mrf.mxu0
    %v1595 = vadd.f32 %v1302, %v1594
    %1596 = vmatprep.mubr.f32.mxu0 %v920
    %1597 = vmatmul.mubr.f32.gmra.mxu0 %v919
    %v1598 = vpop.f32.mrf.mxu0
    %v1599 = vadd.f32 %v1306, %v1598
    %v1600 = vpop.f32.mrf.mxu0
    %v1601 = vadd.f32 %v1308, %v1600
    %1602 = vmatprep.mubr.f32.mxu0 %v924
    %1603 = vmatmul.mubr.f32.gmra.mxu0 %v923
    %v1604 = vpop.f32.mrf.mxu0
    %v1605 = vadd.f32 %v1312, %v1604
    %v1606 = vpop.f32.mrf.mxu0
    %v1607 = vadd.f32 %v1314, %v1606
    %1608 = vmatprep.mubr.f32.mxu0 %v928
    %1609 = vmatmul.mubr.f32.gmra.mxu0 %v927
    %v1610 = vpop.f32.mrf.mxu0
    %v1611 = vadd.f32 %v1318, %v1610
    %v1612 = vpop.f32.mrf.mxu0
    %v1613 = vadd.f32 %v1320, %v1612
    %1614 = vmatprep.mubr.f32.mxu0 %v932
    %1615 = vmatmul.mubr.f32.gmra.mxu0 %v931
    %v1616 = vpop.f32.mrf.mxu0
    %v1617 = vadd.f32 %v1324, %v1616
    %v1618 = vpop.f32.mrf.mxu0
    %v1619 = vadd.f32 %v1326, %v1618
    %1620 = vmatprep.mubr.f32.mxu0 %v936
    %1621 = vmatmul.mubr.f32.gmra.mxu0 %v935
    %v1622 = vpop.f32.mrf.mxu0
    %v1623 = vadd.f32 %v1330, %v1622
    %v1624 = vpop.f32.mrf.mxu0
    %v1625 = vadd.f32 %v1332, %v1624
    %1626 = vmatprep.mubr.f32.mxu0 %v940
    %1627 = vmatmul.mubr.f32.gmra.mxu0 %v939
    %v1628 = vpop.f32.mrf.mxu0
    %v1629 = vadd.f32 %v1336, %v1628
    %v1630 = vpop.f32.mrf.mxu0
    %v1631 = vadd.f32 %v1338, %v1630
    %1632 = vmatprep.mubr.f32.mxu0 %v944
    %1633 = vmatmul.mubr.f32.gmra.mxu0 %v943
    %v1634 = vpop.f32.mrf.mxu0
    %v1635 = vadd.f32 %v1342, %v1634
    %v1636 = vpop.f32.mrf.mxu0
    %v1637 = vadd.f32 %v1344, %v1636
    %1638 = vmatprep.mubr.f32.mxu0 %v948
    %1639 = vmatmul.mubr.f32.gmra.mxu0 %v947
    %v1640 = vpop.f32.mrf.mxu0
    %v1641 = vadd.f32 %v1348, %v1640
    %v1642 = vpop.f32.mrf.mxu0
    %v1643 = vadd.f32 %v1350, %v1642
    %1644 = vmatprep.mubr.f32.mxu0 %v952
    %1645 = vmatmul.mubr.f32.gmra.mxu0 %v951
    %v1646 = vpop.f32.mrf.mxu0
    %v1647 = vadd.f32 %v1354, %v1646
    %v1648 = vpop.f32.mrf.mxu0
    %v1649 = vadd.f32 %v1356, %v1648
    %1650 = vmatprep.mubr.f32.mxu0 %v956
    %1651 = vmatmul.mubr.f32.gmra.mxu0 %v955
    %v1652 = vpop.f32.mrf.mxu0
    %v1653 = vadd.f32 %v1360, %v1652
    %v1654 = vpop.f32.mrf.mxu0
    %v1655 = vadd.f32 %v1362, %v1654
    %1656 = vmatprep.mubr.f32.mxu0 %v960
    %1657 = vmatmul.mubr.f32.gmra.mxu0 %v959
    %v1658 = vpop.f32.mrf.mxu0
    %v1659 = vadd.f32 %v1366, %v1658
    %v1660 = vpop.f32.mrf.mxu0
    %v1661 = vadd.f32 %v1368, %v1660
    %1662 = vmatprep.mubr.f32.mxu0 %v964
    %1663 = vmatmul.mubr.f32.gmra.mxu0 %v963
    %v1664 = vpop.f32.mrf.mxu0
    %v1665 = vadd.f32 %v1372, %v1664
    %v1666 = vpop.f32.mrf.mxu0
    %v1667 = vadd.f32 %v1374, %v1666
    %1668 = vmatprep.mubr.f32.mxu0 %v968
    %1669 = vmatmul.mubr.f32.gmra.mxu0 %v967
    %v1670 = vpop.f32.mrf.mxu0
    %v1671 = vadd.f32 %v1378, %v1670
    %v1672 = vpop.f32.mrf.mxu0
    %v1673 = vadd.f32 %v1380, %v1672
    %1674 = vmatprep.mubr.f32.mxu0 %v972
    %1675 = vmatmul.mubr.f32.gmra.mxu0 %v971
    %v1676 = vpop.f32.mrf.mxu0
    %v1677 = vadd.f32 %v1384, %v1676
    %v1678 = vpop.f32.mrf.mxu0
    %v1679 = vadd.f32 %v1386, %v1678
    %1680 = vmatprep.mubr.f32.mxu0 %v976
    %1681 = vmatmul.mubr.f32.gmra.mxu0 %v975
    %v1682 = vpop.f32.mrf.mxu0
    %v1683 = vadd.f32 %v1390, %v1682
    %v1684 = vpop.f32.mrf.mxu0
    %v1685 = vadd.f32 %v1392, %v1684
    %1686 = vmatprep.mubr.f32.mxu0 %v980
    %1687 = vmatmul.mubr.f32.gmra.mxu0 %v979
    %v1688 = vpop.f32.mrf.mxu0
    %v1689 = vadd.f32 %v1396, %v1688
    %v1690 = vpop.f32.mrf.mxu0
    %v1691 = vadd.f32 %v1398, %v1690
    %1692 = vmatprep.mubr.f32.mxu0 %v984
    %1693 = vmatmul.mubr.f32.gmra.mxu0 %v983
    %v1694 = vpop.f32.mrf.mxu0
    %v1695 = vadd.f32 %v1402, %v1694
    %v1696 = vpop.f32.mrf.mxu0
    %v1697 = vadd.f32 %v1404, %v1696
    %1698 = vmatprep.mubr.f32.mxu0 %v988
    %1699 = vmatmul.mubr.f32.gmra.mxu0 %v987
    %v1700 = vpop.f32.mrf.mxu0
    %v1701 = vadd.f32 %v1408, %v1700
    %v1702 = vpop.f32.mrf.mxu0
    %v1703 = vadd.f32 %v1410, %v1702
    %1704 = vmatprep.mubr.f32.mxu0 %v992
    %1705 = vmatmul.mubr.f32.gmra.mxu0 %v991
    %v1706 = vpop.f32.mrf.mxu0
    %v1707 = vadd.f32 %v1414, %v1706
    %v1708 = vpop.f32.mrf.mxu0
    %v1709 = vadd.f32 %v1416, %v1708
    %1710 = vmatprep.mubr.f32.mxu0 %v996
    %1711 = vmatmul.mubr.f32.gmra.mxu0 %v995
    %v1712 = vpop.f32.mrf.mxu0
    %v1713 = vadd.f32 %v1420, %v1712
    %v1714 = vpop.f32.mrf.mxu0
    %v1715 = vadd.f32 %v1422, %v1714
    %1716 = vmatprep.mubr.f32.mxu0 %v1000
    %1717 = vmatmul.mubr.f32.gmra.mxu0 %v999
    %v1718 = vpop.f32.mrf.mxu0
    %v1719 = vadd.f32 %v1426, %v1718
    %v1720 = vpop.f32.mrf.mxu0
    %v1721 = vadd.f32 %v1428, %v1720
    %1722 = vmatprep.mubr.f32.mxu0 %v1004
    %1723 = vmatmul.mubr.f32.gmra.mxu0 %v1003
    %v1724 = vpop.f32.mrf.mxu0
    %v1725 = vadd.f32 %v1432, %v1724
    %v1726 = vpop.f32.mrf.mxu0
    %v1727 = vadd.f32 %v1434, %v1726
    %1728 = vmatprep.mubr.f32.mxu0 %v1008
    %1729 = vmatmul.mubr.f32.gmra.mxu0 %v1007
    %v1730 = vpop.f32.mrf.mxu0
    %v1731 = vadd.f32 %v1438, %v1730
    %v1732 = vpop.f32.mrf.mxu0
    %v1733 = vadd.f32 %v1440, %v1732
    %1734 = vdwg.mxu0
    %v1735 = vmax.f32 %v1509, 0.0
    %v1736 = vmax.f32 %v1511, 0.0
    %v1737 = vmax.f32 %v1515, 0.0
    %v1738 = vmax.f32 %v1517, 0.0
    %v1739 = vmax.f32 %v1521, 0.0
    %v1740 = vmax.f32 %v1523, 0.0
    %v1741 = vmax.f32 %v1527, 0.0
    %v1742 = vmax.f32 %v1529, 0.0
    %v1743 = vmax.f32 %v1533, 0.0
    %v1744 = vmax.f32 %v1535, 0.0
    %v1745 = vmax.f32 %v1539, 0.0
    %v1746 = vmax.f32 %v1541, 0.0
    %v1747 = vmax.f32 %v1545, 0.0
    %v1748 = vmax.f32 %v1547, 0.0
    %v1749 = vmax.f32 %v1551, 0.0
    %v1750 = vmax.f32 %v1553, 0.0
    %v1751 = vmax.f32 %v1557, 0.0
    %v1752 = vmax.f32 %v1559, 0.0
    %v1753 = vmax.f32 %v1563, 0.0
    %v1754 = vmax.f32 %v1565, 0.0
    %v1755 = vmax.f32 %v1569, 0.0
    %v1756 = vmax.f32 %v1571, 0.0
    %v1757 = vmax.f32 %v1575, 0.0
    %v1758 = vmax.f32 %v1577, 0.0
    %v1759 = vmax.f32 %v1581, 0.0
    %v1760 = vmax.f32 %v1583, 0.0
    %v1761 = vmax.f32 %v1587, 0.0
    %v1762 = vmax.f32 %v1589, 0.0
    %v1763 = vmax.f32 %v1593, 0.0
    %v1764 = vmax.f32 %v1595, 0.0
    %v1765 = vmax.f32 %v1599, 0.0
    %v1766 = vmax.f32 %v1601, 0.0
    %v1767 = vmax.f32 %v1605, 0.0
    %v1768 = vmax.f32 %v1607, 0.0
    %v1769 = vmax.f32 %v1611, 0.0
    %v1770 = vmax.f32 %v1613, 0.0
    %v1771 = vmax.f32 %v1617, 0.0
    %v1772 = vmax.f32 %v1619, 0.0
    %v1773 = vmax.f32 %v1623, 0.0
    %v1774 = vmax.f32 %v1625, 0.0
    %v1775 = vmax.f32 %v1629, 0.0
    %v1776 = vmax.f32 %v1631, 0.0
    %v1777 = vmax.f32 %v1635, 0.0
    %v1778 = vmax.f32 %v1637, 0.0
    %v1779 = vmax.f32 %v1641, 0.0
    %v1780 = vmax.f32 %v1643, 0.0
    %v1781 = vmax.f32 %v1647, 0.0
    %v1782 = vmax.f32 %v1649, 0.0
    %v1783 = vmax.f32 %v1653, 0.0
    %v1784 = vmax.f32 %v1655, 0.0
    %v1785 = vmax.f32 %v1659, 0.0
    %v1786 = vmax.f32 %v1661, 0.0
    %v1787 = vmax.f32 %v1665, 0.0
    %v1788 = vmax.f32 %v1667, 0.0
    %v1789 = vmax.f32 %v1671, 0.0
    %v1790 = vmax.f32 %v1673, 0.0
    %v1791 = vmax.f32 %v1677, 0.0
    %v1792 = vmax.f32 %v1679, 0.0
    %v1793 = vmax.f32 %v1683, 0.0
    %v1794 = vmax.f32 %v1685, 0.0
    %v1795 = vmax.f32 %v1689, 0.0
    %v1796 = vmax.f32 %v1691, 0.0
    %v1797 = vmax.f32 %v1695, 0.0
    %v1798 = vmax.f32 %v1697, 0.0
    %v1799 = vmax.f32 %v1701, 0.0
    %v1800 = vmax.f32 %v1703, 0.0
    %v1801 = vmax.f32 %v1707, 0.0
    %v1802 = vmax.f32 %v1709, 0.0
    %v1803 = vmax.f32 %v1713, 0.0
    %v1804 = vmax.f32 %v1715, 0.0
    %v1805 = vmax.f32 %v1719, 0.0
    %v1806 = vmax.f32 %v1721, 0.0
    %v1807 = vmax.f32 %v1725, 0.0
    %v1808 = vmax.f32 %v1727, 0.0
    %v1809 = vmax.f32 %v1731, 0.0
    %v1810 = vmax.f32 %v1733, 0.0
    %v1811 = vld [vmem:[%s5] sm:$0xff]
    %v1812 = vld [vmem:[%s5 + $0x8] sm:$0xff]
    %v1813 = vld [vmem:[%s5 + $0x10] sm:$0xff]
    %v1814 = vld [vmem:[%s5 + $0x18] sm:$0xff]
    %v1815 = vld [vmem:[%s5 + $0x20] sm:$0xff]
    %v1816 = vld [vmem:[%s5 + $0x28] sm:$0xff]
    %v1817 = vld [vmem:[%s5 + $0x30] sm:$0xff]
    %v1818 = vld [vmem:[%s5 + $0x38] sm:$0xff]
    %v1819 = vld [vmem:[%s5 + $0x40] sm:$0xff]
    %v1820 = vld [vmem:[%s5 + $0x48] sm:$0xff]
    %v1821 = vld [vmem:[%s5 + $0x50] sm:$0xff]
    %v1822 = vld [vmem:[%s5 + $0x58] sm:$0xff]
    %v1823 = vld [vmem:[%s5 + $0x60] sm:$0xff]
    %v1824 = vld [vmem:[%s5 + $0x68] sm:$0xff]
    %v1825 = vld [vmem:[%s5 + $0x70] sm:$0xff]
    %v1826 = vld [vmem:[%s5 + $0x78] sm:$0xff]
    %v1827 = vld [vmem:[%s5 + $0x80] sm:$0xff]
    %v1828 = vld [vmem:[%s5 + $0x88] sm:$0xff]
    %v1829 = vld [vmem:[%s5 + $0x90] sm:$0xff]
    %v1830 = vld [vmem:[%s5 + $0x98] sm:$0xff]
    %v1831 = vld [vmem:[%s5 + $0xa0] sm:$0xff]
    %v1832 = vld [vmem:[%s5 + $0xa8] sm:$0xff]
    %v1833 = vld [vmem:[%s5 + $0xb0] sm:$0xff]
    %v1834 = vld [vmem:[%s5 + $0xb8] sm:$0xff]
    %v1835 = vld [vmem:[%s5 + $0xc0] sm:$0xff]
    %v1836 = vld [vmem:[%s5 + $0xc8] sm:$0xff]
    %v1837 = vld [vmem:[%s5 + $0xd0] sm:$0xff]
    %v1838 = vld [vmem:[%s5 + $0xd8] sm:$0xff]
    %v1839 = vld [vmem:[%s5 + $0xe0] sm:$0xff]
    %v1840 = vld [vmem:[%s5 + $0xe8] sm:$0xff]
    %v1841 = vld [vmem:[%s5 + $0xf0] sm:$0xff]
    %v1842 = vld [vmem:[%s5 + $0xf8] sm:$0xff]
    %v1843 = vld [vmem:[%s6] sm:$0x1]
    %v1845 = vlaneseq
    %v1846 = vshrl.u32 %v1845, 7
    %v1847 = vsub.s32 0, %v1846
    %v1848 = vrot.slane %v1843, %v1847
    %1850 = vmatprep.subr.mxu0 0.0
    %1851 = vmatpush1.msra.mxu0 %v1826
    %1852 = vmatprep.subr.mxu0 0.0
    %1853 = vmatpush1.msra.mxu0 %v1825
    %1854 = vmatprep.subr.mxu0 0.0
    %1855 = vmatpush1.msra.mxu0 %v1824
    %1856 = vmatprep.subr.mxu0 0.0
    %1857 = vmatpush1.msra.mxu0 %v1823
    %1858 = vmatprep.subr.mxu0 0.0
    %1859 = vmatpush1.msra.mxu0 %v1822
    %1860 = vmatprep.subr.mxu0 0.0
    %1861 = vmatpush1.msra.mxu0 %v1821
    %1862 = vmatprep.subr.mxu0 0.0
    %1863 = vmatpush1.msra.mxu0 %v1820
    %1864 = vmatprep.subr.mxu0 0.0
    %1865 = vmatpush1.msra.mxu0 %v1819
    %1866 = vmatprep.subr.mxu0 0.0
    %1867 = vmatpush1.msra.mxu0 %v1818
    %1868 = vmatprep.subr.mxu0 0.0
    %1869 = vmatpush1.msra.mxu0 %v1817
    %1870 = vmatprep.subr.mxu0 0.0
    %1871 = vmatpush1.msra.mxu0 %v1816
    %1872 = vmatprep.subr.mxu0 0.0
    %1873 = vmatpush1.msra.mxu0 %v1815
    %1874 = vmatprep.subr.mxu0 0.0
    %1875 = vmatpush1.msra.mxu0 %v1814
    %1876 = vmatprep.subr.mxu0 0.0
    %1877 = vmatpush1.msra.mxu0 %v1813
    %1878 = vmatprep.subr.mxu0 0.0
    %1879 = vmatpush1.msra.mxu0 %v1812
    %1880 = vmatprep.subr.mxu0 0.0
    %1881 = vmatpush1.msra.mxu0 %v1811
    %1882 = vmatprep.subr.mxu0 0.0
    %1883 = vmatpush2.msra.mxu0 %v1842
    %1884 = vmatprep.subr.mxu0 0.0
    %1885 = vmatpush2.msra.mxu0 %v1841
    %1886 = vmatprep.subr.mxu0 0.0
    %1887 = vmatpush2.msra.mxu0 %v1840
    %1888 = vmatprep.subr.mxu0 0.0
    %1889 = vmatpush2.msra.mxu0 %v1839
    %1890 = vmatprep.subr.mxu0 0.0
    %1891 = vmatpush2.msra.mxu0 %v1838
    %1892 = vmatprep.subr.mxu0 0.0
    %1893 = vmatpush2.msra.mxu0 %v1837
    %1894 = vmatprep.subr.mxu0 0.0
    %1895 = vmatpush2.msra.mxu0 %v1836
    %1896 = vmatprep.subr.mxu0 0.0
    %1897 = vmatpush2.msra.mxu0 %v1835
    %1898 = vmatprep.subr.mxu0 0.0
    %1899 = vmatpush2.msra.mxu0 %v1834
    %1900 = vmatprep.subr.mxu0 0.0
    %1901 = vmatpush2.msra.mxu0 %v1833
    %1902 = vmatprep.subr.mxu0 0.0
    %1903 = vmatpush2.msra.mxu0 %v1832
    %1904 = vmatprep.subr.mxu0 0.0
    %1905 = vmatpush2.msra.mxu0 %v1831
    %1906 = vmatprep.subr.mxu0 0.0
    %1907 = vmatpush2.msra.mxu0 %v1830
    %1908 = vmatprep.subr.mxu0 0.0
    %1909 = vmatpush2.msra.mxu0 %v1829
    %1910 = vmatprep.subr.mxu0 0.0
    %1911 = vmatpush2.msra.mxu0 %v1828
    %1912 = vmatprep.subr.mxu0 0.0
    %1913 = vmatpush2.msra.mxu0 %v1827
    %1914 = vmatprep.mubr.f32.mxu0 %v1736
    %1915 = vmatmul.mubr.f32.gmra.mxu0 %v1735
    %v1916 = vpop.f32.mrf.mxu0
    %v1917 = vadd.f32 %v1848, %v1916
    %v1918 = vpop.f32.mrf.mxu0
    %1919 = vmatprep.mubr.f32.mxu0 %v1738
    %1920 = vmatmul.mubr.f32.gmra.mxu0 %v1737
    %v1921 = vpop.f32.mrf.mxu0
    %v1922 = vadd.f32 %v1848, %v1921
    %v1923 = vpop.f32.mrf.mxu0
    %1924 = vmatprep.mubr.f32.mxu0 %v1740
    %1925 = vmatmul.mubr.f32.gmra.mxu0 %v1739
    %v1926 = vpop.f32.mrf.mxu0
    %v1927 = vadd.f32 %v1848, %v1926
    %v1928 = vpop.f32.mrf.mxu0
    %1929 = vmatprep.mubr.f32.mxu0 %v1742
    %1930 = vmatmul.mubr.f32.gmra.mxu0 %v1741
    %v1931 = vpop.f32.mrf.mxu0
    %v1932 = vadd.f32 %v1848, %v1931
    %v1933 = vpop.f32.mrf.mxu0
    %1934 = vmatprep.mubr.f32.mxu0 %v1744
    %1935 = vmatmul.mubr.f32.gmra.mxu0 %v1743
    %v1936 = vpop.f32.mrf.mxu0
    %v1937 = vadd.f32 %v1848, %v1936
    %v1938 = vpop.f32.mrf.mxu0
    %1939 = vmatprep.mubr.f32.mxu0 %v1746
    %1940 = vmatmul.mubr.f32.gmra.mxu0 %v1745
    %v1941 = vpop.f32.mrf.mxu0
    %v1942 = vadd.f32 %v1848, %v1941
    %v1943 = vpop.f32.mrf.mxu0
    %1944 = vmatprep.mubr.f32.mxu0 %v1748
    %1945 = vmatmul.mubr.f32.gmra.mxu0 %v1747
    %v1946 = vpop.f32.mrf.mxu0
    %v1947 = vadd.f32 %v1848, %v1946
    %v1948 = vpop.f32.mrf.mxu0
    %1949 = vmatprep.mubr.f32.mxu0 %v1750
    %1950 = vmatmul.mubr.f32.gmra.mxu0 %v1749
    %v1951 = vpop.f32.mrf.mxu0
    %v1952 = vadd.f32 %v1848, %v1951
    %v1953 = vpop.f32.mrf.mxu0
    %1954 = vmatprep.mubr.f32.mxu0 %v1752
    %1955 = vmatmul.mubr.f32.gmra.mxu0 %v1751
    %v1956 = vpop.f32.mrf.mxu0
    %v1957 = vadd.f32 %v1848, %v1956
    %v1958 = vpop.f32.mrf.mxu0
    %1959 = vmatprep.mubr.f32.mxu0 %v1754
    %1960 = vmatmul.mubr.f32.gmra.mxu0 %v1753
    %v1961 = vpop.f32.mrf.mxu0
    %v1962 = vadd.f32 %v1848, %v1961
    %v1963 = vpop.f32.mrf.mxu0
    %1964 = vmatprep.mubr.f32.mxu0 %v1756
    %1965 = vmatmul.mubr.f32.gmra.mxu0 %v1755
    %v1966 = vpop.f32.mrf.mxu0
    %v1967 = vadd.f32 %v1848, %v1966
    %v1968 = vpop.f32.mrf.mxu0
    %1969 = vmatprep.mubr.f32.mxu0 %v1758
    %1970 = vmatmul.mubr.f32.gmra.mxu0 %v1757
    %v1971 = vpop.f32.mrf.mxu0
    %v1972 = vadd.f32 %v1848, %v1971
    %v1973 = vpop.f32.mrf.mxu0
    %1974 = vmatprep.mubr.f32.mxu0 %v1760
    %1975 = vmatmul.mubr.f32.gmra.mxu0 %v1759
    %v1976 = vpop.f32.mrf.mxu0
    %v1977 = vadd.f32 %v1848, %v1976
    %v1978 = vpop.f32.mrf.mxu0
    %1979 = vmatprep.mubr.f32.mxu0 %v1762
    %1980 = vmatmul.mubr.f32.gmra.mxu0 %v1761
    %v1981 = vpop.f32.mrf.mxu0
    %v1982 = vadd.f32 %v1848, %v1981
    %v1983 = vpop.f32.mrf.mxu0
    %1984 = vmatprep.mubr.f32.mxu0 %v1764
    %1985 = vmatmul.mubr.f32.gmra.mxu0 %v1763
    %v1986 = vpop.f32.mrf.mxu0
    %v1987 = vadd.f32 %v1848, %v1986
    %v1988 = vpop.f32.mrf.mxu0
    %1989 = vmatprep.mubr.f32.mxu0 %v1766
    %1990 = vmatmul.mubr.f32.gmra.mxu0 %v1765
    %v1991 = vpop.f32.mrf.mxu0
    %v1992 = vadd.f32 %v1848, %v1991
    %v1993 = vpop.f32.mrf.mxu0
    %1994 = vmatprep.mubr.f32.mxu0 %v1768
    %1995 = vmatmul.mubr.f32.gmra.mxu0 %v1767
    %v1996 = vpop.f32.mrf.mxu0
    %v1997 = vadd.f32 %v1848, %v1996
    %v1998 = vpop.f32.mrf.mxu0
    %1999 = vmatprep.mubr.f32.mxu0 %v1770
    %2000 = vmatmul.mubr.f32.gmra.mxu0 %v1769
    %v2001 = vpop.f32.mrf.mxu0
    %v2002 = vadd.f32 %v1848, %v2001
    %v2003 = vpop.f32.mrf.mxu0
    %2004 = vmatprep.mubr.f32.mxu0 %v1772
    %2005 = vmatmul.mubr.f32.gmra.mxu0 %v1771
    %v2006 = vpop.f32.mrf.mxu0
    %v2007 = vadd.f32 %v1848, %v2006
    %v2008 = vpop.f32.mrf.mxu0
    %2009 = vmatprep.mubr.f32.mxu0 %v1774
    %2010 = vmatmul.mubr.f32.gmra.mxu0 %v1773
    %v2011 = vpop.f32.mrf.mxu0
    %v2012 = vadd.f32 %v1848, %v2011
    %v2013 = vpop.f32.mrf.mxu0
    %2014 = vmatprep.mubr.f32.mxu0 %v1776
    %2015 = vmatmul.mubr.f32.gmra.mxu0 %v1775
    %v2016 = vpop.f32.mrf.mxu0
    %v2017 = vadd.f32 %v1848, %v2016
    %v2018 = vpop.f32.mrf.mxu0
    %2019 = vmatprep.mubr.f32.mxu0 %v1778
    %2020 = vmatmul.mubr.f32.gmra.mxu0 %v1777
    %v2021 = vpop.f32.mrf.mxu0
    %v2022 = vadd.f32 %v1848, %v2021
    %v2023 = vpop.f32.mrf.mxu0
    %2024 = vmatprep.mubr.f32.mxu0 %v1780
    %2025 = vmatmul.mubr.f32.gmra.mxu0 %v1779
    %v2026 = vpop.f32.mrf.mxu0
    %v2027 = vadd.f32 %v1848, %v2026
    %v2028 = vpop.f32.mrf.mxu0
    %2029 = vmatprep.mubr.f32.mxu0 %v1782
    %2030 = vmatmul.mubr.f32.gmra.mxu0 %v1781
    %v2031 = vpop.f32.mrf.mxu0
    %v2032 = vadd.f32 %v1848, %v2031
    %v2033 = vpop.f32.mrf.mxu0
    %2034 = vmatprep.mubr.f32.mxu0 %v1784
    %2035 = vmatmul.mubr.f32.gmra.mxu0 %v1783
    %v2036 = vpop.f32.mrf.mxu0
    %v2037 = vadd.f32 %v1848, %v2036
    %v2038 = vpop.f32.mrf.mxu0
    %2039 = vmatprep.mubr.f32.mxu0 %v1786
    %2040 = vmatmul.mubr.f32.gmra.mxu0 %v1785
    %v2041 = vpop.f32.mrf.mxu0
    %v2042 = vadd.f32 %v1848, %v2041
    %v2043 = vpop.f32.mrf.mxu0
    %2044 = vmatprep.mubr.f32.mxu0 %v1788
    %2045 = vmatmul.mubr.f32.gmra.mxu0 %v1787
    %v2046 = vpop.f32.mrf.mxu0
    %v2047 = vadd.f32 %v1848, %v2046
    %v2048 = vpop.f32.mrf.mxu0
    %2049 = vmatprep.mubr.f32.mxu0 %v1790
    %2050 = vmatmul.mubr.f32.gmra.mxu0 %v1789
    %v2051 = vpop.f32.mrf.mxu0
    %v2052 = vadd.f32 %v1848, %v2051
    %v2053 = vpop.f32.mrf.mxu0
    %2054 = vmatprep.mubr.f32.mxu0 %v1792
    %2055 = vmatmul.mubr.f32.gmra.mxu0 %v1791
    %v2056 = vpop.f32.mrf.mxu0
    %v2057 = vadd.f32 %v1848, %v2056
    %v2058 = vpop.f32.mrf.mxu0
    %2059 = vmatprep.mubr.f32.mxu0 %v1794
    %2060 = vmatmul.mubr.f32.gmra.mxu0 %v1793
    %v2061 = vpop.f32.mrf.mxu0
    %v2062 = vadd.f32 %v1848, %v2061
    %v2063 = vpop.f32.mrf.mxu0
    %2064 = vmatprep.mubr.f32.mxu0 %v1796
    %2065 = vmatmul.mubr.f32.gmra.mxu0 %v1795
    %v2066 = vpop.f32.mrf.mxu0
    %v2067 = vadd.f32 %v1848, %v2066
    %v2068 = vpop.f32.mrf.mxu0
    %2069 = vmatprep.mubr.f32.mxu0 %v1798
    %2070 = vmatmul.mubr.f32.gmra.mxu0 %v1797
    %v2071 = vpop.f32.mrf.mxu0
    %v2072 = vadd.f32 %v1848, %v2071
    %v2073 = vpop.f32.mrf.mxu0
    %2074 = vmatprep.mubr.f32.mxu0 %v1800
    %2075 = vmatmul.mubr.f32.gmra.mxu0 %v1799
    %v2076 = vpop.f32.mrf.mxu0
    %v2077 = vadd.f32 %v1848, %v2076
    %v2078 = vpop.f32.mrf.mxu0
    %2079 = vmatprep.mubr.f32.mxu0 %v1802
    %2080 = vmatmul.mubr.f32.gmra.mxu0 %v1801
    %v2081 = vpop.f32.mrf.mxu0
    %v2082 = vadd.f32 %v1848, %v2081
    %v2083 = vpop.f32.mrf.mxu0
    %2084 = vmatprep.mubr.f32.mxu0 %v1804
    %2085 = vmatmul.mubr.f32.gmra.mxu0 %v1803
    %v2086 = vpop.f32.mrf.mxu0
    %v2087 = vadd.f32 %v1848, %v2086
    %v2088 = vpop.f32.mrf.mxu0
    %2089 = vmatprep.mubr.f32.mxu0 %v1806
    %2090 = vmatmul.mubr.f32.gmra.mxu0 %v1805
    %v2091 = vpop.f32.mrf.mxu0
    %v2092 = vadd.f32 %v1848, %v2091
    %v2093 = vpop.f32.mrf.mxu0
    %2094 = vmatprep.mubr.f32.mxu0 %v1808
    %2095 = vmatmul.mubr.f32.gmra.mxu0 %v1807
    %v2096 = vpop.f32.mrf.mxu0
    %v2097 = vadd.f32 %v1848, %v2096
    %v2098 = vpop.f32.mrf.mxu0
    %2099 = vmatprep.mubr.f32.mxu0 %v1810
    %2100 = vmatmul.mubr.f32.gmra.mxu0 %v1809
    %v2101 = vpop.f32.mrf.mxu0
    %v2102 = vadd.f32 %v1848, %v2101
    %v2103 = vpop.f32.mrf.mxu0
    %2104 = vdwg.mxu0
    %v2105 = vmax.f32 %v1917, 0.0
    %v2106 = vmax.f32 %v1922, 0.0
    %v2107 = vmax.f32 %v1927, 0.0
    %v2108 = vmax.f32 %v1932, 0.0
    %v2109 = vmax.f32 %v1937, 0.0
    %v2110 = vmax.f32 %v1942, 0.0
    %v2111 = vmax.f32 %v1947, 0.0
    %v2112 = vmax.f32 %v1952, 0.0
    %v2113 = vmax.f32 %v1957, 0.0
    %v2114 = vmax.f32 %v1962, 0.0
    %v2115 = vmax.f32 %v1967, 0.0
    %v2116 = vmax.f32 %v1972, 0.0
    %v2117 = vmax.f32 %v1977, 0.0
    %v2118 = vmax.f32 %v1982, 0.0
    %v2119 = vmax.f32 %v1987, 0.0
    %v2120 = vmax.f32 %v1992, 0.0
    %v2121 = vmax.f32 %v1997, 0.0
    %v2122 = vmax.f32 %v2002, 0.0
    %v2123 = vmax.f32 %v2007, 0.0
    %v2124 = vmax.f32 %v2012, 0.0
    %v2125 = vmax.f32 %v2017, 0.0
    %v2126 = vmax.f32 %v2022, 0.0
    %v2127 = vmax.f32 %v2027, 0.0
    %v2128 = vmax.f32 %v2032, 0.0
    %v2129 = vmax.f32 %v2037, 0.0
    %v2130 = vmax.f32 %v2042, 0.0
    %v2131 = vmax.f32 %v2047, 0.0
    %v2132 = vmax.f32 %v2052, 0.0
    %v2133 = vmax.f32 %v2057, 0.0
    %v2134 = vmax.f32 %v2062, 0.0
    %v2135 = vmax.f32 %v2067, 0.0
    %v2136 = vmax.f32 %v2072, 0.0
    %v2137 = vmax.f32 %v2077, 0.0
    %v2138 = vmax.f32 %v2082, 0.0
    %v2139 = vmax.f32 %v2087, 0.0
    %v2140 = vmax.f32 %v2092, 0.0
    %v2141 = vmax.f32 %v2097, 0.0
    %v2142 = vmax.f32 %v2102, 0.0
    %v2143 = vld [vmem:[%s7] sm:$0xff]
    %v2144 = vld [vmem:[%s7 + $0x8] sm:$0xff]
    %v2145 = vld [vmem:[%s7 + $0x10] sm:$0xff]
    %v2146 = vld [vmem:[%s7 + $0x18] sm:$0xff]
    %v2147 = vld [vmem:[%s7 + $0x20] sm:$0xff]
    %v2148 = vld [vmem:[%s7 + $0x28] sm:$0xff]
    %v2149 = vld [vmem:[%s7 + $0x30] sm:$0xff]
    %v2150 = vld [vmem:[%s7 + $0x38] sm:$0xff]
    %v2151 = vld [vmem:[%s8] sm:$0x3]
    %v2153 = vlaneseq
    %v2154 = vshrl.u32 %v2153, 7
    %v2155 = vsub.s32 0, %v2154
    %v2156 = vrot.slane %v2151, %v2155
    %v2157 = vlaneseq
    %v2158 = vshrl.u32 %v2157, 7
    %v2159 = vsub.s32 1, %v2158
    %v2160 = vrot.slane %v2151, %v2159
    %vm2163 = vcmask 261120
    %v2165 = vsel %vm2163, %v2105, 0
    %v2168 = vsel %vm2163, %v2106, 0
    %v2171 = vsel %vm2163, %v2107, 0
    %v2174 = vsel %vm2163, %v2108, 0
    %v2177 = vsel %vm2163, %v2109, 0
    %v2180 = vsel %vm2163, %v2110, 0
    %v2183 = vsel %vm2163, %v2111, 0
    %v2186 = vsel %vm2163, %v2112, 0
    %v2189 = vsel %vm2163, %v2113, 0
    %v2192 = vsel %vm2163, %v2114, 0
    %v2195 = vsel %vm2163, %v2115, 0
    %v2198 = vsel %vm2163, %v2116, 0
    %v2201 = vsel %vm2163, %v2117, 0
    %v2204 = vsel %vm2163, %v2118, 0
    %v2207 = vsel %vm2163, %v2119, 0
    %v2210 = vsel %vm2163, %v2120, 0
    %v2213 = vsel %vm2163, %v2121, 0
    %v2216 = vsel %vm2163, %v2122, 0
    %v2219 = vsel %vm2163, %v2123, 0
    %v2222 = vsel %vm2163, %v2124, 0
    %v2225 = vsel %vm2163, %v2125, 0
    %v2228 = vsel %vm2163, %v2126, 0
    %v2231 = vsel %vm2163, %v2127, 0
    %v2234 = vsel %vm2163, %v2128, 0
    %v2237 = vsel %vm2163, %v2129, 0
    %v2240 = vsel %vm2163, %v2130, 0
    %v2243 = vsel %vm2163, %v2131, 0
    %v2246 = vsel %vm2163, %v2132, 0
    %v2249 = vsel %vm2163, %v2133, 0
    %v2252 = vsel %vm2163, %v2134, 0
    %v2255 = vsel %vm2163, %v2135, 0
    %v2258 = vsel %vm2163, %v2136, 0
    %v2261 = vsel %vm2163, %v2137, 0
    %v2264 = vsel %vm2163, %v2138, 0
    %v2267 = vsel %vm2163, %v2139, 0
    %v2270 = vsel %vm2163, %v2140, 0
    %v2273 = vsel %vm2163, %v2141, 0
    %v2276 = vsel %vm2163, %v2142, 0
    %2278 = vmatprep.subr.mxu0 0.0
    %2279 = vmatpush1.msra.mxu0 0.0
    %2280 = vmatprep.subr.mxu0 0.0
    %2281 = vmatpush1.msra.mxu0 0.0
    %2282 = vmatprep.subr.mxu0 0.0
    %2283 = vmatpush1.msra.mxu0 0.0
    %2284 = vmatprep.subr.mxu0 0.0
    %2285 = vmatpush1.msra.mxu0 0.0
    %2286 = vmatprep.subr.mxu0 0.0
    %2287 = vmatpush1.msra.mxu0 0.0
    %2288 = vmatprep.subr.mxu0 0.0
    %2289 = vmatpush1.msra.mxu0 0.0
    %2290 = vmatprep.subr.mxu0 0.0
    %2291 = vmatpush1.msra.mxu0 0.0
    %2292 = vmatprep.subr.mxu0 0.0
    %2293 = vmatpush1.msra.mxu0 0.0
    %2294 = vmatprep.subr.mxu0 0.0
    %2295 = vmatpush1.msra.mxu0 0.0
    %2296 = vmatprep.subr.mxu0 0.0
    %2297 = vmatpush1.msra.mxu0 0.0
    %2298 = vmatprep.subr.mxu0 0.0
    %2299 = vmatpush1.msra.mxu0 0.0
    %2300 = vmatprep.subr.mxu0 0.0
    %2301 = vmatpush1.msra.mxu0 0.0
    %2302 = vmatprep.subr.mxu0 %v2150
    %2303 = vmatpush1.msra.mxu0 %v2149
    %2304 = vmatprep.subr.mxu0 %v2148
    %2305 = vmatpush1.msra.mxu0 %v2147
    %2306 = vmatprep.subr.mxu0 %v2146
    %2307 = vmatpush1.msra.mxu0 %v2145
    %2308 = vmatprep.subr.mxu0 %v2144
    %2309 = vmatpush1.msra.mxu0 %v2143
    %2310 = vmatprep.subr.mxu0 0.0
    %2311 = vmatpush2.msra.mxu0 0.0
    %2312 = vmatprep.subr.mxu0 0.0
    %2313 = vmatpush2.msra.mxu0 0.0
    %2314 = vmatprep.subr.mxu0 0.0
    %2315 = vmatpush2.msra.mxu0 0.0
    %2316 = vmatprep.subr.mxu0 0.0
    %2317 = vmatpush2.msra.mxu0 0.0
    %2318 = vmatprep.subr.mxu0 0.0
    %2319 = vmatpush2.msra.mxu0 0.0
    %2320 = vmatprep.subr.mxu0 0.0
    %2321 = vmatpush2.msra.mxu0 0.0
    %2322 = vmatprep.subr.mxu0 0.0
    %2323 = vmatpush2.msra.mxu0 0.0
    %2324 = vmatprep.subr.mxu0 0.0
    %2325 = vmatpush2.msra.mxu0 0.0
    %2326 = vmatprep.subr.mxu0 0.0
    %2327 = vmatpush2.msra.mxu0 0.0
    %2328 = vmatprep.subr.mxu0 0.0
    %2329 = vmatpush2.msra.mxu0 0.0
    %2330 = vmatprep.subr.mxu0 0.0
    %2331 = vmatpush2.msra.mxu0 0.0
    %2332 = vmatprep.subr.mxu0 0.0
    %2333 = vmatpush2.msra.mxu0 0.0
    %2334 = vmatprep.subr.mxu0 0.0
    %2335 = vmatpush2.msra.mxu0 0.0
    %2336 = vmatprep.subr.mxu0 0.0
    %2337 = vmatpush2.msra.mxu0 0.0
    %2338 = vmatprep.subr.mxu0 0.0
    %2339 = vmatpush2.msra.mxu0 0.0
    %2340 = vmatprep.subr.mxu0 0.0
    %2341 = vmatpush2.msra.mxu0 0.0
    %2342 = vmatprep.mubr.f32.mxu0 0.0
    %2343 = vmatmul.mubr.f32.gmra.mxu0 %v2165
    %v2344 = vpop.f32.mrf.mxu0
    %v2345 = vadd.f32 %v2156, %v2344
    %v2346 = vpop.f32.mrf.mxu0
    %v2347 = vadd.f32 %v2160, %v2346
    %2348 = vmatprep.mubr.f32.mxu0 0.0
    %2349 = vmatmul.mubr.f32.gmra.mxu0 %v2168
    %v2350 = vpop.f32.mrf.mxu0
    %v2351 = vadd.f32 %v2156, %v2350
    %v2352 = vpop.f32.mrf.mxu0
    %v2353 = vadd.f32 %v2160, %v2352
    %2354 = vmatprep.mubr.f32.mxu0 0.0
    %2355 = vmatmul.mubr.f32.gmra.mxu0 %v2171
    %v2356 = vpop.f32.mrf.mxu0
    %v2357 = vadd.f32 %v2156, %v2356
    %v2358 = vpop.f32.mrf.mxu0
    %v2359 = vadd.f32 %v2160, %v2358
    %2360 = vmatprep.mubr.f32.mxu0 0.0
    %2361 = vmatmul.mubr.f32.gmra.mxu0 %v2174
    %v2362 = vpop.f32.mrf.mxu0
    %v2363 = vadd.f32 %v2156, %v2362
    %v2364 = vpop.f32.mrf.mxu0
    %v2365 = vadd.f32 %v2160, %v2364
    %2366 = vmatprep.mubr.f32.mxu0 0.0
    %2367 = vmatmul.mubr.f32.gmra.mxu0 %v2177
    %v2368 = vpop.f32.mrf.mxu0
    %v2369 = vadd.f32 %v2156, %v2368
    %v2370 = vpop.f32.mrf.mxu0
    %v2371 = vadd.f32 %v2160, %v2370
    %2372 = vmatprep.mubr.f32.mxu0 0.0
    %2373 = vmatmul.mubr.f32.gmra.mxu0 %v2180
    %v2374 = vpop.f32.mrf.mxu0
    %v2375 = vadd.f32 %v2156, %v2374
    %v2376 = vpop.f32.mrf.mxu0
    %v2377 = vadd.f32 %v2160, %v2376
    %2378 = vmatprep.mubr.f32.mxu0 0.0
    %2379 = vmatmul.mubr.f32.gmra.mxu0 %v2183
    %v2380 = vpop.f32.mrf.mxu0
    %v2381 = vadd.f32 %v2156, %v2380
    %v2382 = vpop.f32.mrf.mxu0
    %v2383 = vadd.f32 %v2160, %v2382
    %2384 = vmatprep.mubr.f32.mxu0 0.0
    %2385 = vmatmul.mubr.f32.gmra.mxu0 %v2186
    %v2386 = vpop.f32.mrf.mxu0
    %v2387 = vadd.f32 %v2156, %v2386
    %v2388 = vpop.f32.mrf.mxu0
    %v2389 = vadd.f32 %v2160, %v2388
    %2390 = vmatprep.mubr.f32.mxu0 0.0
    %2391 = vmatmul.mubr.f32.gmra.mxu0 %v2189
    %v2392 = vpop.f32.mrf.mxu0
    %v2393 = vadd.f32 %v2156, %v2392
    %v2394 = vpop.f32.mrf.mxu0
    %v2395 = vadd.f32 %v2160, %v2394
    %2396 = vmatprep.mubr.f32.mxu0 0.0
    %2397 = vmatmul.mubr.f32.gmra.mxu0 %v2192
    %v2398 = vpop.f32.mrf.mxu0
    %v2399 = vadd.f32 %v2156, %v2398
    %v2400 = vpop.f32.mrf.mxu0
    %v2401 = vadd.f32 %v2160, %v2400
    %2402 = vmatprep.mubr.f32.mxu0 0.0
    %2403 = vmatmul.mubr.f32.gmra.mxu0 %v2195
    %v2404 = vpop.f32.mrf.mxu0
    %v2405 = vadd.f32 %v2156, %v2404
    %v2406 = vpop.f32.mrf.mxu0
    %v2407 = vadd.f32 %v2160, %v2406
    %2408 = vmatprep.mubr.f32.mxu0 0.0
    %2409 = vmatmul.mubr.f32.gmra.mxu0 %v2198
    %v2410 = vpop.f32.mrf.mxu0
    %v2411 = vadd.f32 %v2156, %v2410
    %v2412 = vpop.f32.mrf.mxu0
    %v2413 = vadd.f32 %v2160, %v2412
    %2414 = vmatprep.mubr.f32.mxu0 0.0
    %2415 = vmatmul.mubr.f32.gmra.mxu0 %v2201
    %v2416 = vpop.f32.mrf.mxu0
    %v2417 = vadd.f32 %v2156, %v2416
    %v2418 = vpop.f32.mrf.mxu0
    %v2419 = vadd.f32 %v2160, %v2418
    %2420 = vmatprep.mubr.f32.mxu0 0.0
    %2421 = vmatmul.mubr.f32.gmra.mxu0 %v2204
    %v2422 = vpop.f32.mrf.mxu0
    %v2423 = vadd.f32 %v2156, %v2422
    %v2424 = vpop.f32.mrf.mxu0
    %v2425 = vadd.f32 %v2160, %v2424
    %2426 = vmatprep.mubr.f32.mxu0 0.0
    %2427 = vmatmul.mubr.f32.gmra.mxu0 %v2207
    %v2428 = vpop.f32.mrf.mxu0
    %v2429 = vadd.f32 %v2156, %v2428
    %v2430 = vpop.f32.mrf.mxu0
    %v2431 = vadd.f32 %v2160, %v2430
    %2432 = vmatprep.mubr.f32.mxu0 0.0
    %2433 = vmatmul.mubr.f32.gmra.mxu0 %v2210
    %v2434 = vpop.f32.mrf.mxu0
    %v2435 = vadd.f32 %v2156, %v2434
    %v2436 = vpop.f32.mrf.mxu0
    %v2437 = vadd.f32 %v2160, %v2436
    %2438 = vmatprep.mubr.f32.mxu0 0.0
    %2439 = vmatmul.mubr.f32.gmra.mxu0 %v2213
    %v2440 = vpop.f32.mrf.mxu0
    %v2441 = vadd.f32 %v2156, %v2440
    %v2442 = vpop.f32.mrf.mxu0
    %v2443 = vadd.f32 %v2160, %v2442
    %2444 = vmatprep.mubr.f32.mxu0 0.0
    %2445 = vmatmul.mubr.f32.gmra.mxu0 %v2216
    %v2446 = vpop.f32.mrf.mxu0
    %v2447 = vadd.f32 %v2156, %v2446
    %v2448 = vpop.f32.mrf.mxu0
    %v2449 = vadd.f32 %v2160, %v2448
    %2450 = vmatprep.mubr.f32.mxu0 0.0
    %2451 = vmatmul.mubr.f32.gmra.mxu0 %v2219
    %v2452 = vpop.f32.mrf.mxu0
    %v2453 = vadd.f32 %v2156, %v2452
    %v2454 = vpop.f32.mrf.mxu0
    %v2455 = vadd.f32 %v2160, %v2454
    %2456 = vmatprep.mubr.f32.mxu0 0.0
    %2457 = vmatmul.mubr.f32.gmra.mxu0 %v2222
    %v2458 = vpop.f32.mrf.mxu0
    %v2459 = vadd.f32 %v2156, %v2458
    %v2460 = vpop.f32.mrf.mxu0
    %v2461 = vadd.f32 %v2160, %v2460
    %2462 = vmatprep.mubr.f32.mxu0 0.0
    %2463 = vmatmul.mubr.f32.gmra.mxu0 %v2225
    %v2464 = vpop.f32.mrf.mxu0
    %v2465 = vadd.f32 %v2156, %v2464
    %v2466 = vpop.f32.mrf.mxu0
    %v2467 = vadd.f32 %v2160, %v2466
    %2468 = vmatprep.mubr.f32.mxu0 0.0
    %2469 = vmatmul.mubr.f32.gmra.mxu0 %v2228
    %v2470 = vpop.f32.mrf.mxu0
    %v2471 = vadd.f32 %v2156, %v2470
    %v2472 = vpop.f32.mrf.mxu0
    %v2473 = vadd.f32 %v2160, %v2472
    %2474 = vmatprep.mubr.f32.mxu0 0.0
    %2475 = vmatmul.mubr.f32.gmra.mxu0 %v2231
    %v2476 = vpop.f32.mrf.mxu0
    %v2477 = vadd.f32 %v2156, %v2476
    %v2478 = vpop.f32.mrf.mxu0
    %v2479 = vadd.f32 %v2160, %v2478
    %2480 = vmatprep.mubr.f32.mxu0 0.0
    %2481 = vmatmul.mubr.f32.gmra.mxu0 %v2234
    %v2482 = vpop.f32.mrf.mxu0
    %v2483 = vadd.f32 %v2156, %v2482
    %v2484 = vpop.f32.mrf.mxu0
    %v2485 = vadd.f32 %v2160, %v2484
    %2486 = vmatprep.mubr.f32.mxu0 0.0
    %2487 = vmatmul.mubr.f32.gmra.mxu0 %v2237
    %v2488 = vpop.f32.mrf.mxu0
    %v2489 = vadd.f32 %v2156, %v2488
    %v2490 = vpop.f32.mrf.mxu0
    %v2491 = vadd.f32 %v2160, %v2490
    %2492 = vmatprep.mubr.f32.mxu0 0.0
    %2493 = vmatmul.mubr.f32.gmra.mxu0 %v2240
    %v2494 = vpop.f32.mrf.mxu0
    %v2495 = vadd.f32 %v2156, %v2494
    %v2496 = vpop.f32.mrf.mxu0
    %v2497 = vadd.f32 %v2160, %v2496
    %2498 = vmatprep.mubr.f32.mxu0 0.0
    %2499 = vmatmul.mubr.f32.gmra.mxu0 %v2243
    %v2500 = vpop.f32.mrf.mxu0
    %v2501 = vadd.f32 %v2156, %v2500
    %v2502 = vpop.f32.mrf.mxu0
    %v2503 = vadd.f32 %v2160, %v2502
    %2504 = vmatprep.mubr.f32.mxu0 0.0
    %2505 = vmatmul.mubr.f32.gmra.mxu0 %v2246
    %v2506 = vpop.f32.mrf.mxu0
    %v2507 = vadd.f32 %v2156, %v2506
    %v2508 = vpop.f32.mrf.mxu0
    %v2509 = vadd.f32 %v2160, %v2508
    %2510 = vmatprep.mubr.f32.mxu0 0.0
    %2511 = vmatmul.mubr.f32.gmra.mxu0 %v2249
    %v2512 = vpop.f32.mrf.mxu0
    %v2513 = vadd.f32 %v2156, %v2512
    %v2514 = vpop.f32.mrf.mxu0
    %v2515 = vadd.f32 %v2160, %v2514
    %2516 = vmatprep.mubr.f32.mxu0 0.0
    %2517 = vmatmul.mubr.f32.gmra.mxu0 %v2252
    %v2518 = vpop.f32.mrf.mxu0
    %v2519 = vadd.f32 %v2156, %v2518
    %v2520 = vpop.f32.mrf.mxu0
    %v2521 = vadd.f32 %v2160, %v2520
    %2522 = vmatprep.mubr.f32.mxu0 0.0
    %2523 = vmatmul.mubr.f32.gmra.mxu0 %v2255
    %v2524 = vpop.f32.mrf.mxu0
    %v2525 = vadd.f32 %v2156, %v2524
    %v2526 = vpop.f32.mrf.mxu0
    %v2527 = vadd.f32 %v2160, %v2526
    %2528 = vmatprep.mubr.f32.mxu0 0.0
    %2529 = vmatmul.mubr.f32.gmra.mxu0 %v2258
    %v2530 = vpop.f32.mrf.mxu0
    %v2531 = vadd.f32 %v2156, %v2530
    %v2532 = vpop.f32.mrf.mxu0
    %v2533 = vadd.f32 %v2160, %v2532
    %2534 = vmatprep.mubr.f32.mxu0 0.0
    %2535 = vmatmul.mubr.f32.gmra.mxu0 %v2261
    %v2536 = vpop.f32.mrf.mxu0
    %v2537 = vadd.f32 %v2156, %v2536
    %v2538 = vpop.f32.mrf.mxu0
    %v2539 = vadd.f32 %v2160, %v2538
    %2540 = vmatprep.mubr.f32.mxu0 0.0
    %2541 = vmatmul.mubr.f32.gmra.mxu0 %v2264
    %v2542 = vpop.f32.mrf.mxu0
    %v2543 = vadd.f32 %v2156, %v2542
    %v2544 = vpop.f32.mrf.mxu0
    %v2545 = vadd.f32 %v2160, %v2544
    %2546 = vmatprep.mubr.f32.mxu0 0.0
    %2547 = vmatmul.mubr.f32.gmra.mxu0 %v2267
    %v2548 = vpop.f32.mrf.mxu0
    %v2549 = vadd.f32 %v2156, %v2548
    %v2550 = vpop.f32.mrf.mxu0
    %v2551 = vadd.f32 %v2160, %v2550
    %2552 = vmatprep.mubr.f32.mxu0 0.0
    %2553 = vmatmul.mubr.f32.gmra.mxu0 %v2270
    %v2554 = vpop.f32.mrf.mxu0
    %v2555 = vadd.f32 %v2156, %v2554
    %v2556 = vpop.f32.mrf.mxu0
    %v2557 = vadd.f32 %v2160, %v2556
    %2558 = vmatprep.mubr.f32.mxu0 0.0
    %2559 = vmatmul.mubr.f32.gmra.mxu0 %v2273
    %v2560 = vpop.f32.mrf.mxu0
    %v2561 = vadd.f32 %v2156, %v2560
    %v2562 = vpop.f32.mrf.mxu0
    %v2563 = vadd.f32 %v2160, %v2562
    %2564 = vmatprep.mubr.f32.mxu0 0.0
    %2565 = vmatmul.mubr.f32.gmra.mxu0 %v2276
    %v2566 = vpop.f32.mrf.mxu0
    %v2567 = vadd.f32 %v2156, %v2566
    %v2568 = vpop.f32.mrf.mxu0
    %v2569 = vadd.f32 %v2160, %v2568
    %2570 = vdwg.mxu0
    %v2571 = vmax.f32 %v2345, 0.0
    %v2572 = vmax.f32 %v2347, 0.0
    %v2573 = vmax.f32 %v2351, 0.0
    %v2574 = vmax.f32 %v2353, 0.0
    %v2575 = vmax.f32 %v2357, 0.0
    %v2576 = vmax.f32 %v2359, 0.0
    %v2577 = vmax.f32 %v2363, 0.0
    %v2578 = vmax.f32 %v2365, 0.0
    %v2579 = vmax.f32 %v2369, 0.0
    %v2580 = vmax.f32 %v2371, 0.0
    %v2581 = vmax.f32 %v2375, 0.0
    %v2582 = vmax.f32 %v2377, 0.0
    %v2583 = vmax.f32 %v2381, 0.0
    %v2584 = vmax.f32 %v2383, 0.0
    %v2585 = vmax.f32 %v2387, 0.0
    %v2586 = vmax.f32 %v2389, 0.0
    %v2587 = vmax.f32 %v2393, 0.0
    %v2588 = vmax.f32 %v2395, 0.0
    %v2589 = vmax.f32 %v2399, 0.0
    %v2590 = vmax.f32 %v2401, 0.0
    %v2591 = vmax.f32 %v2405, 0.0
    %v2592 = vmax.f32 %v2407, 0.0
    %v2593 = vmax.f32 %v2411, 0.0
    %v2594 = vmax.f32 %v2413, 0.0
    %v2595 = vmax.f32 %v2417, 0.0
    %v2596 = vmax.f32 %v2419, 0.0
    %v2597 = vmax.f32 %v2423, 0.0
    %v2598 = vmax.f32 %v2425, 0.0
    %v2599 = vmax.f32 %v2429, 0.0
    %v2600 = vmax.f32 %v2431, 0.0
    %v2601 = vmax.f32 %v2435, 0.0
    %v2602 = vmax.f32 %v2437, 0.0
    %v2603 = vmax.f32 %v2441, 0.0
    %v2604 = vmax.f32 %v2443, 0.0
    %v2605 = vmax.f32 %v2447, 0.0
    %v2606 = vmax.f32 %v2449, 0.0
    %v2607 = vmax.f32 %v2453, 0.0
    %v2608 = vmax.f32 %v2455, 0.0
    %v2609 = vmax.f32 %v2459, 0.0
    %v2610 = vmax.f32 %v2461, 0.0
    %v2611 = vmax.f32 %v2465, 0.0
    %v2612 = vmax.f32 %v2467, 0.0
    %v2613 = vmax.f32 %v2471, 0.0
    %v2614 = vmax.f32 %v2473, 0.0
    %v2615 = vmax.f32 %v2477, 0.0
    %v2616 = vmax.f32 %v2479, 0.0
    %v2617 = vmax.f32 %v2483, 0.0
    %v2618 = vmax.f32 %v2485, 0.0
    %v2619 = vmax.f32 %v2489, 0.0
    %v2620 = vmax.f32 %v2491, 0.0
    %v2621 = vmax.f32 %v2495, 0.0
    %v2622 = vmax.f32 %v2497, 0.0
    %v2623 = vmax.f32 %v2501, 0.0
    %v2624 = vmax.f32 %v2503, 0.0
    %v2625 = vmax.f32 %v2507, 0.0
    %v2626 = vmax.f32 %v2509, 0.0
    %v2627 = vmax.f32 %v2513, 0.0
    %v2628 = vmax.f32 %v2515, 0.0
    %v2629 = vmax.f32 %v2519, 0.0
    %v2630 = vmax.f32 %v2521, 0.0
    %v2631 = vmax.f32 %v2525, 0.0
    %v2632 = vmax.f32 %v2527, 0.0
    %v2633 = vmax.f32 %v2531, 0.0
    %v2634 = vmax.f32 %v2533, 0.0
    %v2635 = vmax.f32 %v2537, 0.0
    %v2636 = vmax.f32 %v2539, 0.0
    %v2637 = vmax.f32 %v2543, 0.0
    %v2638 = vmax.f32 %v2545, 0.0
    %v2639 = vmax.f32 %v2549, 0.0
    %v2640 = vmax.f32 %v2551, 0.0
    %v2641 = vmax.f32 %v2555, 0.0
    %v2642 = vmax.f32 %v2557, 0.0
    %v2643 = vmax.f32 %v2561, 0.0
    %v2644 = vmax.f32 %v2563, 0.0
    %v2645 = vmax.f32 %v2567, 0.0
    %v2646 = vmax.f32 %v2569, 0.0
    %v2647 = vld [vmem:[#allocation2] sm:$0xff]
    %v2648 = vld [vmem:[#allocation2 + $0x8] sm:$0xff]
    %v2649 = vld [vmem:[#allocation2 + $0x10] sm:$0xff]
    %v2650 = vld [vmem:[#allocation2 + $0x18] sm:$0xff]
    %v2651 = vld [vmem:[#allocation2 + $0x20] sm:$0xff]
    %v2652 = vld [vmem:[#allocation2 + $0x28] sm:$0xff]
    %v2653 = vld [vmem:[#allocation2 + $0x30] sm:$0xff]
    %v2654 = vld [vmem:[#allocation2 + $0x38] sm:$0xff]
    %v2655 = vld [vmem:[#allocation2 + $0x40] sm:$0xff]
    %v2656 = vld [vmem:[#allocation2 + $0x48] sm:$0xff]
    %v2657 = vld [vmem:[#allocation2 + $0x50] sm:$0xff]
    %v2658 = vld [vmem:[#allocation2 + $0x58] sm:$0xff]
    %v2659 = vld [vmem:[#allocation2 + $0x60] sm:$0xff]
    %v2660 = vld [vmem:[#allocation2 + $0x68] sm:$0xff]
    %v2661 = vld [vmem:[#allocation2 + $0x70] sm:$0xff]
    %v2662 = vld [vmem:[#allocation2 + $0x78] sm:$0xff]
    %v2663 = vld [vmem:[#allocation2 + $0x80] sm:$0xff]
    %v2664 = vld [vmem:[#allocation2 + $0x88] sm:$0xff]
    %v2665 = vld [vmem:[#allocation2 + $0x90] sm:$0xff]
    %v2666 = vld [vmem:[#allocation2 + $0x98] sm:$0xff]
    %v2667 = vld [vmem:[#allocation2 + $0xa0] sm:$0xff]
    %v2668 = vld [vmem:[#allocation2 + $0xa8] sm:$0xff]
    %v2669 = vld [vmem:[#allocation2 + $0xb0] sm:$0xff]
    %v2670 = vld [vmem:[#allocation2 + $0xb8] sm:$0xff]
    %v2671 = vld [vmem:[#allocation2 + $0xc0] sm:$0xff]
    %v2672 = vld [vmem:[#allocation2 + $0xc8] sm:$0xff]
    %v2673 = vld [vmem:[#allocation2 + $0xd0] sm:$0xff]
    %v2674 = vld [vmem:[#allocation2 + $0xd8] sm:$0xff]
    %v2675 = vld [vmem:[#allocation2 + $0xe0] sm:$0xff]
    %v2676 = vld [vmem:[#allocation2 + $0xe8] sm:$0xff]
    %v2677 = vld [vmem:[#allocation2 + $0xf0] sm:$0xff]
    %v2678 = vld [vmem:[#allocation2 + $0xf8] sm:$0xff]
    %v2679 = vld [vmem:[#allocation2 + $0x100] sm:$0xff]
    %v2680 = vld [vmem:[#allocation2 + $0x108] sm:$0xff]
    %v2681 = vld [vmem:[#allocation2 + $0x110] sm:$0xff]
    %v2682 = vld [vmem:[#allocation2 + $0x118] sm:$0xff]
    %v2683 = vld [vmem:[#allocation2 + $0x120] sm:$0xff]
    %v2684 = vld [vmem:[#allocation2 + $0x128] sm:$0xff]
    %v2685 = vld [vmem:[#allocation2 + $0x130] sm:$0xff]
    %v2686 = vld [vmem:[#allocation2 + $0x138] sm:$0xff]
    %v2687 = vld [vmem:[#allocation2 + $0x140] sm:$0xff]
    %v2688 = vld [vmem:[#allocation2 + $0x148] sm:$0xff]
    %v2689 = vld [vmem:[#allocation2 + $0x150] sm:$0xff]
    %v2690 = vld [vmem:[#allocation2 + $0x158] sm:$0xff]
    %v2691 = vld [vmem:[#allocation2 + $0x160] sm:$0xff]
    %v2692 = vld [vmem:[#allocation2 + $0x168] sm:$0xff]
    %v2693 = vld [vmem:[#allocation2 + $0x170] sm:$0xff]
    %v2694 = vld [vmem:[#allocation2 + $0x178] sm:$0xff]
    %v2695 = vld [vmem:[#allocation2 + $0x180] sm:$0xff]
    %v2696 = vld [vmem:[#allocation2 + $0x188] sm:$0xff]
    %v2697 = vld [vmem:[#allocation2 + $0x190] sm:$0xff]
    %v2698 = vld [vmem:[#allocation2 + $0x198] sm:$0xff]
    %v2699 = vld [vmem:[#allocation2 + $0x1a0] sm:$0xff]
    %v2700 = vld [vmem:[#allocation2 + $0x1a8] sm:$0xff]
    %v2701 = vld [vmem:[#allocation2 + $0x1b0] sm:$0xff]
    %v2702 = vld [vmem:[#allocation2 + $0x1b8] sm:$0xff]
    %v2703 = vld [vmem:[#allocation2 + $0x1c0] sm:$0xff]
    %v2704 = vld [vmem:[#allocation2 + $0x1c8] sm:$0xff]
    %v2705 = vld [vmem:[#allocation2 + $0x1d0] sm:$0xff]
    %v2706 = vld [vmem:[#allocation2 + $0x1d8] sm:$0xff]
    %v2707 = vld [vmem:[#allocation2 + $0x1e0] sm:$0xff]
    %v2708 = vld [vmem:[#allocation2 + $0x1e8] sm:$0xff]
    %v2709 = vld [vmem:[#allocation2 + $0x1f0] sm:$0xff]
    %v2710 = vld [vmem:[#allocation2 + $0x1f8] sm:$0xff]
    %v2711 = vld [vmem:[#allocation2 + $0x200] sm:$0xff]
    %v2712 = vld [vmem:[#allocation2 + $0x208] sm:$0xff]
    %v2713 = vld [vmem:[#allocation2 + $0x210] sm:$0xff]
    %v2714 = vld [vmem:[#allocation2 + $0x218] sm:$0xff]
    %v2715 = vld [vmem:[#allocation2 + $0x220] sm:$0xff]
    %v2716 = vld [vmem:[#allocation2 + $0x228] sm:$0xff]
    %v2717 = vld [vmem:[#allocation2 + $0x230] sm:$0xff]
    %v2718 = vld [vmem:[#allocation2 + $0x238] sm:$0xff]
    %v2719 = vld [vmem:[#allocation2 + $0x240] sm:$0xff]
    %v2720 = vld [vmem:[#allocation2 + $0x248] sm:$0xff]
    %v2721 = vld [vmem:[#allocation2 + $0x250] sm:$0xff]
    %v2722 = vld [vmem:[#allocation2 + $0x258] sm:$0xff]
    %v2723 = vld [vmem:[#allocation2 + $0x260] sm:$0xff]
    %v2724 = vld [vmem:[#allocation2 + $0x268] sm:$0xff]
    %v2725 = vld [vmem:[#allocation2 + $0x270] sm:$0xff]
    %v2726 = vld [vmem:[#allocation2 + $0x278] sm:$0xff]
    %v2727 = vld [vmem:[#allocation2 + $0x280] sm:$0xff]
    %v2728 = vld [vmem:[#allocation2 + $0x288] sm:$0xff]
    %v2729 = vld [vmem:[#allocation2 + $0x290] sm:$0xff]
    %v2730 = vld [vmem:[#allocation2 + $0x298] sm:$0xff]
    %v2731 = vld [vmem:[#allocation2 + $0x2a0] sm:$0xff]
    %v2732 = vld [vmem:[#allocation2 + $0x2a8] sm:$0xff]
    %v2733 = vld [vmem:[#allocation2 + $0x2b0] sm:$0xff]
    %v2734 = vld [vmem:[#allocation2 + $0x2b8] sm:$0xff]
    %v2735 = vld [vmem:[#allocation2 + $0x2c0] sm:$0xff]
    %v2736 = vld [vmem:[#allocation2 + $0x2c8] sm:$0xff]
    %v2737 = vld [vmem:[#allocation2 + $0x2d0] sm:$0xff]
    %v2738 = vld [vmem:[#allocation2 + $0x2d8] sm:$0xff]
    %v2739 = vld [vmem:[#allocation2 + $0x2e0] sm:$0xff]
    %v2740 = vld [vmem:[#allocation2 + $0x2e8] sm:$0xff]
    %v2741 = vld [vmem:[#allocation2 + $0x2f0] sm:$0xff]
    %v2742 = vld [vmem:[#allocation2 + $0x2f8] sm:$0xff]
    %v2743 = vld [vmem:[#allocation2 + $0x300] sm:$0xff]
    %v2744 = vld [vmem:[#allocation2 + $0x308] sm:$0xff]
    %v2745 = vld [vmem:[#allocation2 + $0x310] sm:$0xff]
    %v2746 = vld [vmem:[#allocation2 + $0x318] sm:$0xff]
    %v2747 = vld [vmem:[#allocation2 + $0x320] sm:$0xff]
    %v2748 = vld [vmem:[#allocation2 + $0x328] sm:$0xff]
    %v2749 = vld [vmem:[#allocation2 + $0x330] sm:$0xff]
    %v2750 = vld [vmem:[#allocation2 + $0x338] sm:$0xff]
    %v2751 = vld [vmem:[#allocation2 + $0x340] sm:$0xff]
    %v2752 = vld [vmem:[#allocation2 + $0x348] sm:$0xff]
    %v2753 = vld [vmem:[#allocation2 + $0x350] sm:$0xff]
    %v2754 = vld [vmem:[#allocation2 + $0x358] sm:$0xff]
    %v2755 = vld [vmem:[#allocation2 + $0x360] sm:$0xff]
    %v2756 = vld [vmem:[#allocation2 + $0x368] sm:$0xff]
    %v2757 = vld [vmem:[#allocation2 + $0x370] sm:$0xff]
    %v2758 = vld [vmem:[#allocation2 + $0x378] sm:$0xff]
    %v2759 = vld [vmem:[#allocation2 + $0x380] sm:$0xff]
    %v2760 = vld [vmem:[#allocation2 + $0x388] sm:$0xff]
    %v2761 = vld [vmem:[#allocation2 + $0x390] sm:$0xff]
    %v2762 = vld [vmem:[#allocation2 + $0x398] sm:$0xff]
    %v2763 = vld [vmem:[#allocation2 + $0x3a0] sm:$0xff]
    %v2764 = vld [vmem:[#allocation2 + $0x3a8] sm:$0xff]
    %v2765 = vld [vmem:[#allocation2 + $0x3b0] sm:$0xff]
    %v2766 = vld [vmem:[#allocation2 + $0x3b8] sm:$0xff]
    %v2767 = vld [vmem:[#allocation2 + $0x3c0] sm:$0xff]
    %v2768 = vld [vmem:[#allocation2 + $0x3c8] sm:$0xff]
    %v2769 = vld [vmem:[#allocation2 + $0x3d0] sm:$0xff]
    %v2770 = vld [vmem:[#allocation2 + $0x3d8] sm:$0xff]
    %v2771 = vld [vmem:[#allocation2 + $0x3e0] sm:$0xff]
    %v2772 = vld [vmem:[#allocation2 + $0x3e8] sm:$0xff]
    %v2773 = vld [vmem:[#allocation2 + $0x3f0] sm:$0xff]
    %v2774 = vld [vmem:[#allocation2 + $0x3f8] sm:$0xff]
    %v2775 = vld [vmem:[%s10] sm:$0xf]
    %v2777 = vlaneseq
    %v2778 = vshrl.u32 %v2777, 7
    %v2779 = vsub.s32 0, %v2778
    %v2780 = vrot.slane %v2775, %v2779
    %v2781 = vlaneseq
    %v2782 = vshrl.u32 %v2781, 7
    %v2783 = vsub.s32 1, %v2782
    %v2784 = vrot.slane %v2775, %v2783
    %v2785 = vlaneseq
    %v2786 = vshrl.u32 %v2785, 7
    %v2787 = vsub.s32 2, %v2786
    %v2788 = vrot.slane %v2775, %v2787
    %v2789 = vlaneseq
    %v2790 = vshrl.u32 %v2789, 7
    %v2791 = vsub.s32 3, %v2790
    %v2792 = vrot.slane %v2775, %v2791
    %2797 = vmatprep.subr.mxu0 %v2708
    %2798 = vmatpush1.msra.mxu0 %v2707
    %2799 = vmatprep.subr.mxu0 %v2704
    %2800 = vmatpush1.msra.mxu0 %v2703
    %2801 = vmatprep.subr.mxu0 %v2700
    %2802 = vmatpush1.msra.mxu0 %v2699
    %2803 = vmatprep.subr.mxu0 %v2696
    %2804 = vmatpush1.msra.mxu0 %v2695
    %2805 = vmatprep.subr.mxu0 %v2692
    %2806 = vmatpush1.msra.mxu0 %v2691
    %2807 = vmatprep.subr.mxu0 %v2688
    %2808 = vmatpush1.msra.mxu0 %v2687
    %2809 = vmatprep.subr.mxu0 %v2684
    %2810 = vmatpush1.msra.mxu0 %v2683
    %2811 = vmatprep.subr.mxu0 %v2680
    %2812 = vmatpush1.msra.mxu0 %v2679
    %2813 = vmatprep.subr.mxu0 %v2676
    %2814 = vmatpush1.msra.mxu0 %v2675
    %2815 = vmatprep.subr.mxu0 %v2672
    %2816 = vmatpush1.msra.mxu0 %v2671
    %2817 = vmatprep.subr.mxu0 %v2668
    %2818 = vmatpush1.msra.mxu0 %v2667
    %2819 = vmatprep.subr.mxu0 %v2664
    %2820 = vmatpush1.msra.mxu0 %v2663
    %2821 = vmatprep.subr.mxu0 %v2660
    %2822 = vmatpush1.msra.mxu0 %v2659
    %2823 = vmatprep.subr.mxu0 %v2656
    %2824 = vmatpush1.msra.mxu0 %v2655
    %2825 = vmatprep.subr.mxu0 %v2652
    %2826 = vmatpush1.msra.mxu0 %v2651
    %2827 = vmatprep.subr.mxu0 %v2648
    %2828 = vmatpush1.msra.mxu0 %v2647
    %2829 = vmatprep.subr.mxu0 %v2772
    %2830 = vmatpush2.msra.mxu0 %v2771
    %2831 = vmatprep.subr.mxu0 %v2768
    %2832 = vmatpush2.msra.mxu0 %v2767
    %2833 = vmatprep.subr.mxu0 %v2764
    %2834 = vmatpush2.msra.mxu0 %v2763
    %2835 = vmatprep.subr.mxu0 %v2760
    %2836 = vmatpush2.msra.mxu0 %v2759
    %2837 = vmatprep.subr.mxu0 %v2756
    %2838 = vmatpush2.msra.mxu0 %v2755
    %2839 = vmatprep.subr.mxu0 %v2752
    %2840 = vmatpush2.msra.mxu0 %v2751
    %2841 = vmatprep.subr.mxu0 %v2748
    %2842 = vmatpush2.msra.mxu0 %v2747
    %2843 = vmatprep.subr.mxu0 %v2744
    %2844 = vmatpush2.msra.mxu0 %v2743
    %2845 = vmatprep.subr.mxu0 %v2740
    %2846 = vmatpush2.msra.mxu0 %v2739
    %2847 = vmatprep.subr.mxu0 %v2736
    %2848 = vmatpush2.msra.mxu0 %v2735
    %2849 = vmatprep.subr.mxu0 %v2732
    %2850 = vmatpush2.msra.mxu0 %v2731
    %2851 = vmatprep.subr.mxu0 %v2728
    %2852 = vmatpush2.msra.mxu0 %v2727
    %2853 = vmatprep.subr.mxu0 %v2724
    %2854 = vmatpush2.msra.mxu0 %v2723
    %2855 = vmatprep.subr.mxu0 %v2720
    %2856 = vmatpush2.msra.mxu0 %v2719
    %2857 = vmatprep.subr.mxu0 %v2716
    %2858 = vmatpush2.msra.mxu0 %v2715
    %2859 = vmatprep.subr.mxu0 %v2712
    %2860 = vmatpush2.msra.mxu0 %v2711
    %2861 = vmatprep.mubr.f32.mxu0 %v2572
    %2862 = vmatmul.mubr.f32.gmra.mxu0 %v2571
    %v2863 = vpop.f32.mrf.mxu0
    %v2864 = vadd.f32 %v2780, %v2863
    %v2865 = vpop.f32.mrf.mxu0
    %v2866 = vadd.f32 %v2784, %v2865
    %2867 = vmatprep.mubr.f32.mxu0 %v2574
    %2868 = vmatmul.mubr.f32.gmra.mxu0 %v2573
    %v2869 = vpop.f32.mrf.mxu0
    %v2870 = vadd.f32 %v2780, %v2869
    %v2871 = vpop.f32.mrf.mxu0
    %v2872 = vadd.f32 %v2784, %v2871
    %2873 = vmatprep.mubr.f32.mxu0 %v2576
    %2874 = vmatmul.mubr.f32.gmra.mxu0 %v2575
    %v2875 = vpop.f32.mrf.mxu0
    %v2876 = vadd.f32 %v2780, %v2875
    %v2877 = vpop.f32.mrf.mxu0
    %v2878 = vadd.f32 %v2784, %v2877
    %2879 = vmatprep.mubr.f32.mxu0 %v2578
    %2880 = vmatmul.mubr.f32.gmra.mxu0 %v2577
    %v2881 = vpop.f32.mrf.mxu0
    %v2882 = vadd.f32 %v2780, %v2881
    %v2883 = vpop.f32.mrf.mxu0
    %v2884 = vadd.f32 %v2784, %v2883
    %2885 = vmatprep.mubr.f32.mxu0 %v2580
    %2886 = vmatmul.mubr.f32.gmra.mxu0 %v2579
    %v2887 = vpop.f32.mrf.mxu0
    %v2888 = vadd.f32 %v2780, %v2887
    %v2889 = vpop.f32.mrf.mxu0
    %v2890 = vadd.f32 %v2784, %v2889
    %2891 = vmatprep.mubr.f32.mxu0 %v2582
    %2892 = vmatmul.mubr.f32.gmra.mxu0 %v2581
    %v2893 = vpop.f32.mrf.mxu0
    %v2894 = vadd.f32 %v2780, %v2893
    %v2895 = vpop.f32.mrf.mxu0
    %v2896 = vadd.f32 %v2784, %v2895
    %2897 = vmatprep.mubr.f32.mxu0 %v2584
    %2898 = vmatmul.mubr.f32.gmra.mxu0 %v2583
    %v2899 = vpop.f32.mrf.mxu0
    %v2900 = vadd.f32 %v2780, %v2899
    %v2901 = vpop.f32.mrf.mxu0
    %v2902 = vadd.f32 %v2784, %v2901
    %2903 = vmatprep.mubr.f32.mxu0 %v2586
    %2904 = vmatmul.mubr.f32.gmra.mxu0 %v2585
    %v2905 = vpop.f32.mrf.mxu0
    %v2906 = vadd.f32 %v2780, %v2905
    %v2907 = vpop.f32.mrf.mxu0
    %v2908 = vadd.f32 %v2784, %v2907
    %2909 = vmatprep.mubr.f32.mxu0 %v2588
    %2910 = vmatmul.mubr.f32.gmra.mxu0 %v2587
    %v2911 = vpop.f32.mrf.mxu0
    %v2912 = vadd.f32 %v2780, %v2911
    %v2913 = vpop.f32.mrf.mxu0
    %v2914 = vadd.f32 %v2784, %v2913
    %2915 = vmatprep.mubr.f32.mxu0 %v2590
    %2916 = vmatmul.mubr.f32.gmra.mxu0 %v2589
    %v2917 = vpop.f32.mrf.mxu0
    %v2918 = vadd.f32 %v2780, %v2917
    %v2919 = vpop.f32.mrf.mxu0
    %v2920 = vadd.f32 %v2784, %v2919
    %2921 = vmatprep.mubr.f32.mxu0 %v2592
    %2922 = vmatmul.mubr.f32.gmra.mxu0 %v2591
    %v2923 = vpop.f32.mrf.mxu0
    %v2924 = vadd.f32 %v2780, %v2923
    %v2925 = vpop.f32.mrf.mxu0
    %v2926 = vadd.f32 %v2784, %v2925
    %2927 = vmatprep.mubr.f32.mxu0 %v2594
    %2928 = vmatmul.mubr.f32.gmra.mxu0 %v2593
    %v2929 = vpop.f32.mrf.mxu0
    %v2930 = vadd.f32 %v2780, %v2929
    %v2931 = vpop.f32.mrf.mxu0
    %v2932 = vadd.f32 %v2784, %v2931
    %2933 = vmatprep.mubr.f32.mxu0 %v2596
    %2934 = vmatmul.mubr.f32.gmra.mxu0 %v2595
    %v2935 = vpop.f32.mrf.mxu0
    %v2936 = vadd.f32 %v2780, %v2935
    %v2937 = vpop.f32.mrf.mxu0
    %v2938 = vadd.f32 %v2784, %v2937
    %2939 = vmatprep.mubr.f32.mxu0 %v2598
    %2940 = vmatmul.mubr.f32.gmra.mxu0 %v2597
    %v2941 = vpop.f32.mrf.mxu0
    %v2942 = vadd.f32 %v2780, %v2941
    %v2943 = vpop.f32.mrf.mxu0
    %v2944 = vadd.f32 %v2784, %v2943
    %2945 = vmatprep.mubr.f32.mxu0 %v2600
    %2946 = vmatmul.mubr.f32.gmra.mxu0 %v2599
    %v2947 = vpop.f32.mrf.mxu0
    %v2948 = vadd.f32 %v2780, %v2947
    %v2949 = vpop.f32.mrf.mxu0
    %v2950 = vadd.f32 %v2784, %v2949
    %2951 = vmatprep.mubr.f32.mxu0 %v2602
    %2952 = vmatmul.mubr.f32.gmra.mxu0 %v2601
    %v2953 = vpop.f32.mrf.mxu0
    %v2954 = vadd.f32 %v2780, %v2953
    %v2955 = vpop.f32.mrf.mxu0
    %v2956 = vadd.f32 %v2784, %v2955
    %2957 = vmatprep.mubr.f32.mxu0 %v2604
    %2958 = vmatmul.mubr.f32.gmra.mxu0 %v2603
    %v2959 = vpop.f32.mrf.mxu0
    %v2960 = vadd.f32 %v2780, %v2959
    %v2961 = vpop.f32.mrf.mxu0
    %v2962 = vadd.f32 %v2784, %v2961
    %2963 = vmatprep.mubr.f32.mxu0 %v2606
    %2964 = vmatmul.mubr.f32.gmra.mxu0 %v2605
    %v2965 = vpop.f32.mrf.mxu0
    %v2966 = vadd.f32 %v2780, %v2965
    %v2967 = vpop.f32.mrf.mxu0
    %v2968 = vadd.f32 %v2784, %v2967
    %2969 = vmatprep.mubr.f32.mxu0 %v2608
    %2970 = vmatmul.mubr.f32.gmra.mxu0 %v2607
    %v2971 = vpop.f32.mrf.mxu0
    %v2972 = vadd.f32 %v2780, %v2971
    %v2973 = vpop.f32.mrf.mxu0
    %v2974 = vadd.f32 %v2784, %v2973
    %2975 = vmatprep.mubr.f32.mxu0 %v2610
    %2976 = vmatmul.mubr.f32.gmra.mxu0 %v2609
    %v2977 = vpop.f32.mrf.mxu0
    %v2978 = vadd.f32 %v2780, %v2977
    %v2979 = vpop.f32.mrf.mxu0
    %v2980 = vadd.f32 %v2784, %v2979
    %2981 = vmatprep.mubr.f32.mxu0 %v2612
    %2982 = vmatmul.mubr.f32.gmra.mxu0 %v2611
    %v2983 = vpop.f32.mrf.mxu0
    %v2984 = vadd.f32 %v2780, %v2983
    %v2985 = vpop.f32.mrf.mxu0
    %v2986 = vadd.f32 %v2784, %v2985
    %2987 = vmatprep.mubr.f32.mxu0 %v2614
    %2988 = vmatmul.mubr.f32.gmra.mxu0 %v2613
    %v2989 = vpop.f32.mrf.mxu0
    %v2990 = vadd.f32 %v2780, %v2989
    %v2991 = vpop.f32.mrf.mxu0
    %v2992 = vadd.f32 %v2784, %v2991
    %2993 = vmatprep.mubr.f32.mxu0 %v2616
    %2994 = vmatmul.mubr.f32.gmra.mxu0 %v2615
    %v2995 = vpop.f32.mrf.mxu0
    %v2996 = vadd.f32 %v2780, %v2995
    %v2997 = vpop.f32.mrf.mxu0
    %v2998 = vadd.f32 %v2784, %v2997
    %2999 = vmatprep.mubr.f32.mxu0 %v2618
    %3000 = vmatmul.mubr.f32.gmra.mxu0 %v2617
    %v3001 = vpop.f32.mrf.mxu0
    %v3002 = vadd.f32 %v2780, %v3001
    %v3003 = vpop.f32.mrf.mxu0
    %v3004 = vadd.f32 %v2784, %v3003
    %3005 = vmatprep.mubr.f32.mxu0 %v2620
    %3006 = vmatmul.mubr.f32.gmra.mxu0 %v2619
    %v3007 = vpop.f32.mrf.mxu0
    %v3008 = vadd.f32 %v2780, %v3007
    %v3009 = vpop.f32.mrf.mxu0
    %v3010 = vadd.f32 %v2784, %v3009
    %3011 = vmatprep.mubr.f32.mxu0 %v2622
    %3012 = vmatmul.mubr.f32.gmra.mxu0 %v2621
    %v3013 = vpop.f32.mrf.mxu0
    %v3014 = vadd.f32 %v2780, %v3013
    %v3015 = vpop.f32.mrf.mxu0
    %v3016 = vadd.f32 %v2784, %v3015
    %3017 = vmatprep.mubr.f32.mxu0 %v2624
    %3018 = vmatmul.mubr.f32.gmra.mxu0 %v2623
    %v3019 = vpop.f32.mrf.mxu0
    %v3020 = vadd.f32 %v2780, %v3019
    %v3021 = vpop.f32.mrf.mxu0
    %v3022 = vadd.f32 %v2784, %v3021
    %3023 = vmatprep.mubr.f32.mxu0 %v2626
    %3024 = vmatmul.mubr.f32.gmra.mxu0 %v2625
    %v3025 = vpop.f32.mrf.mxu0
    %v3026 = vadd.f32 %v2780, %v3025
    %v3027 = vpop.f32.mrf.mxu0
    %v3028 = vadd.f32 %v2784, %v3027
    %3029 = vmatprep.mubr.f32.mxu0 %v2628
    %3030 = vmatmul.mubr.f32.gmra.mxu0 %v2627
    %v3031 = vpop.f32.mrf.mxu0
    %v3032 = vadd.f32 %v2780, %v3031
    %v3033 = vpop.f32.mrf.mxu0
    %v3034 = vadd.f32 %v2784, %v3033
    %3035 = vmatprep.mubr.f32.mxu0 %v2630
    %3036 = vmatmul.mubr.f32.gmra.mxu0 %v2629
    %v3037 = vpop.f32.mrf.mxu0
    %v3038 = vadd.f32 %v2780, %v3037
    %v3039 = vpop.f32.mrf.mxu0
    %v3040 = vadd.f32 %v2784, %v3039
    %3041 = vmatprep.mubr.f32.mxu0 %v2632
    %3042 = vmatmul.mubr.f32.gmra.mxu0 %v2631
    %v3043 = vpop.f32.mrf.mxu0
    %v3044 = vadd.f32 %v2780, %v3043
    %v3045 = vpop.f32.mrf.mxu0
    %v3046 = vadd.f32 %v2784, %v3045
    %3047 = vmatprep.mubr.f32.mxu0 %v2634
    %3048 = vmatmul.mubr.f32.gmra.mxu0 %v2633
    %v3049 = vpop.f32.mrf.mxu0
    %v3050 = vadd.f32 %v2780, %v3049
    %v3051 = vpop.f32.mrf.mxu0
    %v3052 = vadd.f32 %v2784, %v3051
    %3053 = vmatprep.mubr.f32.mxu0 %v2636
    %3054 = vmatmul.mubr.f32.gmra.mxu0 %v2635
    %v3055 = vpop.f32.mrf.mxu0
    %v3056 = vadd.f32 %v2780, %v3055
    %v3057 = vpop.f32.mrf.mxu0
    %v3058 = vadd.f32 %v2784, %v3057
    %3059 = vmatprep.mubr.f32.mxu0 %v2638
    %3060 = vmatmul.mubr.f32.gmra.mxu0 %v2637
    %v3061 = vpop.f32.mrf.mxu0
    %v3062 = vadd.f32 %v2780, %v3061
    %v3063 = vpop.f32.mrf.mxu0
    %v3064 = vadd.f32 %v2784, %v3063
    %3065 = vmatprep.mubr.f32.mxu0 %v2640
    %3066 = vmatmul.mubr.f32.gmra.mxu0 %v2639
    %v3067 = vpop.f32.mrf.mxu0
    %v3068 = vadd.f32 %v2780, %v3067
    %v3069 = vpop.f32.mrf.mxu0
    %v3070 = vadd.f32 %v2784, %v3069
    %3071 = vmatprep.mubr.f32.mxu0 %v2642
    %3072 = vmatmul.mubr.f32.gmra.mxu0 %v2641
    %v3073 = vpop.f32.mrf.mxu0
    %v3074 = vadd.f32 %v2780, %v3073
    %v3075 = vpop.f32.mrf.mxu0
    %v3076 = vadd.f32 %v2784, %v3075
    %3077 = vmatprep.mubr.f32.mxu0 %v2644
    %3078 = vmatmul.mubr.f32.gmra.mxu0 %v2643
    %v3079 = vpop.f32.mrf.mxu0
    %v3080 = vadd.f32 %v2780, %v3079
    %v3081 = vpop.f32.mrf.mxu0
    %v3082 = vadd.f32 %v2784, %v3081
    %3083 = vmatprep.mubr.f32.mxu0 %v2646
    %3084 = vmatmul.mubr.f32.gmra.mxu0 %v2645
    %v3085 = vpop.f32.mrf.mxu0
    %v3086 = vadd.f32 %v2780, %v3085
    %v3087 = vpop.f32.mrf.mxu0
    %v3088 = vadd.f32 %v2784, %v3087
    %3089 = vdwg.mxu0
    %3090 = vmatprep.subr.mxu0 %v2710
    %3091 = vmatpush1.msra.mxu0 %v2709
    %3092 = vmatprep.subr.mxu0 %v2706
    %3093 = vmatpush1.msra.mxu0 %v2705
    %3094 = vmatprep.subr.mxu0 %v2702
    %3095 = vmatpush1.msra.mxu0 %v2701
    %3096 = vmatprep.subr.mxu0 %v2698
    %3097 = vmatpush1.msra.mxu0 %v2697
    %3098 = vmatprep.subr.mxu0 %v2694
    %3099 = vmatpush1.msra.mxu0 %v2693
    %3100 = vmatprep.subr.mxu0 %v2690
    %3101 = vmatpush1.msra.mxu0 %v2689
    %3102 = vmatprep.subr.mxu0 %v2686
    %3103 = vmatpush1.msra.mxu0 %v2685
    %3104 = vmatprep.subr.mxu0 %v2682
    %3105 = vmatpush1.msra.mxu0 %v2681
    %3106 = vmatprep.subr.mxu0 %v2678
    %3107 = vmatpush1.msra.mxu0 %v2677
    %3108 = vmatprep.subr.mxu0 %v2674
    %3109 = vmatpush1.msra.mxu0 %v2673
    %3110 = vmatprep.subr.mxu0 %v2670
    %3111 = vmatpush1.msra.mxu0 %v2669
    %3112 = vmatprep.subr.mxu0 %v2666
    %3113 = vmatpush1.msra.mxu0 %v2665
    %3114 = vmatprep.subr.mxu0 %v2662
    %3115 = vmatpush1.msra.mxu0 %v2661
    %3116 = vmatprep.subr.mxu0 %v2658
    %3117 = vmatpush1.msra.mxu0 %v2657
    %3118 = vmatprep.subr.mxu0 %v2654
    %3119 = vmatpush1.msra.mxu0 %v2653
    %3120 = vmatprep.subr.mxu0 %v2650
    %3121 = vmatpush1.msra.mxu0 %v2649
    %3122 = vmatprep.subr.mxu0 %v2774
    %3123 = vmatpush2.msra.mxu0 %v2773
    %3124 = vmatprep.subr.mxu0 %v2770
    %3125 = vmatpush2.msra.mxu0 %v2769
    %3126 = vmatprep.subr.mxu0 %v2766
    %3127 = vmatpush2.msra.mxu0 %v2765
    %3128 = vmatprep.subr.mxu0 %v2762
    %3129 = vmatpush2.msra.mxu0 %v2761
    %3130 = vmatprep.subr.mxu0 %v2758
    %3131 = vmatpush2.msra.mxu0 %v2757
    %3132 = vmatprep.subr.mxu0 %v2754
    %3133 = vmatpush2.msra.mxu0 %v2753
    %3134 = vmatprep.subr.mxu0 %v2750
    %3135 = vmatpush2.msra.mxu0 %v2749
    %3136 = vmatprep.subr.mxu0 %v2746
    %3137 = vmatpush2.msra.mxu0 %v2745
    %3138 = vmatprep.subr.mxu0 %v2742
    %3139 = vmatpush2.msra.mxu0 %v2741
    %3140 = vmatprep.subr.mxu0 %v2738
    %3141 = vmatpush2.msra.mxu0 %v2737
    %3142 = vmatprep.subr.mxu0 %v2734
    %3143 = vmatpush2.msra.mxu0 %v2733
    %3144 = vmatprep.subr.mxu0 %v2730
    %3145 = vmatpush2.msra.mxu0 %v2729
    %3146 = vmatprep.subr.mxu0 %v2726
    %3147 = vmatpush2.msra.mxu0 %v2725
    %3148 = vmatprep.subr.mxu0 %v2722
    %3149 = vmatpush2.msra.mxu0 %v2721
    %3150 = vmatprep.subr.mxu0 %v2718
    %3151 = vmatpush2.msra.mxu0 %v2717
    %3152 = vmatprep.subr.mxu0 %v2714
    %3153 = vmatpush2.msra.mxu0 %v2713
    %3154 = vmatprep.mubr.f32.mxu0 %v2572
    %3155 = vmatmul.mubr.f32.gmra.mxu0 %v2571
    %v3156 = vpop.f32.mrf.mxu0
    %v3157 = vadd.f32 %v2788, %v3156
    %v3158 = vpop.f32.mrf.mxu0
    %v3159 = vadd.f32 %v2792, %v3158
    %3160 = vmatprep.mubr.f32.mxu0 %v2574
    %3161 = vmatmul.mubr.f32.gmra.mxu0 %v2573
    %v3162 = vpop.f32.mrf.mxu0
    %v3163 = vadd.f32 %v2788, %v3162
    %v3164 = vpop.f32.mrf.mxu0
    %v3165 = vadd.f32 %v2792, %v3164
    %3166 = vmatprep.mubr.f32.mxu0 %v2576
    %3167 = vmatmul.mubr.f32.gmra.mxu0 %v2575
    %v3168 = vpop.f32.mrf.mxu0
    %v3169 = vadd.f32 %v2788, %v3168
    %v3170 = vpop.f32.mrf.mxu0
    %v3171 = vadd.f32 %v2792, %v3170
    %3172 = vmatprep.mubr.f32.mxu0 %v2578
    %3173 = vmatmul.mubr.f32.gmra.mxu0 %v2577
    %v3174 = vpop.f32.mrf.mxu0
    %v3175 = vadd.f32 %v2788, %v3174
    %v3176 = vpop.f32.mrf.mxu0
    %v3177 = vadd.f32 %v2792, %v3176
    %3178 = vmatprep.mubr.f32.mxu0 %v2580
    %3179 = vmatmul.mubr.f32.gmra.mxu0 %v2579
    %v3180 = vpop.f32.mrf.mxu0
    %v3181 = vadd.f32 %v2788, %v3180
    %v3182 = vpop.f32.mrf.mxu0
    %v3183 = vadd.f32 %v2792, %v3182
    %3184 = vmatprep.mubr.f32.mxu0 %v2582
    %3185 = vmatmul.mubr.f32.gmra.mxu0 %v2581
    %v3186 = vpop.f32.mrf.mxu0
    %v3187 = vadd.f32 %v2788, %v3186
    %v3188 = vpop.f32.mrf.mxu0
    %v3189 = vadd.f32 %v2792, %v3188
    %3190 = vmatprep.mubr.f32.mxu0 %v2584
    %3191 = vmatmul.mubr.f32.gmra.mxu0 %v2583
    %v3192 = vpop.f32.mrf.mxu0
    %v3193 = vadd.f32 %v2788, %v3192
    %v3194 = vpop.f32.mrf.mxu0
    %v3195 = vadd.f32 %v2792, %v3194
    %3196 = vmatprep.mubr.f32.mxu0 %v2586
    %3197 = vmatmul.mubr.f32.gmra.mxu0 %v2585
    %v3198 = vpop.f32.mrf.mxu0
    %v3199 = vadd.f32 %v2788, %v3198
    %v3200 = vpop.f32.mrf.mxu0
    %v3201 = vadd.f32 %v2792, %v3200
    %3202 = vmatprep.mubr.f32.mxu0 %v2588
    %3203 = vmatmul.mubr.f32.gmra.mxu0 %v2587
    %v3204 = vpop.f32.mrf.mxu0
    %v3205 = vadd.f32 %v2788, %v3204
    %v3206 = vpop.f32.mrf.mxu0
    %v3207 = vadd.f32 %v2792, %v3206
    %3208 = vmatprep.mubr.f32.mxu0 %v2590
    %3209 = vmatmul.mubr.f32.gmra.mxu0 %v2589
    %v3210 = vpop.f32.mrf.mxu0
    %v3211 = vadd.f32 %v2788, %v3210
    %v3212 = vpop.f32.mrf.mxu0
    %v3213 = vadd.f32 %v2792, %v3212
    %3214 = vmatprep.mubr.f32.mxu0 %v2592
    %3215 = vmatmul.mubr.f32.gmra.mxu0 %v2591
    %v3216 = vpop.f32.mrf.mxu0
    %v3217 = vadd.f32 %v2788, %v3216
    %v3218 = vpop.f32.mrf.mxu0
    %v3219 = vadd.f32 %v2792, %v3218
    %3220 = vmatprep.mubr.f32.mxu0 %v2594
    %3221 = vmatmul.mubr.f32.gmra.mxu0 %v2593
    %v3222 = vpop.f32.mrf.mxu0
    %v3223 = vadd.f32 %v2788, %v3222
    %v3224 = vpop.f32.mrf.mxu0
    %v3225 = vadd.f32 %v2792, %v3224
    %3226 = vmatprep.mubr.f32.mxu0 %v2596
    %3227 = vmatmul.mubr.f32.gmra.mxu0 %v2595
    %v3228 = vpop.f32.mrf.mxu0
    %v3229 = vadd.f32 %v2788, %v3228
    %v3230 = vpop.f32.mrf.mxu0
    %v3231 = vadd.f32 %v2792, %v3230
    %3232 = vmatprep.mubr.f32.mxu0 %v2598
    %3233 = vmatmul.mubr.f32.gmra.mxu0 %v2597
    %v3234 = vpop.f32.mrf.mxu0
    %v3235 = vadd.f32 %v2788, %v3234
    %v3236 = vpop.f32.mrf.mxu0
    %v3237 = vadd.f32 %v2792, %v3236
    %3238 = vmatprep.mubr.f32.mxu0 %v2600
    %3239 = vmatmul.mubr.f32.gmra.mxu0 %v2599
    %v3240 = vpop.f32.mrf.mxu0
    %v3241 = vadd.f32 %v2788, %v3240
    %v3242 = vpop.f32.mrf.mxu0
    %v3243 = vadd.f32 %v2792, %v3242
    %3244 = vmatprep.mubr.f32.mxu0 %v2602
    %3245 = vmatmul.mubr.f32.gmra.mxu0 %v2601
    %v3246 = vpop.f32.mrf.mxu0
    %v3247 = vadd.f32 %v2788, %v3246
    %v3248 = vpop.f32.mrf.mxu0
    %v3249 = vadd.f32 %v2792, %v3248
    %3250 = vmatprep.mubr.f32.mxu0 %v2604
    %3251 = vmatmul.mubr.f32.gmra.mxu0 %v2603
    %v3252 = vpop.f32.mrf.mxu0
    %v3253 = vadd.f32 %v2788, %v3252
    %v3254 = vpop.f32.mrf.mxu0
    %v3255 = vadd.f32 %v2792, %v3254
    %3256 = vmatprep.mubr.f32.mxu0 %v2606
    %3257 = vmatmul.mubr.f32.gmra.mxu0 %v2605
    %v3258 = vpop.f32.mrf.mxu0
    %v3259 = vadd.f32 %v2788, %v3258
    %v3260 = vpop.f32.mrf.mxu0
    %v3261 = vadd.f32 %v2792, %v3260
    %3262 = vmatprep.mubr.f32.mxu0 %v2608
    %3263 = vmatmul.mubr.f32.gmra.mxu0 %v2607
    %v3264 = vpop.f32.mrf.mxu0
    %v3265 = vadd.f32 %v2788, %v3264
    %v3266 = vpop.f32.mrf.mxu0
    %v3267 = vadd.f32 %v2792, %v3266
    %3268 = vmatprep.mubr.f32.mxu0 %v2610
    %3269 = vmatmul.mubr.f32.gmra.mxu0 %v2609
    %v3270 = vpop.f32.mrf.mxu0
    %v3271 = vadd.f32 %v2788, %v3270
    %v3272 = vpop.f32.mrf.mxu0
    %v3273 = vadd.f32 %v2792, %v3272
    %3274 = vmatprep.mubr.f32.mxu0 %v2612
    %3275 = vmatmul.mubr.f32.gmra.mxu0 %v2611
    %v3276 = vpop.f32.mrf.mxu0
    %v3277 = vadd.f32 %v2788, %v3276
    %v3278 = vpop.f32.mrf.mxu0
    %v3279 = vadd.f32 %v2792, %v3278
    %3280 = vmatprep.mubr.f32.mxu0 %v2614
    %3281 = vmatmul.mubr.f32.gmra.mxu0 %v2613
    %v3282 = vpop.f32.mrf.mxu0
    %v3283 = vadd.f32 %v2788, %v3282
    %v3284 = vpop.f32.mrf.mxu0
    %v3285 = vadd.f32 %v2792, %v3284
    %3286 = vmatprep.mubr.f32.mxu0 %v2616
    %3287 = vmatmul.mubr.f32.gmra.mxu0 %v2615
    %v3288 = vpop.f32.mrf.mxu0
    %v3289 = vadd.f32 %v2788, %v3288
    %v3290 = vpop.f32.mrf.mxu0
    %v3291 = vadd.f32 %v2792, %v3290
    %3292 = vmatprep.mubr.f32.mxu0 %v2618
    %3293 = vmatmul.mubr.f32.gmra.mxu0 %v2617
    %v3294 = vpop.f32.mrf.mxu0
    %v3295 = vadd.f32 %v2788, %v3294
    %v3296 = vpop.f32.mrf.mxu0
    %v3297 = vadd.f32 %v2792, %v3296
    %3298 = vmatprep.mubr.f32.mxu0 %v2620
    %3299 = vmatmul.mubr.f32.gmra.mxu0 %v2619
    %v3300 = vpop.f32.mrf.mxu0
    %v3301 = vadd.f32 %v2788, %v3300
    %v3302 = vpop.f32.mrf.mxu0
    %v3303 = vadd.f32 %v2792, %v3302
    %3304 = vmatprep.mubr.f32.mxu0 %v2622
    %3305 = vmatmul.mubr.f32.gmra.mxu0 %v2621
    %v3306 = vpop.f32.mrf.mxu0
    %v3307 = vadd.f32 %v2788, %v3306
    %v3308 = vpop.f32.mrf.mxu0
    %v3309 = vadd.f32 %v2792, %v3308
    %3310 = vmatprep.mubr.f32.mxu0 %v2624
    %3311 = vmatmul.mubr.f32.gmra.mxu0 %v2623
    %v3312 = vpop.f32.mrf.mxu0
    %v3313 = vadd.f32 %v2788, %v3312
    %v3314 = vpop.f32.mrf.mxu0
    %v3315 = vadd.f32 %v2792, %v3314
    %3316 = vmatprep.mubr.f32.mxu0 %v2626
    %3317 = vmatmul.mubr.f32.gmra.mxu0 %v2625
    %v3318 = vpop.f32.mrf.mxu0
    %v3319 = vadd.f32 %v2788, %v3318
    %v3320 = vpop.f32.mrf.mxu0
    %v3321 = vadd.f32 %v2792, %v3320
    %3322 = vmatprep.mubr.f32.mxu0 %v2628
    %3323 = vmatmul.mubr.f32.gmra.mxu0 %v2627
    %v3324 = vpop.f32.mrf.mxu0
    %v3325 = vadd.f32 %v2788, %v3324
    %v3326 = vpop.f32.mrf.mxu0
    %v3327 = vadd.f32 %v2792, %v3326
    %3328 = vmatprep.mubr.f32.mxu0 %v2630
    %3329 = vmatmul.mubr.f32.gmra.mxu0 %v2629
    %v3330 = vpop.f32.mrf.mxu0
    %v3331 = vadd.f32 %v2788, %v3330
    %v3332 = vpop.f32.mrf.mxu0
    %v3333 = vadd.f32 %v2792, %v3332
    %3334 = vmatprep.mubr.f32.mxu0 %v2632
    %3335 = vmatmul.mubr.f32.gmra.mxu0 %v2631
    %v3336 = vpop.f32.mrf.mxu0
    %v3337 = vadd.f32 %v2788, %v3336
    %v3338 = vpop.f32.mrf.mxu0
    %v3339 = vadd.f32 %v2792, %v3338
    %3340 = vmatprep.mubr.f32.mxu0 %v2634
    %3341 = vmatmul.mubr.f32.gmra.mxu0 %v2633
    %v3342 = vpop.f32.mrf.mxu0
    %v3343 = vadd.f32 %v2788, %v3342
    %v3344 = vpop.f32.mrf.mxu0
    %v3345 = vadd.f32 %v2792, %v3344
    %3346 = vmatprep.mubr.f32.mxu0 %v2636
    %3347 = vmatmul.mubr.f32.gmra.mxu0 %v2635
    %v3348 = vpop.f32.mrf.mxu0
    %v3349 = vadd.f32 %v2788, %v3348
    %v3350 = vpop.f32.mrf.mxu0
    %v3351 = vadd.f32 %v2792, %v3350
    %3352 = vmatprep.mubr.f32.mxu0 %v2638
    %3353 = vmatmul.mubr.f32.gmra.mxu0 %v2637
    %v3354 = vpop.f32.mrf.mxu0
    %v3355 = vadd.f32 %v2788, %v3354
    %v3356 = vpop.f32.mrf.mxu0
    %v3357 = vadd.f32 %v2792, %v3356
    %3358 = vmatprep.mubr.f32.mxu0 %v2640
    %3359 = vmatmul.mubr.f32.gmra.mxu0 %v2639
    %v3360 = vpop.f32.mrf.mxu0
    %v3361 = vadd.f32 %v2788, %v3360
    %v3362 = vpop.f32.mrf.mxu0
    %v3363 = vadd.f32 %v2792, %v3362
    %3364 = vmatprep.mubr.f32.mxu0 %v2642
    %3365 = vmatmul.mubr.f32.gmra.mxu0 %v2641
    %v3366 = vpop.f32.mrf.mxu0
    %v3367 = vadd.f32 %v2788, %v3366
    %v3368 = vpop.f32.mrf.mxu0
    %v3369 = vadd.f32 %v2792, %v3368
    %3370 = vmatprep.mubr.f32.mxu0 %v2644
    %3371 = vmatmul.mubr.f32.gmra.mxu0 %v2643
    %v3372 = vpop.f32.mrf.mxu0
    %v3373 = vadd.f32 %v2788, %v3372
    %v3374 = vpop.f32.mrf.mxu0
    %v3375 = vadd.f32 %v2792, %v3374
    %3376 = vmatprep.mubr.f32.mxu0 %v2646
    %3377 = vmatmul.mubr.f32.gmra.mxu0 %v2645
    %v3378 = vpop.f32.mrf.mxu0
    %v3379 = vadd.f32 %v2788, %v3378
    %v3380 = vpop.f32.mrf.mxu0
    %v3381 = vadd.f32 %v2792, %v3380
    %3382 = vdwg.mxu0
    %v3383 = vmax.f32 %v2864, 0.0
    %v3384 = vmax.f32 %v2866, 0.0
    %v3385 = vmax.f32 %v3157, 0.0
    %v3386 = vmax.f32 %v3159, 0.0
    %v3387 = vmax.f32 %v2870, 0.0
    %v3388 = vmax.f32 %v2872, 0.0
    %v3389 = vmax.f32 %v3163, 0.0
    %v3390 = vmax.f32 %v3165, 0.0
    %v3391 = vmax.f32 %v2876, 0.0
    %v3392 = vmax.f32 %v2878, 0.0
    %v3393 = vmax.f32 %v3169, 0.0
    %v3394 = vmax.f32 %v3171, 0.0
    %v3395 = vmax.f32 %v2882, 0.0
    %v3396 = vmax.f32 %v2884, 0.0
    %v3397 = vmax.f32 %v3175, 0.0
    %v3398 = vmax.f32 %v3177, 0.0
    %v3399 = vmax.f32 %v2888, 0.0
    %v3400 = vmax.f32 %v2890, 0.0
    %v3401 = vmax.f32 %v3181, 0.0
    %v3402 = vmax.f32 %v3183, 0.0
    %v3403 = vmax.f32 %v2894, 0.0
    %v3404 = vmax.f32 %v2896, 0.0
    %v3405 = vmax.f32 %v3187, 0.0
    %v3406 = vmax.f32 %v3189, 0.0
    %v3407 = vmax.f32 %v2900, 0.0
    %v3408 = vmax.f32 %v2902, 0.0
    %v3409 = vmax.f32 %v3193, 0.0
    %v3410 = vmax.f32 %v3195, 0.0
    %v3411 = vmax.f32 %v2906, 0.0
    %v3412 = vmax.f32 %v2908, 0.0
    %v3413 = vmax.f32 %v3199, 0.0
    %v3414 = vmax.f32 %v3201, 0.0
    %v3415 = vmax.f32 %v2912, 0.0
    %v3416 = vmax.f32 %v2914, 0.0
    %v3417 = vmax.f32 %v3205, 0.0
    %v3418 = vmax.f32 %v3207, 0.0
    %v3419 = vmax.f32 %v2918, 0.0
    %v3420 = vmax.f32 %v2920, 0.0
    %v3421 = vmax.f32 %v3211, 0.0
    %v3422 = vmax.f32 %v3213, 0.0
    %v3423 = vmax.f32 %v2924, 0.0
    %v3424 = vmax.f32 %v2926, 0.0
    %v3425 = vmax.f32 %v3217, 0.0
    %v3426 = vmax.f32 %v3219, 0.0
    %v3427 = vmax.f32 %v2930, 0.0
    %v3428 = vmax.f32 %v2932, 0.0
    %v3429 = vmax.f32 %v3223, 0.0
    %v3430 = vmax.f32 %v3225, 0.0
    %v3431 = vmax.f32 %v2936, 0.0
    %v3432 = vmax.f32 %v2938, 0.0
    %v3433 = vmax.f32 %v3229, 0.0
    %v3434 = vmax.f32 %v3231, 0.0
    %v3435 = vmax.f32 %v2942, 0.0
    %v3436 = vmax.f32 %v2944, 0.0
    %v3437 = vmax.f32 %v3235, 0.0
    %v3438 = vmax.f32 %v3237, 0.0
    %v3439 = vmax.f32 %v2948, 0.0
    %v3440 = vmax.f32 %v2950, 0.0
    %v3441 = vmax.f32 %v3241, 0.0
    %v3442 = vmax.f32 %v3243, 0.0
    %v3443 = vmax.f32 %v2954, 0.0
    %v3444 = vmax.f32 %v2956, 0.0
    %v3445 = vmax.f32 %v3247, 0.0
    %v3446 = vmax.f32 %v3249, 0.0
    %v3447 = vmax.f32 %v2960, 0.0
    %v3448 = vmax.f32 %v2962, 0.0
    %v3449 = vmax.f32 %v3253, 0.0
    %v3450 = vmax.f32 %v3255, 0.0
    %v3451 = vmax.f32 %v2966, 0.0
    %v3452 = vmax.f32 %v2968, 0.0
    %v3453 = vmax.f32 %v3259, 0.0
    %v3454 = vmax.f32 %v3261, 0.0
    %v3455 = vmax.f32 %v2972, 0.0
    %v3456 = vmax.f32 %v2974, 0.0
    %v3457 = vmax.f32 %v3265, 0.0
    %v3458 = vmax.f32 %v3267, 0.0
    %v3459 = vmax.f32 %v2978, 0.0
    %v3460 = vmax.f32 %v2980, 0.0
    %v3461 = vmax.f32 %v3271, 0.0
    %v3462 = vmax.f32 %v3273, 0.0
    %v3463 = vmax.f32 %v2984, 0.0
    %v3464 = vmax.f32 %v2986, 0.0
    %v3465 = vmax.f32 %v3277, 0.0
    %v3466 = vmax.f32 %v3279, 0.0
    %v3467 = vmax.f32 %v2990, 0.0
    %v3468 = vmax.f32 %v2992, 0.0
    %v3469 = vmax.f32 %v3283, 0.0
    %v3470 = vmax.f32 %v3285, 0.0
    %v3471 = vmax.f32 %v2996, 0.0
    %v3472 = vmax.f32 %v2998, 0.0
    %v3473 = vmax.f32 %v3289, 0.0
    %v3474 = vmax.f32 %v3291, 0.0
    %v3475 = vmax.f32 %v3002, 0.0
    %v3476 = vmax.f32 %v3004, 0.0
    %v3477 = vmax.f32 %v3295, 0.0
    %v3478 = vmax.f32 %v3297, 0.0
    %v3479 = vmax.f32 %v3008, 0.0
    %v3480 = vmax.f32 %v3010, 0.0
    %v3481 = vmax.f32 %v3301, 0.0
    %v3482 = vmax.f32 %v3303, 0.0
    %v3483 = vmax.f32 %v3014, 0.0
    %v3484 = vmax.f32 %v3016, 0.0
    %v3485 = vmax.f32 %v3307, 0.0
    %v3486 = vmax.f32 %v3309, 0.0
    %v3487 = vmax.f32 %v3020, 0.0
    %v3488 = vmax.f32 %v3022, 0.0
    %v3489 = vmax.f32 %v3313, 0.0
    %v3490 = vmax.f32 %v3315, 0.0
    %v3491 = vmax.f32 %v3026, 0.0
    %v3492 = vmax.f32 %v3028, 0.0
    %v3493 = vmax.f32 %v3319, 0.0
    %v3494 = vmax.f32 %v3321, 0.0
    %v3495 = vmax.f32 %v3032, 0.0
    %v3496 = vmax.f32 %v3034, 0.0
    %v3497 = vmax.f32 %v3325, 0.0
    %v3498 = vmax.f32 %v3327, 0.0
    %v3499 = vmax.f32 %v3038, 0.0
    %v3500 = vmax.f32 %v3040, 0.0
    %v3501 = vmax.f32 %v3331, 0.0
    %v3502 = vmax.f32 %v3333, 0.0
    %v3503 = vmax.f32 %v3044, 0.0
    %v3504 = vmax.f32 %v3046, 0.0
    %v3505 = vmax.f32 %v3337, 0.0
    %v3506 = vmax.f32 %v3339, 0.0
    %v3507 = vmax.f32 %v3050, 0.0
    %v3508 = vmax.f32 %v3052, 0.0
    %v3509 = vmax.f32 %v3343, 0.0
    %v3510 = vmax.f32 %v3345, 0.0
    %v3511 = vmax.f32 %v3056, 0.0
    %v3512 = vmax.f32 %v3058, 0.0
    %v3513 = vmax.f32 %v3349, 0.0
    %v3514 = vmax.f32 %v3351, 0.0
    %v3515 = vmax.f32 %v3062, 0.0
    %v3516 = vmax.f32 %v3064, 0.0
    %v3517 = vmax.f32 %v3355, 0.0
    %v3518 = vmax.f32 %v3357, 0.0
    %v3519 = vmax.f32 %v3068, 0.0
    %v3520 = vmax.f32 %v3070, 0.0
    %v3521 = vmax.f32 %v3361, 0.0
    %v3522 = vmax.f32 %v3363, 0.0
    %v3523 = vmax.f32 %v3074, 0.0
    %v3524 = vmax.f32 %v3076, 0.0
    %v3525 = vmax.f32 %v3367, 0.0
    %v3526 = vmax.f32 %v3369, 0.0
    %v3527 = vmax.f32 %v3080, 0.0
    %v3528 = vmax.f32 %v3082, 0.0
    %v3529 = vmax.f32 %v3373, 0.0
    %v3530 = vmax.f32 %v3375, 0.0
    %v3531 = vmax.f32 %v3086, 0.0
    %v3532 = vmax.f32 %v3088, 0.0
    %v3533 = vmax.f32 %v3379, 0.0
    %v3534 = vmax.f32 %v3381, 0.0
    %v3535 = vld [vmem:[#allocation4] sm:$0xff]
    %v3536 = vld [vmem:[#allocation4 + $0x8] sm:$0xff]
    %v3537 = vld [vmem:[#allocation4 + $0x10] sm:$0xff]
    %v3538 = vld [vmem:[#allocation4 + $0x18] sm:$0xff]
    %v3539 = vld [vmem:[#allocation4 + $0x20] sm:$0xff]
    %v3540 = vld [vmem:[#allocation4 + $0x28] sm:$0xff]
    %v3541 = vld [vmem:[#allocation4 + $0x30] sm:$0xff]
    %v3542 = vld [vmem:[#allocation4 + $0x38] sm:$0xff]
    %v3543 = vld [vmem:[#allocation4 + $0x40] sm:$0xff]
    %v3544 = vld [vmem:[#allocation4 + $0x48] sm:$0xff]
    %v3545 = vld [vmem:[#allocation4 + $0x50] sm:$0xff]
    %v3546 = vld [vmem:[#allocation4 + $0x58] sm:$0xff]
    %v3547 = vld [vmem:[#allocation4 + $0x60] sm:$0xff]
    %v3548 = vld [vmem:[#allocation4 + $0x68] sm:$0xff]
    %v3549 = vld [vmem:[#allocation4 + $0x70] sm:$0xff]
    %v3550 = vld [vmem:[#allocation4 + $0x78] sm:$0xff]
    %v3551 = vld [vmem:[#allocation4 + $0x80] sm:$0xff]
    %v3552 = vld [vmem:[#allocation4 + $0x88] sm:$0xff]
    %v3553 = vld [vmem:[#allocation4 + $0x90] sm:$0xff]
    %v3554 = vld [vmem:[#allocation4 + $0x98] sm:$0xff]
    %v3555 = vld [vmem:[#allocation4 + $0xa0] sm:$0xff]
    %v3556 = vld [vmem:[#allocation4 + $0xa8] sm:$0xff]
    %v3557 = vld [vmem:[#allocation4 + $0xb0] sm:$0xff]
    %v3558 = vld [vmem:[#allocation4 + $0xb8] sm:$0xff]
    %v3559 = vld [vmem:[#allocation4 + $0xc0] sm:$0xff]
    %v3560 = vld [vmem:[#allocation4 + $0xc8] sm:$0xff]
    %v3561 = vld [vmem:[#allocation4 + $0xd0] sm:$0xff]
    %v3562 = vld [vmem:[#allocation4 + $0xd8] sm:$0xff]
    %v3563 = vld [vmem:[#allocation4 + $0xe0] sm:$0xff]
    %v3564 = vld [vmem:[#allocation4 + $0xe8] sm:$0xff]
    %v3565 = vld [vmem:[#allocation4 + $0xf0] sm:$0xff]
    %v3566 = vld [vmem:[#allocation4 + $0xf8] sm:$0xff]
    %v3567 = vld [vmem:[#allocation4 + $0x100] sm:$0xff]
    %v3568 = vld [vmem:[#allocation4 + $0x108] sm:$0xff]
    %v3569 = vld [vmem:[#allocation4 + $0x110] sm:$0xff]
    %v3570 = vld [vmem:[#allocation4 + $0x118] sm:$0xff]
    %v3571 = vld [vmem:[#allocation4 + $0x120] sm:$0xff]
    %v3572 = vld [vmem:[#allocation4 + $0x128] sm:$0xff]
    %v3573 = vld [vmem:[#allocation4 + $0x130] sm:$0xff]
    %v3574 = vld [vmem:[#allocation4 + $0x138] sm:$0xff]
    %v3575 = vld [vmem:[#allocation4 + $0x140] sm:$0xff]
    %v3576 = vld [vmem:[#allocation4 + $0x148] sm:$0xff]
    %v3577 = vld [vmem:[#allocation4 + $0x150] sm:$0xff]
    %v3578 = vld [vmem:[#allocation4 + $0x158] sm:$0xff]
    %v3579 = vld [vmem:[#allocation4 + $0x160] sm:$0xff]
    %v3580 = vld [vmem:[#allocation4 + $0x168] sm:$0xff]
    %v3581 = vld [vmem:[#allocation4 + $0x170] sm:$0xff]
    %v3582 = vld [vmem:[#allocation4 + $0x178] sm:$0xff]
    %v3583 = vld [vmem:[#allocation4 + $0x180] sm:$0xff]
    %v3584 = vld [vmem:[#allocation4 + $0x188] sm:$0xff]
    %v3585 = vld [vmem:[#allocation4 + $0x190] sm:$0xff]
    %v3586 = vld [vmem:[#allocation4 + $0x198] sm:$0xff]
    %v3587 = vld [vmem:[#allocation4 + $0x1a0] sm:$0xff]
    %v3588 = vld [vmem:[#allocation4 + $0x1a8] sm:$0xff]
    %v3589 = vld [vmem:[#allocation4 + $0x1b0] sm:$0xff]
    %v3590 = vld [vmem:[#allocation4 + $0x1b8] sm:$0xff]
    %v3591 = vld [vmem:[#allocation4 + $0x1c0] sm:$0xff]
    %v3592 = vld [vmem:[#allocation4 + $0x1c8] sm:$0xff]
    %v3593 = vld [vmem:[#allocation4 + $0x1d0] sm:$0xff]
    %v3594 = vld [vmem:[#allocation4 + $0x1d8] sm:$0xff]
    %v3595 = vld [vmem:[#allocation4 + $0x1e0] sm:$0xff]
    %v3596 = vld [vmem:[#allocation4 + $0x1e8] sm:$0xff]
    %v3597 = vld [vmem:[#allocation4 + $0x1f0] sm:$0xff]
    %v3598 = vld [vmem:[#allocation4 + $0x1f8] sm:$0xff]
    %v3599 = vld [vmem:[%s12] sm:$0x1]
    %v3601 = vlaneseq
    %v3602 = vshrl.u32 %v3601, 7
    %v3603 = vsub.s32 0, %v3602
    %v3604 = vrot.slane %v3599, %v3603
    %3606 = vmatprep.subr.mxu0 0.0
    %3607 = vmatpush1.msra.mxu0 %v3550
    %3608 = vmatprep.subr.mxu0 0.0
    %3609 = vmatpush1.msra.mxu0 %v3549
    %3610 = vmatprep.subr.mxu0 0.0
    %3611 = vmatpush1.msra.mxu0 %v3548
    %3612 = vmatprep.subr.mxu0 0.0
    %3613 = vmatpush1.msra.mxu0 %v3547
    %3614 = vmatprep.subr.mxu0 0.0
    %3615 = vmatpush1.msra.mxu0 %v3546
    %3616 = vmatprep.subr.mxu0 0.0
    %3617 = vmatpush1.msra.mxu0 %v3545
    %3618 = vmatprep.subr.mxu0 0.0
    %3619 = vmatpush1.msra.mxu0 %v3544
    %3620 = vmatprep.subr.mxu0 0.0
    %3621 = vmatpush1.msra.mxu0 %v3543
    %3622 = vmatprep.subr.mxu0 0.0
    %3623 = vmatpush1.msra.mxu0 %v3542
    %3624 = vmatprep.subr.mxu0 0.0
    %3625 = vmatpush1.msra.mxu0 %v3541
    %3626 = vmatprep.subr.mxu0 0.0
    %3627 = vmatpush1.msra.mxu0 %v3540
    %3628 = vmatprep.subr.mxu0 0.0
    %3629 = vmatpush1.msra.mxu0 %v3539
    %3630 = vmatprep.subr.mxu0 0.0
    %3631 = vmatpush1.msra.mxu0 %v3538
    %3632 = vmatprep.subr.mxu0 0.0
    %3633 = vmatpush1.msra.mxu0 %v3537
    %3634 = vmatprep.subr.mxu0 0.0
    %3635 = vmatpush1.msra.mxu0 %v3536
    %3636 = vmatprep.subr.mxu0 0.0
    %3637 = vmatpush1.msra.mxu0 %v3535
    %3638 = vmatprep.subr.mxu0 0.0
    %3639 = vmatpush2.msra.mxu0 %v3566
    %3640 = vmatprep.subr.mxu0 0.0
    %3641 = vmatpush2.msra.mxu0 %v3565
    %3642 = vmatprep.subr.mxu0 0.0
    %3643 = vmatpush2.msra.mxu0 %v3564
    %3644 = vmatprep.subr.mxu0 0.0
    %3645 = vmatpush2.msra.mxu0 %v3563
    %3646 = vmatprep.subr.mxu0 0.0
    %3647 = vmatpush2.msra.mxu0 %v3562
    %3648 = vmatprep.subr.mxu0 0.0
    %3649 = vmatpush2.msra.mxu0 %v3561
    %3650 = vmatprep.subr.mxu0 0.0
    %3651 = vmatpush2.msra.mxu0 %v3560
    %3652 = vmatprep.subr.mxu0 0.0
    %3653 = vmatpush2.msra.mxu0 %v3559
    %3654 = vmatprep.subr.mxu0 0.0
    %3655 = vmatpush2.msra.mxu0 %v3558
    %3656 = vmatprep.subr.mxu0 0.0
    %3657 = vmatpush2.msra.mxu0 %v3557
    %3658 = vmatprep.subr.mxu0 0.0
    %3659 = vmatpush2.msra.mxu0 %v3556
    %3660 = vmatprep.subr.mxu0 0.0
    %3661 = vmatpush2.msra.mxu0 %v3555
    %3662 = vmatprep.subr.mxu0 0.0
    %3663 = vmatpush2.msra.mxu0 %v3554
    %3664 = vmatprep.subr.mxu0 0.0
    %3665 = vmatpush2.msra.mxu0 %v3553
    %3666 = vmatprep.subr.mxu0 0.0
    %3667 = vmatpush2.msra.mxu0 %v3552
    %3668 = vmatprep.subr.mxu0 0.0
    %3669 = vmatpush2.msra.mxu0 %v3551
    %3670 = vmatprep.mubr.f32.mxu0 %v3384
    %3671 = vmatmul.mubr.f32.gmra.mxu0 %v3383
    %v3672 = vpop.f32.mrf.mxu0
    %v3673 = vadd.f32 %v3604, %v3672
    %v3674 = vpop.f32.mrf.mxu0
    %3675 = vmatprep.mubr.f32.mxu0 %v3388
    %3676 = vmatmul.mubr.f32.gmra.mxu0 %v3387
    %v3677 = vpop.f32.mrf.mxu0
    %v3678 = vadd.f32 %v3604, %v3677
    %v3679 = vpop.f32.mrf.mxu0
    %3680 = vmatprep.mubr.f32.mxu0 %v3392
    %3681 = vmatmul.mubr.f32.gmra.mxu0 %v3391
    %v3682 = vpop.f32.mrf.mxu0
    %v3683 = vadd.f32 %v3604, %v3682
    %v3684 = vpop.f32.mrf.mxu0
    %3685 = vmatprep.mubr.f32.mxu0 %v3396
    %3686 = vmatmul.mubr.f32.gmra.mxu0 %v3395
    %v3687 = vpop.f32.mrf.mxu0
    %v3688 = vadd.f32 %v3604, %v3687
    %v3689 = vpop.f32.mrf.mxu0
    %3690 = vmatprep.mubr.f32.mxu0 %v3400
    %3691 = vmatmul.mubr.f32.gmra.mxu0 %v3399
    %v3692 = vpop.f32.mrf.mxu0
    %v3693 = vadd.f32 %v3604, %v3692
    %v3694 = vpop.f32.mrf.mxu0
    %3695 = vmatprep.mubr.f32.mxu0 %v3404
    %3696 = vmatmul.mubr.f32.gmra.mxu0 %v3403
    %v3697 = vpop.f32.mrf.mxu0
    %v3698 = vadd.f32 %v3604, %v3697
    %v3699 = vpop.f32.mrf.mxu0
    %3700 = vmatprep.mubr.f32.mxu0 %v3408
    %3701 = vmatmul.mubr.f32.gmra.mxu0 %v3407
    %v3702 = vpop.f32.mrf.mxu0
    %v3703 = vadd.f32 %v3604, %v3702
    %v3704 = vpop.f32.mrf.mxu0
    %3705 = vmatprep.mubr.f32.mxu0 %v3412
    %3706 = vmatmul.mubr.f32.gmra.mxu0 %v3411
    %v3707 = vpop.f32.mrf.mxu0
    %v3708 = vadd.f32 %v3604, %v3707
    %v3709 = vpop.f32.mrf.mxu0
    %3710 = vmatprep.mubr.f32.mxu0 %v3416
    %3711 = vmatmul.mubr.f32.gmra.mxu0 %v3415
    %v3712 = vpop.f32.mrf.mxu0
    %v3713 = vadd.f32 %v3604, %v3712
    %v3714 = vpop.f32.mrf.mxu0
    %3715 = vmatprep.mubr.f32.mxu0 %v3420
    %3716 = vmatmul.mubr.f32.gmra.mxu0 %v3419
    %v3717 = vpop.f32.mrf.mxu0
    %v3718 = vadd.f32 %v3604, %v3717
    %v3719 = vpop.f32.mrf.mxu0
    %3720 = vmatprep.mubr.f32.mxu0 %v3424
    %3721 = vmatmul.mubr.f32.gmra.mxu0 %v3423
    %v3722 = vpop.f32.mrf.mxu0
    %v3723 = vadd.f32 %v3604, %v3722
    %v3724 = vpop.f32.mrf.mxu0
    %3725 = vmatprep.mubr.f32.mxu0 %v3428
    %3726 = vmatmul.mubr.f32.gmra.mxu0 %v3427
    %v3727 = vpop.f32.mrf.mxu0
    %v3728 = vadd.f32 %v3604, %v3727
    %v3729 = vpop.f32.mrf.mxu0
    %3730 = vmatprep.mubr.f32.mxu0 %v3432
    %3731 = vmatmul.mubr.f32.gmra.mxu0 %v3431
    %v3732 = vpop.f32.mrf.mxu0
    %v3733 = vadd.f32 %v3604, %v3732
    %v3734 = vpop.f32.mrf.mxu0
    %3735 = vmatprep.mubr.f32.mxu0 %v3436
    %3736 = vmatmul.mubr.f32.gmra.mxu0 %v3435
    %v3737 = vpop.f32.mrf.mxu0
    %v3738 = vadd.f32 %v3604, %v3737
    %v3739 = vpop.f32.mrf.mxu0
    %3740 = vmatprep.mubr.f32.mxu0 %v3440
    %3741 = vmatmul.mubr.f32.gmra.mxu0 %v3439
    %v3742 = vpop.f32.mrf.mxu0
    %v3743 = vadd.f32 %v3604, %v3742
    %v3744 = vpop.f32.mrf.mxu0
    %3745 = vmatprep.mubr.f32.mxu0 %v3444
    %3746 = vmatmul.mubr.f32.gmra.mxu0 %v3443
    %v3747 = vpop.f32.mrf.mxu0
    %v3748 = vadd.f32 %v3604, %v3747
    %v3749 = vpop.f32.mrf.mxu0
    %3750 = vmatprep.mubr.f32.mxu0 %v3448
    %3751 = vmatmul.mubr.f32.gmra.mxu0 %v3447
    %v3752 = vpop.f32.mrf.mxu0
    %v3753 = vadd.f32 %v3604, %v3752
    %v3754 = vpop.f32.mrf.mxu0
    %3755 = vmatprep.mubr.f32.mxu0 %v3452
    %3756 = vmatmul.mubr.f32.gmra.mxu0 %v3451
    %v3757 = vpop.f32.mrf.mxu0
    %v3758 = vadd.f32 %v3604, %v3757
    %v3759 = vpop.f32.mrf.mxu0
    %3760 = vmatprep.mubr.f32.mxu0 %v3456
    %3761 = vmatmul.mubr.f32.gmra.mxu0 %v3455
    %v3762 = vpop.f32.mrf.mxu0
    %v3763 = vadd.f32 %v3604, %v3762
    %v3764 = vpop.f32.mrf.mxu0
    %3765 = vmatprep.mubr.f32.mxu0 %v3460
    %3766 = vmatmul.mubr.f32.gmra.mxu0 %v3459
    %v3767 = vpop.f32.mrf.mxu0
    %v3768 = vadd.f32 %v3604, %v3767
    %v3769 = vpop.f32.mrf.mxu0
    %3770 = vmatprep.mubr.f32.mxu0 %v3464
    %3771 = vmatmul.mubr.f32.gmra.mxu0 %v3463
    %v3772 = vpop.f32.mrf.mxu0
    %v3773 = vadd.f32 %v3604, %v3772
    %v3774 = vpop.f32.mrf.mxu0
    %3775 = vmatprep.mubr.f32.mxu0 %v3468
    %3776 = vmatmul.mubr.f32.gmra.mxu0 %v3467
    %v3777 = vpop.f32.mrf.mxu0
    %v3778 = vadd.f32 %v3604, %v3777
    %v3779 = vpop.f32.mrf.mxu0
    %3780 = vmatprep.mubr.f32.mxu0 %v3472
    %3781 = vmatmul.mubr.f32.gmra.mxu0 %v3471
    %v3782 = vpop.f32.mrf.mxu0
    %v3783 = vadd.f32 %v3604, %v3782
    %v3784 = vpop.f32.mrf.mxu0
    %3785 = vmatprep.mubr.f32.mxu0 %v3476
    %3786 = vmatmul.mubr.f32.gmra.mxu0 %v3475
    %v3787 = vpop.f32.mrf.mxu0
    %v3788 = vadd.f32 %v3604, %v3787
    %v3789 = vpop.f32.mrf.mxu0
    %3790 = vmatprep.mubr.f32.mxu0 %v3480
    %3791 = vmatmul.mubr.f32.gmra.mxu0 %v3479
    %v3792 = vpop.f32.mrf.mxu0
    %v3793 = vadd.f32 %v3604, %v3792
    %v3794 = vpop.f32.mrf.mxu0
    %3795 = vmatprep.mubr.f32.mxu0 %v3484
    %3796 = vmatmul.mubr.f32.gmra.mxu0 %v3483
    %v3797 = vpop.f32.mrf.mxu0
    %v3798 = vadd.f32 %v3604, %v3797
    %v3799 = vpop.f32.mrf.mxu0
    %3800 = vmatprep.mubr.f32.mxu0 %v3488
    %3801 = vmatmul.mubr.f32.gmra.mxu0 %v3487
    %v3802 = vpop.f32.mrf.mxu0
    %v3803 = vadd.f32 %v3604, %v3802
    %v3804 = vpop.f32.mrf.mxu0
    %3805 = vmatprep.mubr.f32.mxu0 %v3492
    %3806 = vmatmul.mubr.f32.gmra.mxu0 %v3491
    %v3807 = vpop.f32.mrf.mxu0
    %v3808 = vadd.f32 %v3604, %v3807
    %v3809 = vpop.f32.mrf.mxu0
    %3810 = vmatprep.mubr.f32.mxu0 %v3496
    %3811 = vmatmul.mubr.f32.gmra.mxu0 %v3495
    %v3812 = vpop.f32.mrf.mxu0
    %v3813 = vadd.f32 %v3604, %v3812
    %v3814 = vpop.f32.mrf.mxu0
    %3815 = vmatprep.mubr.f32.mxu0 %v3500
    %3816 = vmatmul.mubr.f32.gmra.mxu0 %v3499
    %v3817 = vpop.f32.mrf.mxu0
    %v3818 = vadd.f32 %v3604, %v3817
    %v3819 = vpop.f32.mrf.mxu0
    %3820 = vmatprep.mubr.f32.mxu0 %v3504
    %3821 = vmatmul.mubr.f32.gmra.mxu0 %v3503
    %v3822 = vpop.f32.mrf.mxu0
    %v3823 = vadd.f32 %v3604, %v3822
    %v3824 = vpop.f32.mrf.mxu0
    %3825 = vmatprep.mubr.f32.mxu0 %v3508
    %3826 = vmatmul.mubr.f32.gmra.mxu0 %v3507
    %v3827 = vpop.f32.mrf.mxu0
    %v3828 = vadd.f32 %v3604, %v3827
    %v3829 = vpop.f32.mrf.mxu0
    %3830 = vmatprep.mubr.f32.mxu0 %v3512
    %3831 = vmatmul.mubr.f32.gmra.mxu0 %v3511
    %v3832 = vpop.f32.mrf.mxu0
    %v3833 = vadd.f32 %v3604, %v3832
    %v3834 = vpop.f32.mrf.mxu0
    %3835 = vmatprep.mubr.f32.mxu0 %v3516
    %3836 = vmatmul.mubr.f32.gmra.mxu0 %v3515
    %v3837 = vpop.f32.mrf.mxu0
    %v3838 = vadd.f32 %v3604, %v3837
    %v3839 = vpop.f32.mrf.mxu0
    %3840 = vmatprep.mubr.f32.mxu0 %v3520
    %3841 = vmatmul.mubr.f32.gmra.mxu0 %v3519
    %v3842 = vpop.f32.mrf.mxu0
    %v3843 = vadd.f32 %v3604, %v3842
    %v3844 = vpop.f32.mrf.mxu0
    %3845 = vmatprep.mubr.f32.mxu0 %v3524
    %3846 = vmatmul.mubr.f32.gmra.mxu0 %v3523
    %v3847 = vpop.f32.mrf.mxu0
    %v3848 = vadd.f32 %v3604, %v3847
    %v3849 = vpop.f32.mrf.mxu0
    %3850 = vmatprep.mubr.f32.mxu0 %v3528
    %3851 = vmatmul.mubr.f32.gmra.mxu0 %v3527
    %v3852 = vpop.f32.mrf.mxu0
    %v3853 = vadd.f32 %v3604, %v3852
    %v3854 = vpop.f32.mrf.mxu0
    %3855 = vmatprep.mubr.f32.mxu0 %v3532
    %3856 = vmatmul.mubr.f32.gmra.mxu0 %v3531
    %v3857 = vpop.f32.mrf.mxu0
    %v3858 = vadd.f32 %v3604, %v3857
    %v3859 = vpop.f32.mrf.mxu0
    %3860 = vdwg.mxu0
    %3861 = vmatprep.subr.mxu0 0.0
    %3862 = vmatpush1.msra.mxu0 %v3582
    %3863 = vmatprep.subr.mxu0 0.0
    %3864 = vmatpush1.msra.mxu0 %v3581
    %3865 = vmatprep.subr.mxu0 0.0
    %3866 = vmatpush1.msra.mxu0 %v3580
    %3867 = vmatprep.subr.mxu0 0.0
    %3868 = vmatpush1.msra.mxu0 %v3579
    %3869 = vmatprep.subr.mxu0 0.0
    %3870 = vmatpush1.msra.mxu0 %v3578
    %3871 = vmatprep.subr.mxu0 0.0
    %3872 = vmatpush1.msra.mxu0 %v3577
    %3873 = vmatprep.subr.mxu0 0.0
    %3874 = vmatpush1.msra.mxu0 %v3576
    %3875 = vmatprep.subr.mxu0 0.0
    %3876 = vmatpush1.msra.mxu0 %v3575
    %3877 = vmatprep.subr.mxu0 0.0
    %3878 = vmatpush1.msra.mxu0 %v3574
    %3879 = vmatprep.subr.mxu0 0.0
    %3880 = vmatpush1.msra.mxu0 %v3573
    %3881 = vmatprep.subr.mxu0 0.0
    %3882 = vmatpush1.msra.mxu0 %v3572
    %3883 = vmatprep.subr.mxu0 0.0
    %3884 = vmatpush1.msra.mxu0 %v3571
    %3885 = vmatprep.subr.mxu0 0.0
    %3886 = vmatpush1.msra.mxu0 %v3570
    %3887 = vmatprep.subr.mxu0 0.0
    %3888 = vmatpush1.msra.mxu0 %v3569
    %3889 = vmatprep.subr.mxu0 0.0
    %3890 = vmatpush1.msra.mxu0 %v3568
    %3891 = vmatprep.subr.mxu0 0.0
    %3892 = vmatpush1.msra.mxu0 %v3567
    %3893 = vmatprep.subr.mxu0 0.0
    %3894 = vmatpush2.msra.mxu0 %v3598
    %3895 = vmatprep.subr.mxu0 0.0
    %3896 = vmatpush2.msra.mxu0 %v3597
    %3897 = vmatprep.subr.mxu0 0.0
    %3898 = vmatpush2.msra.mxu0 %v3596
    %3899 = vmatprep.subr.mxu0 0.0
    %3900 = vmatpush2.msra.mxu0 %v3595
    %3901 = vmatprep.subr.mxu0 0.0
    %3902 = vmatpush2.msra.mxu0 %v3594
    %3903 = vmatprep.subr.mxu0 0.0
    %3904 = vmatpush2.msra.mxu0 %v3593
    %3905 = vmatprep.subr.mxu0 0.0
    %3906 = vmatpush2.msra.mxu0 %v3592
    %3907 = vmatprep.subr.mxu0 0.0
    %3908 = vmatpush2.msra.mxu0 %v3591
    %3909 = vmatprep.subr.mxu0 0.0
    %3910 = vmatpush2.msra.mxu0 %v3590
    %3911 = vmatprep.subr.mxu0 0.0
    %3912 = vmatpush2.msra.mxu0 %v3589
    %3913 = vmatprep.subr.mxu0 0.0
    %3914 = vmatpush2.msra.mxu0 %v3588
    %3915 = vmatprep.subr.mxu0 0.0
    %3916 = vmatpush2.msra.mxu0 %v3587
    %3917 = vmatprep.subr.mxu0 0.0
    %3918 = vmatpush2.msra.mxu0 %v3586
    %3919 = vmatprep.subr.mxu0 0.0
    %3920 = vmatpush2.msra.mxu0 %v3585
    %3921 = vmatprep.subr.mxu0 0.0
    %3922 = vmatpush2.msra.mxu0 %v3584
    %3923 = vmatprep.subr.mxu0 0.0
    %3924 = vmatpush2.msra.mxu0 %v3583
    %3925 = vmatprep.mubr.f32.mxu0 %v3386
    %3926 = vmatmul.mubr.f32.gmra.mxu0 %v3385
    %v3927 = vpop.f32.mrf.mxu0
    %v3928 = vadd.f32 %v3673, %v3927
    %v3929 = vpop.f32.mrf.mxu0
    %3930 = vmatprep.mubr.f32.mxu0 %v3390
    %3931 = vmatmul.mubr.f32.gmra.mxu0 %v3389
    %v3932 = vpop.f32.mrf.mxu0
    %v3933 = vadd.f32 %v3678, %v3932
    %v3934 = vpop.f32.mrf.mxu0
    %3935 = vmatprep.mubr.f32.mxu0 %v3394
    %3936 = vmatmul.mubr.f32.gmra.mxu0 %v3393
    %v3937 = vpop.f32.mrf.mxu0
    %v3938 = vadd.f32 %v3683, %v3937
    %v3939 = vpop.f32.mrf.mxu0
    %3940 = vmatprep.mubr.f32.mxu0 %v3398
    %3941 = vmatmul.mubr.f32.gmra.mxu0 %v3397
    %v3942 = vpop.f32.mrf.mxu0
    %v3943 = vadd.f32 %v3688, %v3942
    %v3944 = vpop.f32.mrf.mxu0
    %3945 = vmatprep.mubr.f32.mxu0 %v3402
    %3946 = vmatmul.mubr.f32.gmra.mxu0 %v3401
    %v3947 = vpop.f32.mrf.mxu0
    %v3948 = vadd.f32 %v3693, %v3947
    %v3949 = vpop.f32.mrf.mxu0
    %3950 = vmatprep.mubr.f32.mxu0 %v3406
    %3951 = vmatmul.mubr.f32.gmra.mxu0 %v3405
    %v3952 = vpop.f32.mrf.mxu0
    %v3953 = vadd.f32 %v3698, %v3952
    %v3954 = vpop.f32.mrf.mxu0
    %3955 = vmatprep.mubr.f32.mxu0 %v3410
    %3956 = vmatmul.mubr.f32.gmra.mxu0 %v3409
    %v3957 = vpop.f32.mrf.mxu0
    %v3958 = vadd.f32 %v3703, %v3957
    %v3959 = vpop.f32.mrf.mxu0
    %3960 = vmatprep.mubr.f32.mxu0 %v3414
    %3961 = vmatmul.mubr.f32.gmra.mxu0 %v3413
    %v3962 = vpop.f32.mrf.mxu0
    %v3963 = vadd.f32 %v3708, %v3962
    %v3964 = vpop.f32.mrf.mxu0
    %3965 = vmatprep.mubr.f32.mxu0 %v3418
    %3966 = vmatmul.mubr.f32.gmra.mxu0 %v3417
    %v3967 = vpop.f32.mrf.mxu0
    %v3968 = vadd.f32 %v3713, %v3967
    %v3969 = vpop.f32.mrf.mxu0
    %3970 = vmatprep.mubr.f32.mxu0 %v3422
    %3971 = vmatmul.mubr.f32.gmra.mxu0 %v3421
    %v3972 = vpop.f32.mrf.mxu0
    %v3973 = vadd.f32 %v3718, %v3972
    %v3974 = vpop.f32.mrf.mxu0
    %3975 = vmatprep.mubr.f32.mxu0 %v3426
    %3976 = vmatmul.mubr.f32.gmra.mxu0 %v3425
    %v3977 = vpop.f32.mrf.mxu0
    %v3978 = vadd.f32 %v3723, %v3977
    %v3979 = vpop.f32.mrf.mxu0
    %3980 = vmatprep.mubr.f32.mxu0 %v3430
    %3981 = vmatmul.mubr.f32.gmra.mxu0 %v3429
    %v3982 = vpop.f32.mrf.mxu0
    %v3983 = vadd.f32 %v3728, %v3982
    %v3984 = vpop.f32.mrf.mxu0
    %3985 = vmatprep.mubr.f32.mxu0 %v3434
    %3986 = vmatmul.mubr.f32.gmra.mxu0 %v3433
    %v3987 = vpop.f32.mrf.mxu0
    %v3988 = vadd.f32 %v3733, %v3987
    %v3989 = vpop.f32.mrf.mxu0
    %3990 = vmatprep.mubr.f32.mxu0 %v3438
    %3991 = vmatmul.mubr.f32.gmra.mxu0 %v3437
    %v3992 = vpop.f32.mrf.mxu0
    %v3993 = vadd.f32 %v3738, %v3992
    %v3994 = vpop.f32.mrf.mxu0
    %3995 = vmatprep.mubr.f32.mxu0 %v3442
    %3996 = vmatmul.mubr.f32.gmra.mxu0 %v3441
    %v3997 = vpop.f32.mrf.mxu0
    %v3998 = vadd.f32 %v3743, %v3997
    %v3999 = vpop.f32.mrf.mxu0
    %4000 = vmatprep.mubr.f32.mxu0 %v3446
    %4001 = vmatmul.mubr.f32.gmra.mxu0 %v3445
    %v4002 = vpop.f32.mrf.mxu0
    %v4003 = vadd.f32 %v3748, %v4002
    %v4004 = vpop.f32.mrf.mxu0
    %4005 = vmatprep.mubr.f32.mxu0 %v3450
    %4006 = vmatmul.mubr.f32.gmra.mxu0 %v3449
    %v4007 = vpop.f32.mrf.mxu0
    %v4008 = vadd.f32 %v3753, %v4007
    %v4009 = vpop.f32.mrf.mxu0
    %4010 = vmatprep.mubr.f32.mxu0 %v3454
    %4011 = vmatmul.mubr.f32.gmra.mxu0 %v3453
    %v4012 = vpop.f32.mrf.mxu0
    %v4013 = vadd.f32 %v3758, %v4012
    %v4014 = vpop.f32.mrf.mxu0
    %4015 = vmatprep.mubr.f32.mxu0 %v3458
    %4016 = vmatmul.mubr.f32.gmra.mxu0 %v3457
    %v4017 = vpop.f32.mrf.mxu0
    %v4018 = vadd.f32 %v3763, %v4017
    %v4019 = vpop.f32.mrf.mxu0
    %4020 = vmatprep.mubr.f32.mxu0 %v3462
    %4021 = vmatmul.mubr.f32.gmra.mxu0 %v3461
    %v4022 = vpop.f32.mrf.mxu0
    %v4023 = vadd.f32 %v3768, %v4022
    %v4024 = vpop.f32.mrf.mxu0
    %4025 = vmatprep.mubr.f32.mxu0 %v3466
    %4026 = vmatmul.mubr.f32.gmra.mxu0 %v3465
    %v4027 = vpop.f32.mrf.mxu0
    %v4028 = vadd.f32 %v3773, %v4027
    %v4029 = vpop.f32.mrf.mxu0
    %4030 = vmatprep.mubr.f32.mxu0 %v3470
    %4031 = vmatmul.mubr.f32.gmra.mxu0 %v3469
    %v4032 = vpop.f32.mrf.mxu0
    %v4033 = vadd.f32 %v3778, %v4032
    %v4034 = vpop.f32.mrf.mxu0
    %4035 = vmatprep.mubr.f32.mxu0 %v3474
    %4036 = vmatmul.mubr.f32.gmra.mxu0 %v3473
    %v4037 = vpop.f32.mrf.mxu0
    %v4038 = vadd.f32 %v3783, %v4037
    %v4039 = vpop.f32.mrf.mxu0
    %4040 = vmatprep.mubr.f32.mxu0 %v3478
    %4041 = vmatmul.mubr.f32.gmra.mxu0 %v3477
    %v4042 = vpop.f32.mrf.mxu0
    %v4043 = vadd.f32 %v3788, %v4042
    %v4044 = vpop.f32.mrf.mxu0
    %4045 = vmatprep.mubr.f32.mxu0 %v3482
    %4046 = vmatmul.mubr.f32.gmra.mxu0 %v3481
    %v4047 = vpop.f32.mrf.mxu0
    %v4048 = vadd.f32 %v3793, %v4047
    %v4049 = vpop.f32.mrf.mxu0
    %4050 = vmatprep.mubr.f32.mxu0 %v3486
    %4051 = vmatmul.mubr.f32.gmra.mxu0 %v3485
    %v4052 = vpop.f32.mrf.mxu0
    %v4053 = vadd.f32 %v3798, %v4052
    %v4054 = vpop.f32.mrf.mxu0
    %4055 = vmatprep.mubr.f32.mxu0 %v3490
    %4056 = vmatmul.mubr.f32.gmra.mxu0 %v3489
    %v4057 = vpop.f32.mrf.mxu0
    %v4058 = vadd.f32 %v3803, %v4057
    %v4059 = vpop.f32.mrf.mxu0
    %4060 = vmatprep.mubr.f32.mxu0 %v3494
    %4061 = vmatmul.mubr.f32.gmra.mxu0 %v3493
    %v4062 = vpop.f32.mrf.mxu0
    %v4063 = vadd.f32 %v3808, %v4062
    %v4064 = vpop.f32.mrf.mxu0
    %4065 = vmatprep.mubr.f32.mxu0 %v3498
    %4066 = vmatmul.mubr.f32.gmra.mxu0 %v3497
    %v4067 = vpop.f32.mrf.mxu0
    %v4068 = vadd.f32 %v3813, %v4067
    %v4069 = vpop.f32.mrf.mxu0
    %4070 = vmatprep.mubr.f32.mxu0 %v3502
    %4071 = vmatmul.mubr.f32.gmra.mxu0 %v3501
    %v4072 = vpop.f32.mrf.mxu0
    %v4073 = vadd.f32 %v3818, %v4072
    %v4074 = vpop.f32.mrf.mxu0
    %4075 = vmatprep.mubr.f32.mxu0 %v3506
    %4076 = vmatmul.mubr.f32.gmra.mxu0 %v3505
    %v4077 = vpop.f32.mrf.mxu0
    %v4078 = vadd.f32 %v3823, %v4077
    %v4079 = vpop.f32.mrf.mxu0
    %4080 = vmatprep.mubr.f32.mxu0 %v3510
    %4081 = vmatmul.mubr.f32.gmra.mxu0 %v3509
    %v4082 = vpop.f32.mrf.mxu0
    %v4083 = vadd.f32 %v3828, %v4082
    %v4084 = vpop.f32.mrf.mxu0
    %4085 = vmatprep.mubr.f32.mxu0 %v3514
    %4086 = vmatmul.mubr.f32.gmra.mxu0 %v3513
    %v4087 = vpop.f32.mrf.mxu0
    %v4088 = vadd.f32 %v3833, %v4087
    %v4089 = vpop.f32.mrf.mxu0
    %4090 = vmatprep.mubr.f32.mxu0 %v3518
    %4091 = vmatmul.mubr.f32.gmra.mxu0 %v3517
    %v4092 = vpop.f32.mrf.mxu0
    %v4093 = vadd.f32 %v3838, %v4092
    %v4094 = vpop.f32.mrf.mxu0
    %4095 = vmatprep.mubr.f32.mxu0 %v3522
    %4096 = vmatmul.mubr.f32.gmra.mxu0 %v3521
    %v4097 = vpop.f32.mrf.mxu0
    %v4098 = vadd.f32 %v3843, %v4097
    %v4099 = vpop.f32.mrf.mxu0
    %4100 = vmatprep.mubr.f32.mxu0 %v3526
    %4101 = vmatmul.mubr.f32.gmra.mxu0 %v3525
    %v4102 = vpop.f32.mrf.mxu0
    %v4103 = vadd.f32 %v3848, %v4102
    %v4104 = vpop.f32.mrf.mxu0
    %4105 = vmatprep.mubr.f32.mxu0 %v3530
    %4106 = vmatmul.mubr.f32.gmra.mxu0 %v3529
    %v4107 = vpop.f32.mrf.mxu0
    %v4108 = vadd.f32 %v3853, %v4107
    %v4109 = vpop.f32.mrf.mxu0
    %4110 = vmatprep.mubr.f32.mxu0 %v3534
    %4111 = vmatmul.mubr.f32.gmra.mxu0 %v3533
    %v4112 = vpop.f32.mrf.mxu0
    %v4113 = vadd.f32 %v3858, %v4112
    %v4114 = vpop.f32.mrf.mxu0
    %4115 = vdwg.mxu0
    %v4116 = vxor.u32 %v3928, 2147483648
    %v4117 = vxor.u32 %v3933, 2147483648
    %v4118 = vxor.u32 %v3938, 2147483648
    %v4119 = vxor.u32 %v3943, 2147483648
    %v4120 = vxor.u32 %v3948, 2147483648
    %v4121 = vxor.u32 %v3953, 2147483648
    %v4122 = vxor.u32 %v3958, 2147483648
    %v4123 = vxor.u32 %v3963, 2147483648
    %v4124 = vxor.u32 %v3968, 2147483648
    %v4125 = vxor.u32 %v3973, 2147483648
    %v4126 = vxor.u32 %v3978, 2147483648
    %v4127 = vxor.u32 %v3983, 2147483648
    %v4128 = vxor.u32 %v3988, 2147483648
    %v4129 = vxor.u32 %v3993, 2147483648
    %v4130 = vxor.u32 %v3998, 2147483648
    %v4131 = vxor.u32 %v4003, 2147483648
    %v4132 = vxor.u32 %v4008, 2147483648
    %v4133 = vxor.u32 %v4013, 2147483648
    %v4134 = vxor.u32 %v4018, 2147483648
    %v4135 = vxor.u32 %v4023, 2147483648
    %v4136 = vxor.u32 %v4028, 2147483648
    %v4137 = vxor.u32 %v4033, 2147483648
    %v4138 = vxor.u32 %v4038, 2147483648
    %v4139 = vxor.u32 %v4043, 2147483648
    %v4140 = vxor.u32 %v4048, 2147483648
    %v4141 = vxor.u32 %v4053, 2147483648
    %v4142 = vxor.u32 %v4058, 2147483648
    %v4143 = vxor.u32 %v4063, 2147483648
    %v4144 = vxor.u32 %v4068, 2147483648
    %v4145 = vxor.u32 %v4073, 2147483648
    %v4146 = vxor.u32 %v4078, 2147483648
    %v4147 = vxor.u32 %v4083, 2147483648
    %v4148 = vxor.u32 %v4088, 2147483648
    %v4149 = vxor.u32 %v4093, 2147483648
    %v4150 = vxor.u32 %v4098, 2147483648
    %v4151 = vxor.u32 %v4103, 2147483648
    %v4152 = vxor.u32 %v4108, 2147483648
    %v4153 = vxor.u32 %v4113, 2147483648
    %v4154 = vmul.f32 %v4116, 1.442695
    %v4155 = vpow.pop %v4154
    %v4156 = vmul.f32 %v4117, 1.442695
    %v4157 = vpow.pop %v4156
    %v4158 = vmul.f32 %v4118, 1.442695
    %v4159 = vpow.pop %v4158
    %v4160 = vmul.f32 %v4119, 1.442695
    %v4161 = vpow.pop %v4160
    %v4162 = vmul.f32 %v4120, 1.442695
    %v4163 = vpow.pop %v4162
    %v4164 = vmul.f32 %v4121, 1.442695
    %v4165 = vpow.pop %v4164
    %v4166 = vmul.f32 %v4122, 1.442695
    %v4167 = vpow.pop %v4166
    %v4168 = vmul.f32 %v4123, 1.442695
    %v4169 = vpow.pop %v4168
    %v4170 = vmul.f32 %v4124, 1.442695
    %v4171 = vpow.pop %v4170
    %v4172 = vmul.f32 %v4125, 1.442695
    %v4173 = vpow.pop %v4172
    %v4174 = vmul.f32 %v4126, 1.442695
    %v4175 = vpow.pop %v4174
    %v4176 = vmul.f32 %v4127, 1.442695
    %v4177 = vpow.pop %v4176
    %v4178 = vmul.f32 %v4128, 1.442695
    %v4179 = vpow.pop %v4178
    %v4180 = vmul.f32 %v4129, 1.442695
    %v4181 = vpow.pop %v4180
    %v4182 = vmul.f32 %v4130, 1.442695
    %v4183 = vpow.pop %v4182
    %v4184 = vmul.f32 %v4131, 1.442695
    %v4185 = vpow.pop %v4184
    %v4186 = vmul.f32 %v4132, 1.442695
    %v4187 = vpow.pop %v4186
    %v4188 = vmul.f32 %v4133, 1.442695
    %v4189 = vpow.pop %v4188
    %v4190 = vmul.f32 %v4134, 1.442695
    %v4191 = vpow.pop %v4190
    %v4192 = vmul.f32 %v4135, 1.442695
    %v4193 = vpow.pop %v4192
    %v4194 = vmul.f32 %v4136, 1.442695
    %v4195 = vpow.pop %v4194
    %v4196 = vmul.f32 %v4137, 1.442695
    %v4197 = vpow.pop %v4196
    %v4198 = vmul.f32 %v4138, 1.442695
    %v4199 = vpow.pop %v4198
    %v4200 = vmul.f32 %v4139, 1.442695
    %v4201 = vpow.pop %v4200
    %v4202 = vmul.f32 %v4140, 1.442695
    %v4203 = vpow.pop %v4202
    %v4204 = vmul.f32 %v4141, 1.442695
    %v4205 = vpow.pop %v4204
    %v4206 = vmul.f32 %v4142, 1.442695
    %v4207 = vpow.pop %v4206
    %v4208 = vmul.f32 %v4143, 1.442695
    %v4209 = vpow.pop %v4208
    %v4210 = vmul.f32 %v4144, 1.442695
    %v4211 = vpow.pop %v4210
    %v4212 = vmul.f32 %v4145, 1.442695
    %v4213 = vpow.pop %v4212
    %v4214 = vmul.f32 %v4146, 1.442695
    %v4215 = vpow.pop %v4214
    %v4216 = vmul.f32 %v4147, 1.442695
    %v4217 = vpow.pop %v4216
    %v4218 = vmul.f32 %v4148, 1.442695
    %v4219 = vpow.pop %v4218
    %v4220 = vmul.f32 %v4149, 1.442695
    %v4221 = vpow.pop %v4220
    %v4222 = vmul.f32 %v4150, 1.442695
    %v4223 = vpow.pop %v4222
    %v4224 = vmul.f32 %v4151, 1.442695
    %v4225 = vpow.pop %v4224
    %v4226 = vmul.f32 %v4152, 1.442695
    %v4227 = vpow.pop %v4226
    %v4228 = vmul.f32 %v4153, 1.442695
    %v4229 = vpow.pop %v4228
    %v4230 = vadd.f32 %v4155, 1.0
    %v4231 = vadd.f32 %v4157, 1.0
    %v4232 = vadd.f32 %v4159, 1.0
    %v4233 = vadd.f32 %v4161, 1.0
    %v4234 = vadd.f32 %v4163, 1.0
    %v4235 = vadd.f32 %v4165, 1.0
    %v4236 = vadd.f32 %v4167, 1.0
    %v4237 = vadd.f32 %v4169, 1.0
    %v4238 = vadd.f32 %v4171, 1.0
    %v4239 = vadd.f32 %v4173, 1.0
    %v4240 = vadd.f32 %v4175, 1.0
    %v4241 = vadd.f32 %v4177, 1.0
    %v4242 = vadd.f32 %v4179, 1.0
    %v4243 = vadd.f32 %v4181, 1.0
    %v4244 = vadd.f32 %v4183, 1.0
    %v4245 = vadd.f32 %v4185, 1.0
    %v4246 = vadd.f32 %v4187, 1.0
    %v4247 = vadd.f32 %v4189, 1.0
    %v4248 = vadd.f32 %v4191, 1.0
    %v4249 = vadd.f32 %v4193, 1.0
    %v4250 = vadd.f32 %v4195, 1.0
    %v4251 = vadd.f32 %v4197, 1.0
    %v4252 = vadd.f32 %v4199, 1.0
    %v4253 = vadd.f32 %v4201, 1.0
    %v4254 = vadd.f32 %v4203, 1.0
    %v4255 = vadd.f32 %v4205, 1.0
    %v4256 = vadd.f32 %v4207, 1.0
    %v4257 = vadd.f32 %v4209, 1.0
    %v4258 = vadd.f32 %v4211, 1.0
    %v4259 = vadd.f32 %v4213, 1.0
    %v4260 = vadd.f32 %v4215, 1.0
    %v4261 = vadd.f32 %v4217, 1.0
    %v4262 = vadd.f32 %v4219, 1.0
    %v4263 = vadd.f32 %v4221, 1.0
    %v4264 = vadd.f32 %v4223, 1.0
    %v4265 = vadd.f32 %v4225, 1.0
    %v4266 = vadd.f32 %v4227, 1.0
    %v4267 = vadd.f32 %v4229, 1.0
    %v4268 = vrcp.pop %v4230
    %v4269 = vmul.f32 1.0, %v4268
    %v4270 = vrcp.pop %v4231
    %v4271 = vmul.f32 1.0, %v4270
    %v4272 = vrcp.pop %v4232
    %v4273 = vmul.f32 1.0, %v4272
    %v4274 = vrcp.pop %v4233
    %v4275 = vmul.f32 1.0, %v4274
    %v4276 = vrcp.pop %v4234
    %v4277 = vmul.f32 1.0, %v4276
    %v4278 = vrcp.pop %v4235
    %v4279 = vmul.f32 1.0, %v4278
    %v4280 = vrcp.pop %v4236
    %v4281 = vmul.f32 1.0, %v4280
    %v4282 = vrcp.pop %v4237
    %v4283 = vmul.f32 1.0, %v4282
    %v4284 = vrcp.pop %v4238
    %v4285 = vmul.f32 1.0, %v4284
    %v4286 = vrcp.pop %v4239
    %v4287 = vmul.f32 1.0, %v4286
    %v4288 = vrcp.pop %v4240
    %v4289 = vmul.f32 1.0, %v4288
    %v4290 = vrcp.pop %v4241
    %v4291 = vmul.f32 1.0, %v4290
    %v4292 = vrcp.pop %v4242
    %v4293 = vmul.f32 1.0, %v4292
    %v4294 = vrcp.pop %v4243
    %v4295 = vmul.f32 1.0, %v4294
    %v4296 = vrcp.pop %v4244
    %v4297 = vmul.f32 1.0, %v4296
    %v4298 = vrcp.pop %v4245
    %v4299 = vmul.f32 1.0, %v4298
    %v4300 = vrcp.pop %v4246
    %v4301 = vmul.f32 1.0, %v4300
    %v4302 = vrcp.pop %v4247
    %v4303 = vmul.f32 1.0, %v4302
    %v4304 = vrcp.pop %v4248
    %v4305 = vmul.f32 1.0, %v4304
    %v4306 = vrcp.pop %v4249
    %v4307 = vmul.f32 1.0, %v4306
    %v4308 = vrcp.pop %v4250
    %v4309 = vmul.f32 1.0, %v4308
    %v4310 = vrcp.pop %v4251
    %v4311 = vmul.f32 1.0, %v4310
    %v4312 = vrcp.pop %v4252
    %v4313 = vmul.f32 1.0, %v4312
    %v4314 = vrcp.pop %v4253
    %v4315 = vmul.f32 1.0, %v4314
    %v4316 = vrcp.pop %v4254
    %v4317 = vmul.f32 1.0, %v4316
    %v4318 = vrcp.pop %v4255
    %v4319 = vmul.f32 1.0, %v4318
    %v4320 = vrcp.pop %v4256
    %v4321 = vmul.f32 1.0, %v4320
    %v4322 = vrcp.pop %v4257
    %v4323 = vmul.f32 1.0, %v4322
    %v4324 = vrcp.pop %v4258
    %v4325 = vmul.f32 1.0, %v4324
    %v4326 = vrcp.pop %v4259
    %v4327 = vmul.f32 1.0, %v4326
    %v4328 = vrcp.pop %v4260
    %v4329 = vmul.f32 1.0, %v4328
    %v4330 = vrcp.pop %v4261
    %v4331 = vmul.f32 1.0, %v4330
    %v4332 = vrcp.pop %v4262
    %v4333 = vmul.f32 1.0, %v4332
    %v4334 = vrcp.pop %v4263
    %v4335 = vmul.f32 1.0, %v4334
    %v4336 = vrcp.pop %v4264
    %v4337 = vmul.f32 1.0, %v4336
    %v4338 = vrcp.pop %v4265
    %v4339 = vmul.f32 1.0, %v4338
    %v4340 = vrcp.pop %v4266
    %v4341 = vmul.f32 1.0, %v4340
    %v4342 = vrcp.pop %v4267
    %v4343 = vmul.f32 1.0, %v4342
    %4344 = vst [vmem:[%s13] sm:$0xff] %v4269
    %4345 = vst [vmem:[%s13 + $0x8] sm:$0xff] %v4271
    %4346 = vst [vmem:[%s13 + $0x10] sm:$0xff] %v4273
    %4347 = vst [vmem:[%s13 + $0x18] sm:$0xff] %v4275
    %4348 = vst [vmem:[%s13 + $0x20] sm:$0xff] %v4277
    %4349 = vst [vmem:[%s13 + $0x28] sm:$0xff] %v4279
    %4350 = vst [vmem:[%s13 + $0x30] sm:$0xff] %v4281
    %4351 = vst [vmem:[%s13 + $0x38] sm:$0xff] %v4283
    %4352 = vst [vmem:[%s13 + $0x40] sm:$0xff] %v4285
    %4353 = vst [vmem:[%s13 + $0x48] sm:$0xff] %v4287
    %4354 = vst [vmem:[%s13 + $0x50] sm:$0xff] %v4289
    %4355 = vst [vmem:[%s13 + $0x58] sm:$0xff] %v4291
    %4356 = vst [vmem:[%s13 + $0x60] sm:$0xff] %v4293
    %4357 = vst [vmem:[%s13 + $0x68] sm:$0xff] %v4295
    %4358 = vst [vmem:[%s13 + $0x70] sm:$0xff] %v4297
    %4359 = vst [vmem:[%s13 + $0x78] sm:$0xff] %v4299
    %4360 = vst [vmem:[%s13 + $0x80] sm:$0xff] %v4301
    %4361 = vst [vmem:[%s13 + $0x88] sm:$0xff] %v4303
    %4362 = vst [vmem:[%s13 + $0x90] sm:$0xff] %v4305
    %4363 = vst [vmem:[%s13 + $0x98] sm:$0xff] %v4307
    %4364 = vst [vmem:[%s13 + $0xa0] sm:$0xff] %v4309
    %4365 = vst [vmem:[%s13 + $0xa8] sm:$0xff] %v4311
    %4366 = vst [vmem:[%s13 + $0xb0] sm:$0xff] %v4313
    %4367 = vst [vmem:[%s13 + $0xb8] sm:$0xff] %v4315
    %4368 = vst [vmem:[%s13 + $0xc0] sm:$0xff] %v4317
    %4369 = vst [vmem:[%s13 + $0xc8] sm:$0xff] %v4319
    %4370 = vst [vmem:[%s13 + $0xd0] sm:$0xff] %v4321
    %4371 = vst [vmem:[%s13 + $0xd8] sm:$0xff] %v4323
    %4372 = vst [vmem:[%s13 + $0xe0] sm:$0xff] %v4325
    %4373 = vst [vmem:[%s13 + $0xe8] sm:$0xff] %v4327
    %4374 = vst [vmem:[%s13 + $0xf0] sm:$0xff] %v4329
    %4375 = vst [vmem:[%s13 + $0xf8] sm:$0xff] %v4331
    %4376 = vst [vmem:[%s13 + $0x100] sm:$0xff] %v4333
    %4377 = vst [vmem:[%s13 + $0x108] sm:$0xff] %v4335
    %4378 = vst [vmem:[%s13 + $0x110] sm:$0xff] %v4337
    %4379 = vst [vmem:[%s13 + $0x118] sm:$0xff] %v4339
    %4380 = vst [vmem:[%s13 + $0x120] sm:$0xff] %v4341
    %4381 = vst [vmem:[%s13 + $0x128] sm:$0xff] %v4343
    // Predicated region
    $region62: #{net_forward.1} parent=1 // pred_check
      _
    $region63: #{net_forward.1} parent=1 // pred_check_branch
      %4383 = sbr.rel (0) target = $region65
    $region64: #{net_forward.1} parent=1 // pred_region
      _
    $region65: #{net_forward.1} parent=1 // pred_fallthru
      _
    // Predicated region
    $region66: #{net_forward.1} parent=1 // pred_check
      _
    $region67: #{net_forward.1} parent=1 // pred_check_branch
      %4385 = sbr.rel (0) target = $region69
    $region68: #{net_forward.1} parent=1 // pred_region
      _
    $region69: #{net_forward.1} parent=1 // pred_fallthru
      _
    %4386 = vsyncpa [#allocation3], 1
    %4387 = vsyncpa [#allocation5], 1

</llo_original>
